<compile_context>
chip_gen: v5e
topology: v5e:2x2
jax: 0.10.0
libtpu: 0.0.40
codegen_flags: <defaults>
</compile_context>

<pallas_src>
import functools

import jax
import jax.numpy as jnp
import numpy as np
from jax.experimental import pallas as pl
from jax.experimental.pallas import tpu as pltpu


# --------------------------------------------------------------------------- kernels
def _matmul_stats_kernel(x_ref, w_ref, scale_ref, shift_ref,
                         y_ref, sum_ref, ssq_ref,
                         sum_acc, ssq_acc, *, relu_in, tile_n, n_valid):
    # previous stage's BatchNorm (+ optional ReLU) fused as per-row affine on input
    x = x_ref[...] * scale_ref[...] + shift_ref[...]
    if relu_in:
        x = jnp.maximum(x, 0.0)

    # conv-as-matmul on the MXU: (C_out, C_in) @ (C_in, TN) -> lane-dense output
    y = jnp.dot(w_ref[...], x, preferred_element_type=jnp.float32)
    y_ref[...] = y

    # BatchNorm batch statistics: per-row sum / sum-of-squares in VMEM scratch
    @pl.when(pl.program_id(0) == 0)
    def _():
        sum_acc[...] = jnp.zeros_like(sum_acc)
        ssq_acc[...] = jnp.zeros_like(ssq_acc)

    if n_valid % tile_n != 0:
        # exclude padded lanes from the batch statistics (static branch: only
        # emitted when the lane count is not tile-aligned)
        col = (pl.program_id(0) * tile_n
               + jax.lax.broadcasted_iota(jnp.int32, y.shape, 1))
        ys = jnp.where(col < n_valid, y, 0.0)
    else:
        ys = y
    sum_acc[...] += jnp.sum(ys, axis=1, keepdims=True)
    ssq_acc[...] += jnp.sum(ys * ys, axis=1, keepdims=True)

    @pl.when(pl.program_id(0) == pl.num_programs(0) - 1)
    def _():
        sum_ref[...] = sum_acc[...]
        ssq_ref[...] = ssq_acc[...]


def _affine_kernel(y_ref, scale_ref, shift_ref, o_ref):
    # final BatchNorm application (per-row scale/shift, lane-dense stream)
    o_ref[...] = y_ref[...] * scale_ref[...] + shift_ref[...]


# --------------------------------------------------------------------------- pallas wrappers
def _pick_tile_n(n, c_in, c_out, budget_bytes=12 << 20):
    """Largest lane tile (multiple of 128, <=4096) whose double-buffered
    input+output blocks fit the VMEM budget (safe on v5e/v6e/v7x defaults)."""
    cap = budget_bytes // (8 * (c_in + c_out))     # 4B * 2 buffers * (C_in + C_out)
    cap = max(128, min(4096, (cap // 128) * 128))
    n128 = ((n + 127) // 128) * 128
    if n128 <= cap:
        return n128
    for t in (4096, 2048, 1024, 512, 256, 128):
        if t <= cap and n128 % t == 0:
            return t
    return cap


def _matmul_stats(x2, w_big, scale_rows, shift_rows, *, relu_in):
    c_in, n = x2.shape
    c_out = w_big.shape[0]
    tile_n = _pick_tile_n(n, c_in, c_out)
    n_tiles = -(-n // tile_n)
    n_pad = n_tiles * tile_n
    if n_pad != n:
        x2 = jnp.pad(x2, ((0, 0), (0, n_pad - n)))
    kernel = functools.partial(_matmul_stats_kernel, relu_in=relu_in,
                               tile_n=tile_n, n_valid=n)
    y, s, q = pl.pallas_call(
        kernel,
        grid=(n_tiles,),
        in_specs=[
            pl.BlockSpec((c_in, tile_n), lambda i: (0, i)),
            pl.BlockSpec((c_out, c_in), lambda i: (0, 0)),
            pl.BlockSpec((c_in, 1), lambda i: (0, 0)),
            pl.BlockSpec((c_in, 1), lambda i: (0, 0)),
        ],
        out_specs=(
            pl.BlockSpec((c_out, tile_n), lambda i: (0, i)),
            pl.BlockSpec((c_out, 1), lambda i: (0, 0)),
            pl.BlockSpec((c_out, 1), lambda i: (0, 0)),
        ),
        out_shape=(
            jax.ShapeDtypeStruct((c_out, n_pad), jnp.float32),
            jax.ShapeDtypeStruct((c_out, 1), jnp.float32),
            jax.ShapeDtypeStruct((c_out, 1), jnp.float32),
        ),
        scratch_shapes=[
            pltpu.VMEM((c_out, 1), jnp.float32),
            pltpu.VMEM((c_out, 1), jnp.float32),
        ],
        compiler_params=pltpu.CompilerParams(dimension_semantics=("arbitrary",)),
        cost_estimate=pl.CostEstimate(
            flops=2 * c_out * c_in * n_pad,
            transcendentals=0,
            bytes_accessed=4 * (c_in * n_pad + c_out * n_pad + c_out * c_in)),
    )(x2, w_big, scale_rows, shift_rows)
    if n_pad != n:
        y = y[:, :n]
    return y, s, q


def _affine_apply(y, scale_rows, shift_rows):
    c_rows, n = y.shape
    tile_n = _pick_tile_n(n, c_rows, c_rows)
    n_tiles = -(-n // tile_n)
    n_pad = n_tiles * tile_n
    if n_pad != n:
        y = jnp.pad(y, ((0, 0), (0, n_pad - n)))
    out = pl.pallas_call(
        _affine_kernel,
        grid=(n_tiles,),
        in_specs=[
            pl.BlockSpec((c_rows, tile_n), lambda i: (0, i)),
            pl.BlockSpec((c_rows, 1), lambda i: (0, 0)),
            pl.BlockSpec((c_rows, 1), lambda i: (0, 0)),
        ],
        out_specs=pl.BlockSpec((c_rows, tile_n), lambda i: (0, i)),
        out_shape=jax.ShapeDtypeStruct((c_rows, n_pad), jnp.float32),
        compiler_params=pltpu.CompilerParams(dimension_semantics=("parallel",)),
        cost_estimate=pl.CostEstimate(
            flops=2 * c_rows * n_pad, transcendentals=0,
            bytes_accessed=8 * c_rows * n_pad),
    )(y, scale_rows, shift_rows)
    if n_pad != n:
        out = out[:, :n]
    return out


# --------------------------------------------------------------------------- helpers (plain JAX / numpy glue)
def _conv2d_toeplitz(wk, hh, ww, pad, dil):
    """Dense M (co*hh*ww, ci*hh*ww) s.t. M @ vec(img) == 2-D cross-correlation
    (stride 1, zero pad `pad`, dilation `dil`).  Rows ordered (co, out_i, out_j),
    columns ordered (ci, in_i, in_j).  Same-size output required."""
    co, ci, kh, kw = wk.shape
    assert (kh - 1) * dil == 2 * pad and (kw - 1) * dil == 2 * pad
    io = np.arange(hh).reshape(hh, 1, 1, 1, 1, 1)
    jo = np.arange(ww).reshape(1, ww, 1, 1, 1, 1)
    ii = np.arange(hh).reshape(1, 1, hh, 1, 1, 1)
    jj = np.arange(ww).reshape(1, 1, 1, ww, 1, 1)
    ka = np.arange(kh).reshape(1, 1, 1, 1, kh, 1)
    kb = np.arange(kw).reshape(1, 1, 1, 1, 1, kw)
    sel = ((ii == io + ka * dil - pad) & (jj == jo + kb * dil - pad)).astype(np.float32)
    m = jnp.einsum("pqijab,ocab->opqcij", jnp.asarray(sel), wk,
                   precision=jax.lax.Precision.HIGHEST)
    return m.reshape(co * hh * ww, ci * hh * ww)


def _bn_scale_shift(rowsum, rowssq, rows_per_ch, n_lanes, gamma, beta, eps):
    """Training-mode BatchNorm affine (scale, shift) from per-row sum/sumsq."""
    nch = gamma.shape[0]
    s = rowsum.reshape(nch, rows_per_ch).sum(axis=1)
    q = rowssq.reshape(nch, rows_per_ch).sum(axis=1)
    count = rows_per_ch * n_lanes
    mean = s / count
    var = q / count - mean * mean          # biased variance (PyTorch training fwd)
    inv_std = jax.lax.rsqrt(var + eps)
    scale = gamma * inv_std
    shift = beta - mean * scale
    return scale, shift


# --------------------------------------------------------------------------- forward
def sepconv4d_forward(x, w_conv2, g2, b2, w_conv1, g1, b1,
                      w_proj=None, gp=None, bp=None, *,
                      stride=1, dilation=1, eps=1e-5):
    """sepConv4d.forward (with_bn=True, full=True, bias=False) in Pallas."""
    if stride != 1:
        # TODO(synk): strided (u,v)/(h,w) downsampling path not implemented
        # (the module's own .view() arithmetic is only consistent for stride=1).
        raise NotImplementedError("stride != 1 not supported")
    f32 = jnp.float32
    b, c, u, v, h, w = x.shape
    x = x.astype(f32)

    # ---------- stage A: conv2 = 3x3 over (u,v); lanes = b*h*w, rows = (c,u,v)
    n_a, ca = b * h * w, c * u * v
    k2 = w_conv2.shape[-1]
    wa_big = _conv2d_toeplitz(w_conv2.astype(f32), u, v, pad=k2 // 2, dil=1)
    xa = jnp.transpose(x, (1, 2, 3, 0, 4, 5)).reshape(ca, n_a)
    ya, s_a, q_a = _matmul_stats(
        xa, wa_big, jnp.ones((ca, 1), f32), jnp.zeros((ca, 1), f32), relu_in=False)
    scale_a, shift_a = _bn_scale_shift(s_a, q_a, u * v, n_a,
                                       g2.astype(f32), b2.astype(f32), eps)

    # ---------- stage B: BN_A + ReLU fused into conv1 = 3x3 over (h,w); lanes = b*u*v
    n_b, cb = b * u * v, c * h * w
    wb_big = _conv2d_toeplitz(w_conv1.astype(f32), h, w, pad=dilation, dil=dilation)
    xb = ya.reshape(c, u, v, b, h, w).transpose(0, 4, 5, 3, 1, 2).reshape(cb, n_b)
    yb, s_b, q_b = _matmul_stats(
        xb, wb_big,
        jnp.repeat(scale_a, h * w)[:, None], jnp.repeat(shift_a, h * w)[:, None],
        relu_in=True)
    scale_b, shift_b = _bn_scale_shift(s_b, q_b, h * w, n_b,
                                       g1.astype(f32), b1.astype(f32), eps)

    if w_proj is None:
        # no projection: apply BN_B and restore (b, c, u, v, h, w)
        out2 = _affine_apply(yb, jnp.repeat(scale_b, h * w)[:, None],
                             jnp.repeat(shift_b, h * w)[:, None])
        return out2.reshape(c, h, w, b, u, v).transpose(3, 0, 4, 5, 1, 2)

    # ---------- stage C: BN_B fused into 1x1 proj; rows = channels, lanes = h*w*b*u*v
    # (c*h*w, b*u*v) -> (c, h*w*b*u*v) is a PURE reshape (rows are (c,h,w)-major);
    # the 1x1 conv + BatchNorm are lane-permutation invariant, so the explicit
    # lane-reorder transpose of the previous version is unnecessary.
    c_out = w_proj.shape[0]
    n_c = h * w * n_b                                  # == b*u*v*h*w
    xp = yb.reshape(c, n_c)
    wp2 = w_proj.reshape(c_out, c).astype(f32)
    sc_rows, sh_rows = scale_b[:, None], shift_b[:, None]
    c_pad = ((c + 7) // 8) * 8                         # pad tiny channel dim to a sublane group
    if c_pad != c:
        pad = c_pad - c
        xp = jnp.pad(xp, ((0, pad), (0, 0)))
        wp2 = jnp.pad(wp2, ((0, 0), (0, pad)))
        sc_rows = jnp.pad(sc_rows, ((0, pad), (0, 0)), constant_values=1.0)
        sh_rows = jnp.pad(sh_rows, ((0, pad), (0, 0)))
    yp, s_c, q_c = _matmul_stats(xp, wp2, sc_rows, sh_rows, relu_in=False)
    scale_c, shift_c = _bn_scale_shift(s_c, q_c, 1, n_c,
                                       gp.astype(f32), bp.astype(f32), eps)
    out2 = _affine_apply(yp, scale_c[:, None], shift_c[:, None])
    # lanes are ordered (h, w, b, u, v) -> final layout (b, c_out, u, v, h, w)
    return out2.reshape(c_out, h, w, b, u, v).transpose(3, 0, 4, 5, 1, 2)


# --------------------------------------------------------------------------- pure-JAX reference
def _bn2d_train_ref(y, gamma, beta, eps):
    mean = jnp.mean(y, axis=(0, 2, 3), keepdims=True)
    var = jnp.mean((y - mean) ** 2, axis=(0, 2, 3), keepdims=True)
    yn = (y - mean) * jax.lax.rsqrt(var + eps)
    return yn * gamma.reshape(1, -1, 1, 1) + beta.reshape(1, -1, 1, 1)


def sepconv4d_ref(x, w_conv2, g2, b2, w_conv1, g1, b1, w_proj, gp, bp, *,
                  dilation=1, eps=1e-5):
    hp = jax.lax.Precision.HIGHEST
    b, c, u, v, h, w = x.shape
    xa = x.reshape(b, c, u, v, h * w).transpose(0, 4, 1, 2, 3).reshape(b * h * w, c, u, v)
    k2 = w_conv2.shape[-1]
    ya = jax.lax.conv_general_dilated(
        xa, w_conv2, window_strides=(1, 1), padding=((k2 // 2, k2 // 2),) * 2,
        dimension_numbers=("NCHW", "OIHW", "NCHW"), precision=hp)
    ya = _bn2d_train_ref(ya, g2, b2, eps)
    ya = ya.reshape(b, h * w, c, u, v).transpose(0, 2, 3, 4, 1)
    ya = jnp.maximum(ya, 0.0)
    xb = ya.reshape(b, c, u * v, h, w).transpose(0, 2, 1, 3, 4).reshape(b * u * v, c, h, w)
    yb = jax.lax.conv_general_dilated(
        xb, w_conv1, window_strides=(1, 1), padding=((dilation, dilation),) * 2,
        rhs_dilation=(dilation, dilation),
        dimension_numbers=("NCHW", "OIHW", "NCHW"), precision=hp)
    yb = _bn2d_train_ref(yb, g1, b1, eps)
    yb = yb.reshape(b, u * v, c, h, w).transpose(0, 2, 1, 3, 4)
    if w_proj is None:
        return yb.reshape(b, c, u, v, h, w)
    yc = jax.lax.conv_general_dilated(
        yb.reshape(b, c, u * v * h, w), w_proj, window_strides=(1, 1),
        padding=((0, 0), (0, 0)), dimension_numbers=("NCHW", "OIHW", "NCHW"),
        precision=hp)
    yc = _bn2d_train_ref(yc, gp, bp, eps)
    return yc.reshape(b, -1, u, v, h, w)


if __name__ == "__main__":
    key = jax.random.PRNGKey(0)
    ks = jax.random.split(key, 10)

    # sepConv4d(in_planes=4, out_planes=8, stride=1, dilation=1, with_bn=True)
    b, in_planes, out_planes = 2, 4, 8
    u = v = h = w = 8
    dilation = 1

    x = jax.random.normal(ks[0], (b, in_planes, u, v, h, w), jnp.float32)
    # conv2: Conv2d(in, in, 3, pad=1, bias=False) + BN(in)
    w2 = 0.2 * jax.random.normal(ks[1], (in_planes, in_planes, 3, 3), jnp.float32)
    g2 = 1.0 + 0.1 * jax.random.normal(ks[2], (in_planes,), jnp.float32)
    be2 = 0.1 * jax.random.normal(ks[3], (in_planes,), jnp.float32)
    # conv1: Conv2d(in, in, 3, pad=dilation, dilation=dilation, bias=False) + BN(in)
    w1 = 0.2 * jax.random.normal(ks[4], (in_planes, in_planes, 3, 3), jnp.float32)
    g1 = 1.0 + 0.1 * jax.random.normal(ks[5], (in_planes,), jnp.float32)
    be1 = 0.1 * jax.random.normal(ks[6], (in_planes,), jnp.float32)
    # proj (in != out): Conv2d(in, out, 1, bias=False) + BN(out)
    wp = 0.2 * jax.random.normal(ks[7], (out_planes, in_planes, 1, 1), jnp.float32)
    gp = 1.0 + 0.1 * jax.random.normal(ks[8], (out_planes,), jnp.float32)
    bep = 0.1 * jax.random.normal(ks[9], (out_planes,), jnp.float32)

    fwd = jax.jit(sepconv4d_forward, static_argnames=("stride", "dilation", "eps"))
    out = fwd(x, w2, g2, be2, w1, g1, be1, wp, gp, bep, dilation=dilation)
    out = jax.block_until_ready(out)

    ref = sepconv4d_ref(x, w2, g2, be2, w1, g1, be1, wp, gp, bep, dilation=dilation)
    np.testing.assert_allclose(np.asarray(out), np.asarray(ref), rtol=2e-3, atol=2e-3)
    assert out.shape == (b, out_planes, u, v, h, w)

    print("KERNEL_OK")
</pallas_src>

<mosaic_0001>
module attributes {stable_mosaic.version = 11 : i64} {
  func.func @_matmul_stats_kernel(%arg0: i32, %arg1: memref<256x128xf32, #tpu.memory_space<vmem>>, %arg2: memref<256x256xf32, #tpu.memory_space<vmem>>, %arg3: memref<256x1xf32, #tpu.memory_space<vmem>>, %arg4: memref<256x1xf32, #tpu.memory_space<vmem>>, %arg5: memref<256x128xf32, #tpu.memory_space<vmem>>, %arg6: memref<256x1xf32, #tpu.memory_space<vmem>>, %arg7: memref<256x1xf32, #tpu.memory_space<vmem>>, %arg8: memref<256x1xf32, #tpu.memory_space<vmem>>, %arg9: memref<256x1xf32, #tpu.memory_space<vmem>>) attributes {dimension_semantics = [#tpu.dimension_semantics<arbitrary>], iteration_bounds = array<i64: 1>, scalar_prefetch = 0 : i64, scratch_operands = 2 : i64, tpu.core_type = #tpu.core_type<tc>, window_params = [{transform_indices = @transform_0, window_bounds = array<i64: 256, 128>}, {pipeline_mode = #tpu.pipeline_mode<synchronous>, transform_indices = @transform_1, window_bounds = array<i64: 256, 256>}, {pipeline_mode = #tpu.pipeline_mode<synchronous>, transform_indices = @transform_2, window_bounds = array<i64: 256, 1>}, {pipeline_mode = #tpu.pipeline_mode<synchronous>, transform_indices = @transform_3, window_bounds = array<i64: 256, 1>}, {transform_indices = @transform_4, window_bounds = array<i64: 256, 128>}, {pipeline_mode = #tpu.pipeline_mode<synchronous>, transform_indices = @transform_5, window_bounds = array<i64: 256, 1>}, {pipeline_mode = #tpu.pipeline_mode<synchronous>, transform_indices = @transform_6, window_bounds = array<i64: 256, 1>}]} {
    %c0 = arith.constant 0 : index
    %c0_0 = arith.constant 0 : index
    %0 = vector.load %arg1[%c0, %c0_0] : memref<256x128xf32, #tpu.memory_space<vmem>>, vector<256x128xf32>
    %c0_1 = arith.constant 0 : index
    %c0_2 = arith.constant 0 : index
    %1 = vector.load %arg3[%c0_1, %c0_2] : memref<256x1xf32, #tpu.memory_space<vmem>>, vector<256x1xf32>
    %2 = vector.broadcast %1 : vector<256x1xf32> to vector<256x128xf32>
    %3 = arith.mulf %0, %2 : vector<256x128xf32>
    %c0_3 = arith.constant 0 : index
    %c0_4 = arith.constant 0 : index
    %4 = vector.load %arg4[%c0_3, %c0_4] : memref<256x1xf32, #tpu.memory_space<vmem>>, vector<256x1xf32>
    %5 = vector.broadcast %4 : vector<256x1xf32> to vector<256x128xf32>
    %6 = arith.addf %3, %5 : vector<256x128xf32>
    %c0_5 = arith.constant 0 : index
    %c0_6 = arith.constant 0 : index
    %7 = vector.load %arg2[%c0_5, %c0_6] : memref<256x256xf32, #tpu.memory_space<vmem>>, vector<256x256xf32>
    %cst = arith.constant dense<0.000000e+00> : vector<256x128xf32>
    %8 = tpu.matmul %7, %6, %cst {dimension_numbers = #tpu.dot_dimension_numbers<[1], [0], [0], [1], [0, 0, 1, 1], [], []>} : vector<256x256xf32>, vector<256x128xf32>, vector<256x128xf32> -> vector<256x128xf32>
    %c0_7 = arith.constant 0 : index
    %c0_8 = arith.constant 0 : index
    %9 = vector.load %arg5[%c0_7, %c0_8] : memref<256x128xf32, #tpu.memory_space<vmem>>, vector<256x128xf32>
    tpu.vector_store %arg5[%c0_7, %c0_8], %8 {strides = array<i32>} : memref<256x128xf32, #tpu.memory_space<vmem>>, vector<256x128xf32>,
    %c0_i32 = arith.constant 0 : i32
    %10 = arith.cmpi eq, %arg0, %c0_i32 : i32
    %11 = arith.extui %10 : i1 to i32
    %c0_i32_9 = arith.constant 0 : i32
    %12 = arith.cmpi ne, %11, %c0_i32_9 : i32
    scf.if %12 {
      %cst_22 = arith.constant 0.000000e+00 : f32
      %27 = vector.broadcast %cst_22 : f32 to vector<256x1xf32>
      %c0_23 = arith.constant 0 : index
      %c0_24 = arith.constant 0 : index
      %28 = vector.load %arg8[%c0_23, %c0_24] : memref<256x1xf32, #tpu.memory_space<vmem>>, vector<256x1xf32>
      tpu.vector_store %arg8[%c0_23, %c0_24], %27 {strides = array<i32>} : memref<256x1xf32, #tpu.memory_space<vmem>>, vector<256x1xf32>,
      %cst_25 = arith.constant 0.000000e+00 : f32
      %29 = vector.broadcast %cst_25 : f32 to vector<256x1xf32>
      %c0_26 = arith.constant 0 : index
      %c0_27 = arith.constant 0 : index
      %30 = vector.load %arg9[%c0_26, %c0_27] : memref<256x1xf32, #tpu.memory_space<vmem>>, vector<256x1xf32>
      tpu.vector_store %arg9[%c0_26, %c0_27], %29 {strides = array<i32>} : memref<256x1xf32, #tpu.memory_space<vmem>>, vector<256x1xf32>,
    } else {
    }
    %c0_10 = arith.constant 0 : index
    %c0_11 = arith.constant 0 : index
    %13 = vector.load %arg8[%c0_10, %c0_11] : memref<256x1xf32, #tpu.memory_space<vmem>>, vector<256x1xf32>
    %cst_12 = arith.constant dense<0.000000e+00> : vector<256xf32>
    %14 = vector.multi_reduction <add>, %8, %cst_12 [1] : vector<256x128xf32> to vector<256xf32>
    %15 = vector.shape_cast %14 : vector<256xf32> to vector<256x1xf32>
    %16 = arith.addf %13, %15 : vector<256x1xf32>
    %c0_13 = arith.constant 0 : index
    %c0_14 = arith.constant 0 : index
    %17 = vector.load %arg8[%c0_13, %c0_14] : memref<256x1xf32, #tpu.memory_space<vmem>>, vector<256x1xf32>
    tpu.vector_store %arg8[%c0_13, %c0_14], %16 {strides = array<i32>} : memref<256x1xf32, #tpu.memory_space<vmem>>, vector<256x1xf32>,
    %c0_15 = arith.constant 0 : index
    %c0_16 = arith.constant 0 : index
    %18 = vector.load %arg9[%c0_15, %c0_16] : memref<256x1xf32, #tpu.memory_space<vmem>>, vector<256x1xf32>
    %19 = arith.mulf %8, %8 : vector<256x128xf32>
    %cst_17 = arith.constant dense<0.000000e+00> : vector<256xf32>
    %20 = vector.multi_reduction <add>, %19, %cst_17 [1] : vector<256x128xf32> to vector<256xf32>
    %21 = vector.shape_cast %20 : vector<256xf32> to vector<256x1xf32>
    %22 = arith.addf %18, %21 : vector<256x1xf32>
    %c0_18 = arith.constant 0 : index
    %c0_19 = arith.constant 0 : index
    %23 = vector.load %arg9[%c0_18, %c0_19] : memref<256x1xf32, #tpu.memory_space<vmem>>, vector<256x1xf32>
    tpu.vector_store %arg9[%c0_18, %c0_19], %22 {strides = array<i32>} : memref<256x1xf32, #tpu.memory_space<vmem>>, vector<256x1xf32>,
    %c0_i32_20 = arith.constant 0 : i32
    %24 = arith.cmpi eq, %arg0, %c0_i32_20 : i32
    %25 = arith.extui %24 : i1 to i32
    %c0_i32_21 = arith.constant 0 : i32
    %26 = arith.cmpi ne, %25, %c0_i32_21 : i32
    scf.if %26 {
      %c0_22 = arith.constant 0 : index
      %c0_23 = arith.constant 0 : index
      %27 = vector.load %arg8[%c0_22, %c0_23] : memref<256x1xf32, #tpu.memory_space<vmem>>, vector<256x1xf32>
      %c0_24 = arith.constant 0 : index
      %c0_25 = arith.constant 0 : index
      %28 = vector.load %arg6[%c0_24, %c0_25] : memref<256x1xf32, #tpu.memory_space<vmem>>, vector<256x1xf32>
      tpu.vector_store %arg6[%c0_24, %c0_25], %27 {strides = array<i32>} : memref<256x1xf32, #tpu.memory_space<vmem>>, vector<256x1xf32>,
      %c0_26 = arith.constant 0 : index
      %c0_27 = arith.constant 0 : index
      %29 = vector.load %arg9[%c0_26, %c0_27] : memref<256x1xf32, #tpu.memory_space<vmem>>, vector<256x1xf32>
      %c0_28 = arith.constant 0 : index
      %c0_29 = arith.constant 0 : index
      %30 = vector.load %arg7[%c0_28, %c0_29] : memref<256x1xf32, #tpu.memory_space<vmem>>, vector<256x1xf32>
      tpu.vector_store %arg7[%c0_28, %c0_29], %29 {strides = array<i32>} : memref<256x1xf32, #tpu.memory_space<vmem>>, vector<256x1xf32>,
    } else {
    }
    return
  }
  func.func @transform_0(%arg0: i32) -> (i32, i32) {
    %c0_i32 = arith.constant 0 : i32
    %c0_i32_0 = arith.constant 0 : i32
    return %c0_i32, %arg0 : i32, i32
  }
  func.func @transform_1(%arg0: i32) -> (i32, i32) {
    %c0_i32 = arith.constant 0 : i32
    %c0_i32_0 = arith.constant 0 : i32
    %c0_i32_1 = arith.constant 0 : i32
    return %c0_i32, %c0_i32_0 : i32, i32
  }
  func.func @transform_2(%arg0: i32) -> (i32, i32) {
    %c0_i32 = arith.constant 0 : i32
    %c0_i32_0 = arith.constant 0 : i32
    %c0_i32_1 = arith.constant 0 : i32
    return %c0_i32, %c0_i32_0 : i32, i32
  }
  func.func @transform_3(%arg0: i32) -> (i32, i32) {
    %c0_i32 = arith.constant 0 : i32
    %c0_i32_0 = arith.constant 0 : i32
    %c0_i32_1 = arith.constant 0 : i32
    return %c0_i32, %c0_i32_0 : i32, i32
  }
  func.func @transform_4(%arg0: i32) -> (i32, i32) {
    %c0_i32 = arith.constant 0 : i32
    %c0_i32_0 = arith.constant 0 : i32
    return %c0_i32, %arg0 : i32, i32
  }
  func.func @transform_5(%arg0: i32) -> (i32, i32) {
    %c0_i32 = arith.constant 0 : i32
    %c0_i32_0 = arith.constant 0 : i32
    %c0_i32_1 = arith.constant 0 : i32
    return %c0_i32, %c0_i32_0 : i32, i32
  }
  func.func @transform_6(%arg0: i32) -> (i32, i32) {
    %c0_i32 = arith.constant 0 : i32
    %c0_i32_0 = arith.constant 0 : i32
    %c0_i32_1 = arith.constant 0 : i32
    return %c0_i32, %c0_i32_0 : i32, i32
  }
}

module attributes {stable_mosaic.version = 11 : i64} {
  func.func @_matmul_stats_kernel(%arg0: i32, %arg1: memref<256x128xf32, #tpu.memory_space<vmem>>, %arg2: memref<256x256xf32, #tpu.memory_space<vmem>>, %arg3: memref<256x1xf32, #tpu.memory_space<vmem>>, %arg4: memref<256x1xf32, #tpu.memory_space<vmem>>, %arg5: memref<256x128xf32, #tpu.memory_space<vmem>>, %arg6: memref<256x1xf32, #tpu.memory_space<vmem>>, %arg7: memref<256x1xf32, #tpu.memory_space<vmem>>, %arg8: memref<256x1xf32, #tpu.memory_space<vmem>>, %arg9: memref<256x1xf32, #tpu.memory_space<vmem>>) attributes {dimension_semantics = [#tpu.dimension_semantics<arbitrary>], iteration_bounds = array<i64: 1>, scalar_prefetch = 0 : i64, scratch_operands = 2 : i64, tpu.core_type = #tpu.core_type<tc>, window_params = [{transform_indices = @transform_0, window_bounds = array<i64: 256, 128>}, {pipeline_mode = #tpu.pipeline_mode<synchronous>, transform_indices = @transform_1, window_bounds = array<i64: 256, 256>}, {pipeline_mode = #tpu.pipeline_mode<synchronous>, transform_indices = @transform_2, window_bounds = array<i64: 256, 1>}, {pipeline_mode = #tpu.pipeline_mode<synchronous>, transform_indices = @transform_3, window_bounds = array<i64: 256, 1>}, {transform_indices = @transform_4, window_bounds = array<i64: 256, 128>}, {pipeline_mode = #tpu.pipeline_mode<synchronous>, transform_indices = @transform_5, window_bounds = array<i64: 256, 1>}, {pipeline_mode = #tpu.pipeline_mode<synchronous>, transform_indices = @transform_6, window_bounds = array<i64: 256, 1>}]} {
    %c0 = arith.constant 0 : index
    %c0_0 = arith.constant 0 : index
    %0 = vector.load %arg1[%c0, %c0_0] : memref<256x128xf32, #tpu.memory_space<vmem>>, vector<256x128xf32>
    %c0_1 = arith.constant 0 : index
    %c0_2 = arith.constant 0 : index
    %1 = vector.load %arg3[%c0_1, %c0_2] : memref<256x1xf32, #tpu.memory_space<vmem>>, vector<256x1xf32>
    %2 = vector.broadcast %1 : vector<256x1xf32> to vector<256x128xf32>
    %3 = arith.mulf %0, %2 : vector<256x128xf32>
    %c0_3 = arith.constant 0 : index
    %c0_4 = arith.constant 0 : index
    %4 = vector.load %arg4[%c0_3, %c0_4] : memref<256x1xf32, #tpu.memory_space<vmem>>, vector<256x1xf32>
    %5 = vector.broadcast %4 : vector<256x1xf32> to vector<256x128xf32>
    %6 = arith.addf %3, %5 : vector<256x128xf32>
    %cst = arith.constant 0.000000e+00 : f32
    %7 = vector.broadcast %cst : f32 to vector<256x128xf32>
    %8 = arith.maximumf %6, %7 : vector<256x128xf32>
    %c0_5 = arith.constant 0 : index
    %c0_6 = arith.constant 0 : index
    %9 = vector.load %arg2[%c0_5, %c0_6] : memref<256x256xf32, #tpu.memory_space<vmem>>, vector<256x256xf32>
    %cst_7 = arith.constant dense<0.000000e+00> : vector<256x128xf32>
    %10 = tpu.matmul %9, %8, %cst_7 {dimension_numbers = #tpu.dot_dimension_numbers<[1], [0], [0], [1], [0, 0, 1, 1], [], []>} : vector<256x256xf32>, vector<256x128xf32>, vector<256x128xf32> -> vector<256x128xf32>
    %c0_8 = arith.constant 0 : index
    %c0_9 = arith.constant 0 : index
    %11 = vector.load %arg5[%c0_8, %c0_9] : memref<256x128xf32, #tpu.memory_space<vmem>>, vector<256x128xf32>
    tpu.vector_store %arg5[%c0_8, %c0_9], %10 {strides = array<i32>} : memref<256x128xf32, #tpu.memory_space<vmem>>, vector<256x128xf32>,
    %c0_i32 = arith.constant 0 : i32
    %12 = arith.cmpi eq, %arg0, %c0_i32 : i32
    %13 = arith.extui %12 : i1 to i32
    %c0_i32_10 = arith.constant 0 : i32
    %14 = arith.cmpi ne, %13, %c0_i32_10 : i32
    scf.if %14 {
      %cst_23 = arith.constant 0.000000e+00 : f32
      %29 = vector.broadcast %cst_23 : f32 to vector<256x1xf32>
      %c0_24 = arith.constant 0 : index
      %c0_25 = arith.constant 0 : index
      %30 = vector.load %arg8[%c0_24, %c0_25] : memref<256x1xf32, #tpu.memory_space<vmem>>, vector<256x1xf32>
      tpu.vector_store %arg8[%c0_24, %c0_25], %29 {strides = array<i32>} : memref<256x1xf32, #tpu.memory_space<vmem>>, vector<256x1xf32>,
      %cst_26 = arith.constant 0.000000e+00 : f32
      %31 = vector.broadcast %cst_26 : f32 to vector<256x1xf32>
      %c0_27 = arith.constant 0 : index
      %c0_28 = arith.constant 0 : index
      %32 = vector.load %arg9[%c0_27, %c0_28] : memref<256x1xf32, #tpu.memory_space<vmem>>, vector<256x1xf32>
      tpu.vector_store %arg9[%c0_27, %c0_28], %31 {strides = array<i32>} : memref<256x1xf32, #tpu.memory_space<vmem>>, vector<256x1xf32>,
    } else {
    }
    %c0_11 = arith.constant 0 : index
    %c0_12 = arith.constant 0 : index
    %15 = vector.load %arg8[%c0_11, %c0_12] : memref<256x1xf32, #tpu.memory_space<vmem>>, vector<256x1xf32>
    %cst_13 = arith.constant dense<0.000000e+00> : vector<256xf32>
    %16 = vector.multi_reduction <add>, %10, %cst_13 [1] : vector<256x128xf32> to vector<256xf32>
    %17 = vector.shape_cast %16 : vector<256xf32> to vector<256x1xf32>
    %18 = arith.addf %15, %17 : vector<256x1xf32>
    %c0_14 = arith.constant 0 : index
    %c0_15 = arith.constant 0 : index
    %19 = vector.load %arg8[%c0_14, %c0_15] : memref<256x1xf32, #tpu.memory_space<vmem>>, vector<256x1xf32>
    tpu.vector_store %arg8[%c0_14, %c0_15], %18 {strides = array<i32>} : memref<256x1xf32, #tpu.memory_space<vmem>>, vector<256x1xf32>,
    %c0_16 = arith.constant 0 : index
    %c0_17 = arith.constant 0 : index
    %20 = vector.load %arg9[%c0_16, %c0_17] : memref<256x1xf32, #tpu.memory_space<vmem>>, vector<256x1xf32>
    %21 = arith.mulf %10, %10 : vector<256x128xf32>
    %cst_18 = arith.constant dense<0.000000e+00> : vector<256xf32>
    %22 = vector.multi_reduction <add>, %21, %cst_18 [1] : vector<256x128xf32> to vector<256xf32>
    %23 = vector.shape_cast %22 : vector<256xf32> to vector<256x1xf32>
    %24 = arith.addf %20, %23 : vector<256x1xf32>
    %c0_19 = arith.constant 0 : index
    %c0_20 = arith.constant 0 : index
    %25 = vector.load %arg9[%c0_19, %c0_20] : memref<256x1xf32, #tpu.memory_space<vmem>>, vector<256x1xf32>
    tpu.vector_store %arg9[%c0_19, %c0_20], %24 {strides = array<i32>} : memref<256x1xf32, #tpu.memory_space<vmem>>, vector<256x1xf32>,
    %c0_i32_21 = arith.constant 0 : i32
    %26 = arith.cmpi eq, %arg0, %c0_i32_21 : i32
    %27 = arith.extui %26 : i1 to i32
    %c0_i32_22 = arith.constant 0 : i32
    %28 = arith.cmpi ne, %27, %c0_i32_22 : i32
    scf.if %28 {
      %c0_23 = arith.constant 0 : index
      %c0_24 = arith.constant 0 : index
      %29 = vector.load %arg8[%c0_23, %c0_24] : memref<256x1xf32, #tpu.memory_space<vmem>>, vector<256x1xf32>
      %c0_25 = arith.constant 0 : index
      %c0_26 = arith.constant 0 : index
      %30 = vector.load %arg6[%c0_25, %c0_26] : memref<256x1xf32, #tpu.memory_space<vmem>>, vector<256x1xf32>
      tpu.vector_store %arg6[%c0_25, %c0_26], %29 {strides = array<i32>} : memref<256x1xf32, #tpu.memory_space<vmem>>, vector<256x1xf32>,
      %c0_27 = arith.constant 0 : index
      %c0_28 = arith.constant 0 : index
      %31 = vector.load %arg9[%c0_27, %c0_28] : memref<256x1xf32, #tpu.memory_space<vmem>>, vector<256x1xf32>
      %c0_29 = arith.constant 0 : index
      %c0_30 = arith.constant 0 : index
      %32 = vector.load %arg7[%c0_29, %c0_30] : memref<256x1xf32, #tpu.memory_space<vmem>>, vector<256x1xf32>
      tpu.vector_store %arg7[%c0_29, %c0_30], %31 {strides = array<i32>} : memref<256x1xf32, #tpu.memory_space<vmem>>, vector<256x1xf32>,
    } else {
    }
    return
  }
  func.func @transform_0(%arg0: i32) -> (i32, i32) {
    %c0_i32 = arith.constant 0 : i32
    %c0_i32_0 = arith.constant 0 : i32
    return %c0_i32, %arg0 : i32, i32
  }
  func.func @transform_1(%arg0: i32) -> (i32, i32) {
    %c0_i32 = arith.constant 0 : i32
    %c0_i32_0 = arith.constant 0 : i32
    %c0_i32_1 = arith.constant 0 : i32
    return %c0_i32, %c0_i32_0 : i32, i32
  }
  func.func @transform_2(%arg0: i32) -> (i32, i32) {
    %c0_i32 = arith.constant 0 : i32
    %c0_i32_0 = arith.constant 0 : i32
    %c0_i32_1 = arith.constant 0 : i32
    return %c0_i32, %c0_i32_0 : i32, i32
  }
  func.func @transform_3(%arg0: i32) -> (i32, i32) {
    %c0_i32 = arith.constant 0 : i32
    %c0_i32_0 = arith.constant 0 : i32
    %c0_i32_1 = arith.constant 0 : i32
    return %c0_i32, %c0_i32_0 : i32, i32
  }
  func.func @transform_4(%arg0: i32) -> (i32, i32) {
    %c0_i32 = arith.constant 0 : i32
    %c0_i32_0 = arith.constant 0 : i32
    return %c0_i32, %arg0 : i32, i32
  }
  func.func @transform_5(%arg0: i32) -> (i32, i32) {
    %c0_i32 = arith.constant 0 : i32
    %c0_i32_0 = arith.constant 0 : i32
    %c0_i32_1 = arith.constant 0 : i32
    return %c0_i32, %c0_i32_0 : i32, i32
  }
  func.func @transform_6(%arg0: i32) -> (i32, i32) {
    %c0_i32 = arith.constant 0 : i32
    %c0_i32_0 = arith.constant 0 : i32
    %c0_i32_1 = arith.constant 0 : i32
    return %c0_i32, %c0_i32_0 : i32, i32
  }
}

module attributes {stable_mosaic.version = 11 : i64} {
  func.func @_matmul_stats_kernel(%arg0: i32, %arg1: memref<8x4096xf32, #tpu.memory_space<vmem>>, %arg2: memref<8x8xf32, #tpu.memory_space<vmem>>, %arg3: memref<8x1xf32, #tpu.memory_space<vmem>>, %arg4: memref<8x1xf32, #tpu.memory_space<vmem>>, %arg5: memref<8x4096xf32, #tpu.memory_space<vmem>>, %arg6: memref<8x1xf32, #tpu.memory_space<vmem>>, %arg7: memref<8x1xf32, #tpu.memory_space<vmem>>, %arg8: memref<8x1xf32, #tpu.memory_space<vmem>>, %arg9: memref<8x1xf32, #tpu.memory_space<vmem>>) attributes {dimension_semantics = [#tpu.dimension_semantics<arbitrary>], iteration_bounds = array<i64: 2>, scalar_prefetch = 0 : i64, scratch_operands = 2 : i64, tpu.core_type = #tpu.core_type<tc>, window_params = [{transform_indices = @transform_0, window_bounds = array<i64: 8, 4096>}, {pipeline_mode = #tpu.pipeline_mode<synchronous>, transform_indices = @transform_1, window_bounds = array<i64: 8, 8>}, {pipeline_mode = #tpu.pipeline_mode<synchronous>, transform_indices = @transform_2, window_bounds = array<i64: 8, 1>}, {pipeline_mode = #tpu.pipeline_mode<synchronous>, transform_indices = @transform_3, window_bounds = array<i64: 8, 1>}, {transform_indices = @transform_4, window_bounds = array<i64: 8, 4096>}, {pipeline_mode = #tpu.pipeline_mode<synchronous>, transform_indices = @transform_5, window_bounds = array<i64: 8, 1>}, {pipeline_mode = #tpu.pipeline_mode<synchronous>, transform_indices = @transform_6, window_bounds = array<i64: 8, 1>}]} {
    %c0 = arith.constant 0 : index
    %c0_0 = arith.constant 0 : index
    %0 = vector.load %arg1[%c0, %c0_0] : memref<8x4096xf32, #tpu.memory_space<vmem>>, vector<8x4096xf32>
    %c0_1 = arith.constant 0 : index
    %c0_2 = arith.constant 0 : index
    %1 = vector.load %arg3[%c0_1, %c0_2] : memref<8x1xf32, #tpu.memory_space<vmem>>, vector<8x1xf32>
    %2 = vector.broadcast %1 : vector<8x1xf32> to vector<8x4096xf32>
    %3 = arith.mulf %0, %2 : vector<8x4096xf32>
    %c0_3 = arith.constant 0 : index
    %c0_4 = arith.constant 0 : index
    %4 = vector.load %arg4[%c0_3, %c0_4] : memref<8x1xf32, #tpu.memory_space<vmem>>, vector<8x1xf32>
    %5 = vector.broadcast %4 : vector<8x1xf32> to vector<8x4096xf32>
    %6 = arith.addf %3, %5 : vector<8x4096xf32>
    %c0_5 = arith.constant 0 : index
    %c0_6 = arith.constant 0 : index
    %7 = vector.load %arg2[%c0_5, %c0_6] : memref<8x8xf32, #tpu.memory_space<vmem>>, vector<8x8xf32>
    %cst = arith.constant dense<0.000000e+00> : vector<8x4096xf32>
    %8 = tpu.matmul %7, %6, %cst {dimension_numbers = #tpu.dot_dimension_numbers<[1], [0], [0], [1], [0, 0, 1, 1], [], []>} : vector<8x8xf32>, vector<8x4096xf32>, vector<8x4096xf32> -> vector<8x4096xf32>
    %c0_7 = arith.constant 0 : index
    %c0_8 = arith.constant 0 : index
    %9 = vector.load %arg5[%c0_7, %c0_8] : memref<8x4096xf32, #tpu.memory_space<vmem>>, vector<8x4096xf32>
    tpu.vector_store %arg5[%c0_7, %c0_8], %8 {strides = array<i32>} : memref<8x4096xf32, #tpu.memory_space<vmem>>, vector<8x4096xf32>,
    %c0_i32 = arith.constant 0 : i32
    %10 = arith.cmpi eq, %arg0, %c0_i32 : i32
    %11 = arith.extui %10 : i1 to i32
    %c0_i32_9 = arith.constant 0 : i32
    %12 = arith.cmpi ne, %11, %c0_i32_9 : i32
    scf.if %12 {
      %cst_21 = arith.constant 0.000000e+00 : f32
      %27 = vector.broadcast %cst_21 : f32 to vector<8x1xf32>
      %c0_22 = arith.constant 0 : index
      %c0_23 = arith.constant 0 : index
      %28 = vector.load %arg8[%c0_22, %c0_23] : memref<8x1xf32, #tpu.memory_space<vmem>>, vector<8x1xf32>
      tpu.vector_store %arg8[%c0_22, %c0_23], %27 {strides = array<i32>} : memref<8x1xf32, #tpu.memory_space<vmem>>, vector<8x1xf32>,
      %cst_24 = arith.constant 0.000000e+00 : f32
      %29 = vector.broadcast %cst_24 : f32 to vector<8x1xf32>
      %c0_25 = arith.constant 0 : index
      %c0_26 = arith.constant 0 : index
      %30 = vector.load %arg9[%c0_25, %c0_26] : memref<8x1xf32, #tpu.memory_space<vmem>>, vector<8x1xf32>
      tpu.vector_store %arg9[%c0_25, %c0_26], %29 {strides = array<i32>} : memref<8x1xf32, #tpu.memory_space<vmem>>, vector<8x1xf32>,
    } else {
    }
    %c0_10 = arith.constant 0 : index
    %c0_11 = arith.constant 0 : index
    %13 = vector.load %arg8[%c0_10, %c0_11] : memref<8x1xf32, #tpu.memory_space<vmem>>, vector<8x1xf32>
    %cst_12 = arith.constant dense<0.000000e+00> : vector<8xf32>
    %14 = vector.multi_reduction <add>, %8, %cst_12 [1] : vector<8x4096xf32> to vector<8xf32>
    %15 = vector.shape_cast %14 : vector<8xf32> to vector<8x1xf32>
    %16 = arith.addf %13, %15 : vector<8x1xf32>
    %c0_13 = arith.constant 0 : index
    %c0_14 = arith.constant 0 : index
    %17 = vector.load %arg8[%c0_13, %c0_14] : memref<8x1xf32, #tpu.memory_space<vmem>>, vector<8x1xf32>
    tpu.vector_store %arg8[%c0_13, %c0_14], %16 {strides = array<i32>} : memref<8x1xf32, #tpu.memory_space<vmem>>, vector<8x1xf32>,
    %c0_15 = arith.constant 0 : index
    %c0_16 = arith.constant 0 : index
    %18 = vector.load %arg9[%c0_15, %c0_16] : memref<8x1xf32, #tpu.memory_space<vmem>>, vector<8x1xf32>
    %19 = arith.mulf %8, %8 : vector<8x4096xf32>
    %cst_17 = arith.constant dense<0.000000e+00> : vector<8xf32>
    %20 = vector.multi_reduction <add>, %19, %cst_17 [1] : vector<8x4096xf32> to vector<8xf32>
    %21 = vector.shape_cast %20 : vector<8xf32> to vector<8x1xf32>
    %22 = arith.addf %18, %21 : vector<8x1xf32>
    %c0_18 = arith.constant 0 : index
    %c0_19 = arith.constant 0 : index
    %23 = vector.load %arg9[%c0_18, %c0_19] : memref<8x1xf32, #tpu.memory_space<vmem>>, vector<8x1xf32>
    tpu.vector_store %arg9[%c0_18, %c0_19], %22 {strides = array<i32>} : memref<8x1xf32, #tpu.memory_space<vmem>>, vector<8x1xf32>,
    %c1_i32 = arith.constant 1 : i32
    %24 = arith.cmpi eq, %arg0, %c1_i32 : i32
    %25 = arith.extui %24 : i1 to i32
    %c0_i32_20 = arith.constant 0 : i32
    %26 = arith.cmpi ne, %25, %c0_i32_20 : i32
    scf.if %26 {
      %c0_21 = arith.constant 0 : index
      %c0_22 = arith.constant 0 : index
      %27 = vector.load %arg8[%c0_21, %c0_22] : memref<8x1xf32, #tpu.memory_space<vmem>>, vector<8x1xf32>
      %c0_23 = arith.constant 0 : index
      %c0_24 = arith.constant 0 : index
      %28 = vector.load %arg6[%c0_23, %c0_24] : memref<8x1xf32, #tpu.memory_space<vmem>>, vector<8x1xf32>
      tpu.vector_store %arg6[%c0_23, %c0_24], %27 {strides = array<i32>} : memref<8x1xf32, #tpu.memory_space<vmem>>, vector<8x1xf32>,
      %c0_25 = arith.constant 0 : index
      %c0_26 = arith.constant 0 : index
      %29 = vector.load %arg9[%c0_25, %c0_26] : memref<8x1xf32, #tpu.memory_space<vmem>>, vector<8x1xf32>
      %c0_27 = arith.constant 0 : index
      %c0_28 = arith.constant 0 : index
      %30 = vector.load %arg7[%c0_27, %c0_28] : memref<8x1xf32, #tpu.memory_space<vmem>>, vector<8x1xf32>
      tpu.vector_store %arg7[%c0_27, %c0_28], %29 {strides = array<i32>} : memref<8x1xf32, #tpu.memory_space<vmem>>, vector<8x1xf32>,
    } else {
    }
    return
  }
  func.func @transform_0(%arg0: i32) -> (i32, i32) {
    %c0_i32 = arith.constant 0 : i32
    %c0_i32_0 = arith.constant 0 : i32
    return %c0_i32, %arg0 : i32, i32
  }
  func.func @transform_1(%arg0: i32) -> (i32, i32) {
    %c0_i32 = arith.constant 0 : i32
    %c0_i32_0 = arith.constant 0 : i32
    %c0_i32_1 = arith.constant 0 : i32
    return %c0_i32, %c0_i32_0 : i32, i32
  }
  func.func @transform_2(%arg0: i32) -> (i32, i32) {
    %c0_i32 = arith.constant 0 : i32
    %c0_i32_0 = arith.constant 0 : i32
    %c0_i32_1 = arith.constant 0 : i32
    return %c0_i32, %c0_i32_0 : i32, i32
  }
  func.func @transform_3(%arg0: i32) -> (i32, i32) {
    %c0_i32 = arith.constant 0 : i32
    %c0_i32_0 = arith.constant 0 : i32
    %c0_i32_1 = arith.constant 0 : i32
    return %c0_i32, %c0_i32_0 : i32, i32
  }
  func.func @transform_4(%arg0: i32) -> (i32, i32) {
    %c0_i32 = arith.constant 0 : i32
    %c0_i32_0 = arith.constant 0 : i32
    return %c0_i32, %arg0 : i32, i32
  }
  func.func @transform_5(%arg0: i32) -> (i32, i32) {
    %c0_i32 = arith.constant 0 : i32
    %c0_i32_0 = arith.constant 0 : i32
    %c0_i32_1 = arith.constant 0 : i32
    return %c0_i32, %c0_i32_0 : i32, i32
  }
  func.func @transform_6(%arg0: i32) -> (i32, i32) {
    %c0_i32 = arith.constant 0 : i32
    %c0_i32_0 = arith.constant 0 : i32
    %c0_i32_1 = arith.constant 0 : i32
    return %c0_i32, %c0_i32_0 : i32, i32
  }
}

module attributes {stable_mosaic.version = 11 : i64} {
  func.func @_affine_kernel(%arg0: i32, %arg1: memref<8x4096xf32, #tpu.memory_space<vmem>>, %arg2: memref<8x1xf32, #tpu.memory_space<vmem>>, %arg3: memref<8x1xf32, #tpu.memory_space<vmem>>, %arg4: memref<8x4096xf32, #tpu.memory_space<vmem>>) attributes {dimension_semantics = [#tpu.dimension_semantics<parallel>], iteration_bounds = array<i64: 2>, scalar_prefetch = 0 : i64, scratch_operands = 0 : i64, tpu.core_type = #tpu.core_type<tc>, window_params = [{transform_indices = @transform_0, window_bounds = array<i64: 8, 4096>}, {pipeline_mode = #tpu.pipeline_mode<synchronous>, transform_indices = @transform_1, window_bounds = array<i64: 8, 1>}, {pipeline_mode = #tpu.pipeline_mode<synchronous>, transform_indices = @transform_2, window_bounds = array<i64: 8, 1>}, {transform_indices = @transform_3, window_bounds = array<i64: 8, 4096>}]} {
    %c0 = arith.constant 0 : index
    %c0_0 = arith.constant 0 : index
    %0 = vector.load %arg1[%c0, %c0_0] : memref<8x4096xf32, #tpu.memory_space<vmem>>, vector<8x4096xf32>
    %c0_1 = arith.constant 0 : index
    %c0_2 = arith.constant 0 : index
    %1 = vector.load %arg2[%c0_1, %c0_2] : memref<8x1xf32, #tpu.memory_space<vmem>>, vector<8x1xf32>
    %2 = vector.broadcast %1 : vector<8x1xf32> to vector<8x4096xf32>
    %3 = arith.mulf %0, %2 : vector<8x4096xf32>
    %c0_3 = arith.constant 0 : index
    %c0_4 = arith.constant 0 : index
    %4 = vector.load %arg3[%c0_3, %c0_4] : memref<8x1xf32, #tpu.memory_space<vmem>>, vector<8x1xf32>
    %5 = vector.broadcast %4 : vector<8x1xf32> to vector<8x4096xf32>
    %6 = arith.addf %3, %5 : vector<8x4096xf32>
    %c0_5 = arith.constant 0 : index
    %c0_6 = arith.constant 0 : index
    %7 = vector.load %arg4[%c0_5, %c0_6] : memref<8x4096xf32, #tpu.memory_space<vmem>>, vector<8x4096xf32>
    tpu.vector_store %arg4[%c0_5, %c0_6], %6 {strides = array<i32>} : memref<8x4096xf32, #tpu.memory_space<vmem>>, vector<8x4096xf32>,
    return
  }
  func.func @transform_0(%arg0: i32) -> (i32, i32) {
    %c0_i32 = arith.constant 0 : i32
    %c0_i32_0 = arith.constant 0 : i32
    return %c0_i32, %arg0 : i32, i32
  }
  func.func @transform_1(%arg0: i32) -> (i32, i32) {
    %c0_i32 = arith.constant 0 : i32
    %c0_i32_0 = arith.constant 0 : i32
    %c0_i32_1 = arith.constant 0 : i32
    return %c0_i32, %c0_i32_0 : i32, i32
  }
  func.func @transform_2(%arg0: i32) -> (i32, i32) {
    %c0_i32 = arith.constant 0 : i32
    %c0_i32_0 = arith.constant 0 : i32
    %c0_i32_1 = arith.constant 0 : i32
    return %c0_i32, %c0_i32_0 : i32, i32
  }
  func.func @transform_3(%arg0: i32) -> (i32, i32) {
    %c0_i32 = arith.constant 0 : i32
    %c0_i32_0 = arith.constant 0 : i32
    return %c0_i32, %arg0 : i32, i32
  }
}

</mosaic_0001>

<llo_original>
// kernel: sepconv4d_forward.4
$region0: #{sepconv4d_forward.4}
  #allocation0 [shape = 'u32[]', space=smem, size = 0x4, offset = 0x4, fixed_abs, tag = 'smem constant byte address 0x4 - core index']
  #allocation1 [shape = 'u32[72,128]{1,0:T(1,128)}', space=vmem, size = 0x9000, scoped, tag = 'internal scratch']
  #allocation2 [shape = 'f32[256,1]{1,0:T(8,128)}', space=vmem, size = 0x20000, scoped, tag = 'scratch operand']
  #allocation3 [shape = 'f32[256,1]{1,0:T(8,128)}', space=vmem, size = 0x20000, scoped, tag = 'scratch operand']
  %s0 = inlined_call_operand.vmem [shape: f32[256,128], index: 0, kind: input, shape index: {}]
  %s1 = inlined_call_operand.vmem [shape: f32[256,256], index: 1, kind: input, shape index: {}]
  %s2 = inlined_call_operand.vmem [shape: f32[256,1], index: 2, kind: input, shape index: {}]
  %s3 = inlined_call_operand.vmem [shape: f32[256,1], index: 3, kind: input, shape index: {}]
  %s4 = inlined_call_operand.vmem [shape: f32[256,128], index: 4, kind: output, shape index: {0}]
  %s5 = inlined_call_operand.vmem [shape: f32[256,1], index: 5, kind: output, shape index: {1}]
  %s6 = inlined_call_operand.vmem [shape: f32[256,1], index: 6, kind: output, shape index: {2}]
  %7 = xla_tuple %s4, %s5, %s6
  %s8 = sld [smem:[#allocation0]]
  $region50: #{sepconv4d_forward.4} parent=0
    _
  %s10 = ssub.s32 1, %s8
  %s11 = scalar_select 0, %s10, %s8
  // Predicated region
  $region2: #{sepconv4d_forward.4} parent=0 // pred_check
    _
  $region3: #{sepconv4d_forward.4} parent=0 // pred_check_branch
    %13 = sbr.rel (0) target = $region5
  $region4: #{sepconv4d_forward.4} parent=0 // pred_region
    _
  $region5: #{sepconv4d_forward.4} parent=0 // pred_fallthru
    _
  // Predicated region
  $region6: #{sepconv4d_forward.4} parent=0 // pred_check
    _
  $region7: #{sepconv4d_forward.4} parent=0 // pred_check_branch
    %15 = sbr.rel (0) target = $region9
  $region8: #{sepconv4d_forward.4} parent=0 // pred_region
    _
  $region9: #{sepconv4d_forward.4} parent=0 // pred_fallthru
    _
  // Predicated region
  $region10: #{sepconv4d_forward.4} parent=0 // pred_check
    _
  $region11: #{sepconv4d_forward.4} parent=0 // pred_check_branch
    %17 = sbr.rel (0) target = $region13
  $region12: #{sepconv4d_forward.4} parent=0 // pred_region
    _
  $region13: #{sepconv4d_forward.4} parent=0 // pred_fallthru
    _
  // Predicated region
  $region14: #{sepconv4d_forward.4} parent=0 // pred_check
    _
  $region15: #{sepconv4d_forward.4} parent=0 // pred_check_branch
    %19 = sbr.rel (0) target = $region17
  $region16: #{sepconv4d_forward.4} parent=0 // pred_region
    _
  $region17: #{sepconv4d_forward.4} parent=0 // pred_fallthru
    _
  %v20 = vld [vmem:[%s0] sm:$0xff]
  %v21 = vld [vmem:[%s0 + $0x8] sm:$0xff]
  %v22 = vld [vmem:[%s0 + $0x10] sm:$0xff]
  %v23 = vld [vmem:[%s0 + $0x18] sm:$0xff]
  %v24 = vld [vmem:[%s0 + $0x20] sm:$0xff]
  %v25 = vld [vmem:[%s0 + $0x28] sm:$0xff]
  %v26 = vld [vmem:[%s0 + $0x30] sm:$0xff]
  %v27 = vld [vmem:[%s0 + $0x38] sm:$0xff]
  %v28 = vld [vmem:[%s0 + $0x40] sm:$0xff]
  %v29 = vld [vmem:[%s0 + $0x48] sm:$0xff]
  %v30 = vld [vmem:[%s0 + $0x50] sm:$0xff]
  %v31 = vld [vmem:[%s0 + $0x58] sm:$0xff]
  %v32 = vld [vmem:[%s0 + $0x60] sm:$0xff]
  %v33 = vld [vmem:[%s0 + $0x68] sm:$0xff]
  %v34 = vld [vmem:[%s0 + $0x70] sm:$0xff]
  %v35 = vld [vmem:[%s0 + $0x78] sm:$0xff]
  %v36 = vld [vmem:[%s0 + $0x80] sm:$0xff]
  %v37 = vld [vmem:[%s0 + $0x88] sm:$0xff]
  %v38 = vld [vmem:[%s0 + $0x90] sm:$0xff]
  %v39 = vld [vmem:[%s0 + $0x98] sm:$0xff]
  %v40 = vld [vmem:[%s0 + $0xa0] sm:$0xff]
  %v41 = vld [vmem:[%s0 + $0xa8] sm:$0xff]
  %v42 = vld [vmem:[%s0 + $0xb0] sm:$0xff]
  %v43 = vld [vmem:[%s0 + $0xb8] sm:$0xff]
  %v44 = vld [vmem:[%s0 + $0xc0] sm:$0xff]
  %v45 = vld [vmem:[%s0 + $0xc8] sm:$0xff]
  %v46 = vld [vmem:[%s0 + $0xd0] sm:$0xff]
  %v47 = vld [vmem:[%s0 + $0xd8] sm:$0xff]
  %v48 = vld [vmem:[%s0 + $0xe0] sm:$0xff]
  %v49 = vld [vmem:[%s0 + $0xe8] sm:$0xff]
  %v50 = vld [vmem:[%s0 + $0xf0] sm:$0xff]
  %v51 = vld [vmem:[%s0 + $0xf8] sm:$0xff]
  %v52 = vld [vmem:[%s2] sm:$0xff]
  %v53 = vld [vmem:[%s2 + $0x8] sm:$0xff]
  %v54 = vld [vmem:[%s2 + $0x10] sm:$0xff]
  %v55 = vld [vmem:[%s2 + $0x18] sm:$0xff]
  %v56 = vld [vmem:[%s2 + $0x20] sm:$0xff]
  %v57 = vld [vmem:[%s2 + $0x28] sm:$0xff]
  %v58 = vld [vmem:[%s2 + $0x30] sm:$0xff]
  %v59 = vld [vmem:[%s2 + $0x38] sm:$0xff]
  %v60 = vld [vmem:[%s2 + $0x40] sm:$0xff]
  %v61 = vld [vmem:[%s2 + $0x48] sm:$0xff]
  %v62 = vld [vmem:[%s2 + $0x50] sm:$0xff]
  %v63 = vld [vmem:[%s2 + $0x58] sm:$0xff]
  %v64 = vld [vmem:[%s2 + $0x60] sm:$0xff]
  %v65 = vld [vmem:[%s2 + $0x68] sm:$0xff]
  %v66 = vld [vmem:[%s2 + $0x70] sm:$0xff]
  %v67 = vld [vmem:[%s2 + $0x78] sm:$0xff]
  %v68 = vld [vmem:[%s2 + $0x80] sm:$0xff]
  %v69 = vld [vmem:[%s2 + $0x88] sm:$0xff]
  %v70 = vld [vmem:[%s2 + $0x90] sm:$0xff]
  %v71 = vld [vmem:[%s2 + $0x98] sm:$0xff]
  %v72 = vld [vmem:[%s2 + $0xa0] sm:$0xff]
  %v73 = vld [vmem:[%s2 + $0xa8] sm:$0xff]
  %v74 = vld [vmem:[%s2 + $0xb0] sm:$0xff]
  %v75 = vld [vmem:[%s2 + $0xb8] sm:$0xff]
  %v76 = vld [vmem:[%s2 + $0xc0] sm:$0xff]
  %v77 = vld [vmem:[%s2 + $0xc8] sm:$0xff]
  %v78 = vld [vmem:[%s2 + $0xd0] sm:$0xff]
  %v79 = vld [vmem:[%s2 + $0xd8] sm:$0xff]
  %v80 = vld [vmem:[%s2 + $0xe0] sm:$0xff]
  %v81 = vld [vmem:[%s2 + $0xe8] sm:$0xff]
  %v82 = vld [vmem:[%s2 + $0xf0] sm:$0xff]
  %v83 = vld [vmem:[%s2 + $0xf8] sm:$0xff]
  %85 = vset.pattern.permute.xlu0 0
  %86 = vperm.xlu0 %85, %v52
  %v87 = vpop.permute.xlu0 %86
  %90 = vset.pattern.permute.xlu0 0
  %91 = vperm.xlu0 %90, %v53
  %v92 = vpop.permute.xlu0 %91
  %95 = vset.pattern.permute.xlu0 0
  %96 = vperm.xlu0 %95, %v54
  %v97 = vpop.permute.xlu0 %96
  %100 = vset.pattern.permute.xlu0 0
  %101 = vperm.xlu0 %100, %v55
  %v102 = vpop.permute.xlu0 %101
  %105 = vset.pattern.permute.xlu0 0
  %106 = vperm.xlu0 %105, %v56
  %v107 = vpop.permute.xlu0 %106
  %110 = vset.pattern.permute.xlu0 0
  %111 = vperm.xlu0 %110, %v57
  %v112 = vpop.permute.xlu0 %111
  %115 = vset.pattern.permute.xlu0 0
  %116 = vperm.xlu0 %115, %v58
  %v117 = vpop.permute.xlu0 %116
  %120 = vset.pattern.permute.xlu0 0
  %121 = vperm.xlu0 %120, %v59
  %v122 = vpop.permute.xlu0 %121
  %125 = vset.pattern.permute.xlu0 0
  %126 = vperm.xlu0 %125, %v60
  %v127 = vpop.permute.xlu0 %126
  %130 = vset.pattern.permute.xlu0 0
  %131 = vperm.xlu0 %130, %v61
  %v132 = vpop.permute.xlu0 %131
  %135 = vset.pattern.permute.xlu0 0
  %136 = vperm.xlu0 %135, %v62
  %v137 = vpop.permute.xlu0 %136
  %140 = vset.pattern.permute.xlu0 0
  %141 = vperm.xlu0 %140, %v63
  %v142 = vpop.permute.xlu0 %141
  %145 = vset.pattern.permute.xlu0 0
  %146 = vperm.xlu0 %145, %v64
  %v147 = vpop.permute.xlu0 %146
  %150 = vset.pattern.permute.xlu0 0
  %151 = vperm.xlu0 %150, %v65
  %v152 = vpop.permute.xlu0 %151
  %155 = vset.pattern.permute.xlu0 0
  %156 = vperm.xlu0 %155, %v66
  %v157 = vpop.permute.xlu0 %156
  %160 = vset.pattern.permute.xlu0 0
  %161 = vperm.xlu0 %160, %v67
  %v162 = vpop.permute.xlu0 %161
  %165 = vset.pattern.permute.xlu0 0
  %166 = vperm.xlu0 %165, %v68
  %v167 = vpop.permute.xlu0 %166
  %170 = vset.pattern.permute.xlu0 0
  %171 = vperm.xlu0 %170, %v69
  %v172 = vpop.permute.xlu0 %171
  %175 = vset.pattern.permute.xlu0 0
  %176 = vperm.xlu0 %175, %v70
  %v177 = vpop.permute.xlu0 %176
  %180 = vset.pattern.permute.xlu0 0
  %181 = vperm.xlu0 %180, %v71
  %v182 = vpop.permute.xlu0 %181
  %185 = vset.pattern.permute.xlu0 0
  %186 = vperm.xlu0 %185, %v72
  %v187 = vpop.permute.xlu0 %186
  %190 = vset.pattern.permute.xlu0 0
  %191 = vperm.xlu0 %190, %v73
  %v192 = vpop.permute.xlu0 %191
  %195 = vset.pattern.permute.xlu0 0
  %196 = vperm.xlu0 %195, %v74
  %v197 = vpop.permute.xlu0 %196
  %200 = vset.pattern.permute.xlu0 0
  %201 = vperm.xlu0 %200, %v75
  %v202 = vpop.permute.xlu0 %201
  %205 = vset.pattern.permute.xlu0 0
  %206 = vperm.xlu0 %205, %v76
  %v207 = vpop.permute.xlu0 %206
  %210 = vset.pattern.permute.xlu0 0
  %211 = vperm.xlu0 %210, %v77
  %v212 = vpop.permute.xlu0 %211
  %215 = vset.pattern.permute.xlu0 0
  %216 = vperm.xlu0 %215, %v78
  %v217 = vpop.permute.xlu0 %216
  %220 = vset.pattern.permute.xlu0 0
  %221 = vperm.xlu0 %220, %v79
  %v222 = vpop.permute.xlu0 %221
  %225 = vset.pattern.permute.xlu0 0
  %226 = vperm.xlu0 %225, %v80
  %v227 = vpop.permute.xlu0 %226
  %230 = vset.pattern.permute.xlu0 0
  %231 = vperm.xlu0 %230, %v81
  %v232 = vpop.permute.xlu0 %231
  %235 = vset.pattern.permute.xlu0 0
  %236 = vperm.xlu0 %235, %v82
  %v237 = vpop.permute.xlu0 %236
  %240 = vset.pattern.permute.xlu0 0
  %241 = vperm.xlu0 %240, %v83
  %v242 = vpop.permute.xlu0 %241
  %v244 = vmul.f32 %v20, %v87
  %v245 = vmul.f32 %v21, %v92
  %v246 = vmul.f32 %v22, %v97
  %v247 = vmul.f32 %v23, %v102
  %v248 = vmul.f32 %v24, %v107
  %v249 = vmul.f32 %v25, %v112
  %v250 = vmul.f32 %v26, %v117
  %v251 = vmul.f32 %v27, %v122
  %v252 = vmul.f32 %v28, %v127
  %v253 = vmul.f32 %v29, %v132
  %v254 = vmul.f32 %v30, %v137
  %v255 = vmul.f32 %v31, %v142
  %v256 = vmul.f32 %v32, %v147
  %v257 = vmul.f32 %v33, %v152
  %v258 = vmul.f32 %v34, %v157
  %v259 = vmul.f32 %v35, %v162
  %v260 = vmul.f32 %v36, %v167
  %v261 = vmul.f32 %v37, %v172
  %v262 = vmul.f32 %v38, %v177
  %v263 = vmul.f32 %v39, %v182
  %v264 = vmul.f32 %v40, %v187
  %v265 = vmul.f32 %v41, %v192
  %v266 = vmul.f32 %v42, %v197
  %v267 = vmul.f32 %v43, %v202
  %v268 = vmul.f32 %v44, %v207
  %v269 = vmul.f32 %v45, %v212
  %v270 = vmul.f32 %v46, %v217
  %v271 = vmul.f32 %v47, %v222
  %v272 = vmul.f32 %v48, %v227
  %v273 = vmul.f32 %v49, %v232
  %v274 = vmul.f32 %v50, %v237
  %v275 = vmul.f32 %v51, %v242
  %v276 = vld [vmem:[%s3] sm:$0xff]
  %v277 = vld [vmem:[%s3 + $0x8] sm:$0xff]
  %v278 = vld [vmem:[%s3 + $0x10] sm:$0xff]
  %v279 = vld [vmem:[%s3 + $0x18] sm:$0xff]
  %v280 = vld [vmem:[%s3 + $0x20] sm:$0xff]
  %v281 = vld [vmem:[%s3 + $0x28] sm:$0xff]
  %v282 = vld [vmem:[%s3 + $0x30] sm:$0xff]
  %v283 = vld [vmem:[%s3 + $0x38] sm:$0xff]
  %v284 = vld [vmem:[%s3 + $0x40] sm:$0xff]
  %v285 = vld [vmem:[%s3 + $0x48] sm:$0xff]
  %v286 = vld [vmem:[%s3 + $0x50] sm:$0xff]
  %v287 = vld [vmem:[%s3 + $0x58] sm:$0xff]
  %v288 = vld [vmem:[%s3 + $0x60] sm:$0xff]
  %v289 = vld [vmem:[%s3 + $0x68] sm:$0xff]
  %v290 = vld [vmem:[%s3 + $0x70] sm:$0xff]
  %v291 = vld [vmem:[%s3 + $0x78] sm:$0xff]
  %v292 = vld [vmem:[%s3 + $0x80] sm:$0xff]
  %v293 = vld [vmem:[%s3 + $0x88] sm:$0xff]
  %v294 = vld [vmem:[%s3 + $0x90] sm:$0xff]
  %v295 = vld [vmem:[%s3 + $0x98] sm:$0xff]
  %v296 = vld [vmem:[%s3 + $0xa0] sm:$0xff]
  %v297 = vld [vmem:[%s3 + $0xa8] sm:$0xff]
  %v298 = vld [vmem:[%s3 + $0xb0] sm:$0xff]
  %v299 = vld [vmem:[%s3 + $0xb8] sm:$0xff]
  %v300 = vld [vmem:[%s3 + $0xc0] sm:$0xff]
  %v301 = vld [vmem:[%s3 + $0xc8] sm:$0xff]
  %v302 = vld [vmem:[%s3 + $0xd0] sm:$0xff]
  %v303 = vld [vmem:[%s3 + $0xd8] sm:$0xff]
  %v304 = vld [vmem:[%s3 + $0xe0] sm:$0xff]
  %v305 = vld [vmem:[%s3 + $0xe8] sm:$0xff]
  %v306 = vld [vmem:[%s3 + $0xf0] sm:$0xff]
  %v307 = vld [vmem:[%s3 + $0xf8] sm:$0xff]
  %309 = vset.pattern.permute.xlu0 0
  %310 = vperm.xlu0 %309, %v276
  %v311 = vpop.permute.xlu0 %310
  %314 = vset.pattern.permute.xlu0 0
  %315 = vperm.xlu0 %314, %v277
  %v316 = vpop.permute.xlu0 %315
  %319 = vset.pattern.permute.xlu0 0
  %320 = vperm.xlu0 %319, %v278
  %v321 = vpop.permute.xlu0 %320
  %324 = vset.pattern.permute.xlu0 0
  %325 = vperm.xlu0 %324, %v279
  %v326 = vpop.permute.xlu0 %325
  %329 = vset.pattern.permute.xlu0 0
  %330 = vperm.xlu0 %329, %v280
  %v331 = vpop.permute.xlu0 %330
  %334 = vset.pattern.permute.xlu0 0
  %335 = vperm.xlu0 %334, %v281
  %v336 = vpop.permute.xlu0 %335
  %339 = vset.pattern.permute.xlu0 0
  %340 = vperm.xlu0 %339, %v282
  %v341 = vpop.permute.xlu0 %340
  %344 = vset.pattern.permute.xlu0 0
  %345 = vperm.xlu0 %344, %v283
  %v346 = vpop.permute.xlu0 %345
  %349 = vset.pattern.permute.xlu0 0
  %350 = vperm.xlu0 %349, %v284
  %v351 = vpop.permute.xlu0 %350
  %354 = vset.pattern.permute.xlu0 0
  %355 = vperm.xlu0 %354, %v285
  %v356 = vpop.permute.xlu0 %355
  %359 = vset.pattern.permute.xlu0 0
  %360 = vperm.xlu0 %359, %v286
  %v361 = vpop.permute.xlu0 %360
  %364 = vset.pattern.permute.xlu0 0
  %365 = vperm.xlu0 %364, %v287
  %v366 = vpop.permute.xlu0 %365
  %369 = vset.pattern.permute.xlu0 0
  %370 = vperm.xlu0 %369, %v288
  %v371 = vpop.permute.xlu0 %370
  %374 = vset.pattern.permute.xlu0 0
  %375 = vperm.xlu0 %374, %v289
  %v376 = vpop.permute.xlu0 %375
  %379 = vset.pattern.permute.xlu0 0
  %380 = vperm.xlu0 %379, %v290
  %v381 = vpop.permute.xlu0 %380
  %384 = vset.pattern.permute.xlu0 0
  %385 = vperm.xlu0 %384, %v291
  %v386 = vpop.permute.xlu0 %385
  %389 = vset.pattern.permute.xlu0 0
  %390 = vperm.xlu0 %389, %v292
  %v391 = vpop.permute.xlu0 %390
  %394 = vset.pattern.permute.xlu0 0
  %395 = vperm.xlu0 %394, %v293
  %v396 = vpop.permute.xlu0 %395
  %399 = vset.pattern.permute.xlu0 0
  %400 = vperm.xlu0 %399, %v294
  %v401 = vpop.permute.xlu0 %400
  %404 = vset.pattern.permute.xlu0 0
  %405 = vperm.xlu0 %404, %v295
  %v406 = vpop.permute.xlu0 %405
  %409 = vset.pattern.permute.xlu0 0
  %410 = vperm.xlu0 %409, %v296
  %v411 = vpop.permute.xlu0 %410
  %414 = vset.pattern.permute.xlu0 0
  %415 = vperm.xlu0 %414, %v297
  %v416 = vpop.permute.xlu0 %415
  %419 = vset.pattern.permute.xlu0 0
  %420 = vperm.xlu0 %419, %v298
  %v421 = vpop.permute.xlu0 %420
  %424 = vset.pattern.permute.xlu0 0
  %425 = vperm.xlu0 %424, %v299
  %v426 = vpop.permute.xlu0 %425
  %429 = vset.pattern.permute.xlu0 0
  %430 = vperm.xlu0 %429, %v300
  %v431 = vpop.permute.xlu0 %430
  %434 = vset.pattern.permute.xlu0 0
  %435 = vperm.xlu0 %434, %v301
  %v436 = vpop.permute.xlu0 %435
  %439 = vset.pattern.permute.xlu0 0
  %440 = vperm.xlu0 %439, %v302
  %v441 = vpop.permute.xlu0 %440
  %444 = vset.pattern.permute.xlu0 0
  %445 = vperm.xlu0 %444, %v303
  %v446 = vpop.permute.xlu0 %445
  %449 = vset.pattern.permute.xlu0 0
  %450 = vperm.xlu0 %449, %v304
  %v451 = vpop.permute.xlu0 %450
  %454 = vset.pattern.permute.xlu0 0
  %455 = vperm.xlu0 %454, %v305
  %v456 = vpop.permute.xlu0 %455
  %459 = vset.pattern.permute.xlu0 0
  %460 = vperm.xlu0 %459, %v306
  %v461 = vpop.permute.xlu0 %460
  %464 = vset.pattern.permute.xlu0 0
  %465 = vperm.xlu0 %464, %v307
  %v466 = vpop.permute.xlu0 %465
  %v468 = vadd.f32 %v244, %v311
  %v469 = vadd.f32 %v245, %v316
  %v470 = vadd.f32 %v246, %v321
  %v471 = vadd.f32 %v247, %v326
  %v472 = vadd.f32 %v248, %v331
  %v473 = vadd.f32 %v249, %v336
  %v474 = vadd.f32 %v250, %v341
  %v475 = vadd.f32 %v251, %v346
  %v476 = vadd.f32 %v252, %v351
  %v477 = vadd.f32 %v253, %v356
  %v478 = vadd.f32 %v254, %v361
  %v479 = vadd.f32 %v255, %v366
  %v480 = vadd.f32 %v256, %v371
  %v481 = vadd.f32 %v257, %v376
  %v482 = vadd.f32 %v258, %v381
  %v483 = vadd.f32 %v259, %v386
  %v484 = vadd.f32 %v260, %v391
  %v485 = vadd.f32 %v261, %v396
  %v486 = vadd.f32 %v262, %v401
  %v487 = vadd.f32 %v263, %v406
  %v488 = vadd.f32 %v264, %v411
  %v489 = vadd.f32 %v265, %v416
  %v490 = vadd.f32 %v266, %v421
  %v491 = vadd.f32 %v267, %v426
  %v492 = vadd.f32 %v268, %v431
  %v493 = vadd.f32 %v269, %v436
  %v494 = vadd.f32 %v270, %v441
  %v495 = vadd.f32 %v271, %v446
  %v496 = vadd.f32 %v272, %v451
  %v497 = vadd.f32 %v273, %v456
  %v498 = vadd.f32 %v274, %v461
  %v499 = vadd.f32 %v275, %v466
  %v500 = vld [vmem:[%s1] sm:$0xff]
  %v501 = vld [vmem:[%s1 + $0x8] sm:$0xff]
  %v502 = vld [vmem:[%s1 + $0x10] sm:$0xff]
  %v503 = vld [vmem:[%s1 + $0x18] sm:$0xff]
  %v504 = vld [vmem:[%s1 + $0x20] sm:$0xff]
  %v505 = vld [vmem:[%s1 + $0x28] sm:$0xff]
  %v506 = vld [vmem:[%s1 + $0x30] sm:$0xff]
  %v507 = vld [vmem:[%s1 + $0x38] sm:$0xff]
  %v508 = vld [vmem:[%s1 + $0x40] sm:$0xff]
  %v509 = vld [vmem:[%s1 + $0x48] sm:$0xff]
  %v510 = vld [vmem:[%s1 + $0x50] sm:$0xff]
  %v511 = vld [vmem:[%s1 + $0x58] sm:$0xff]
  %v512 = vld [vmem:[%s1 + $0x60] sm:$0xff]
  %v513 = vld [vmem:[%s1 + $0x68] sm:$0xff]
  %v514 = vld [vmem:[%s1 + $0x70] sm:$0xff]
  %v515 = vld [vmem:[%s1 + $0x78] sm:$0xff]
  %v516 = vld [vmem:[%s1 + $0x80] sm:$0xff]
  %v517 = vld [vmem:[%s1 + $0x88] sm:$0xff]
  %v518 = vld [vmem:[%s1 + $0x90] sm:$0xff]
  %v519 = vld [vmem:[%s1 + $0x98] sm:$0xff]
  %v520 = vld [vmem:[%s1 + $0xa0] sm:$0xff]
  %v521 = vld [vmem:[%s1 + $0xa8] sm:$0xff]
  %v522 = vld [vmem:[%s1 + $0xb0] sm:$0xff]
  %v523 = vld [vmem:[%s1 + $0xb8] sm:$0xff]
  %v524 = vld [vmem:[%s1 + $0xc0] sm:$0xff]
  %v525 = vld [vmem:[%s1 + $0xc8] sm:$0xff]
  %v526 = vld [vmem:[%s1 + $0xd0] sm:$0xff]
  %v527 = vld [vmem:[%s1 + $0xd8] sm:$0xff]
  %v528 = vld [vmem:[%s1 + $0xe0] sm:$0xff]
  %v529 = vld [vmem:[%s1 + $0xe8] sm:$0xff]
  %v530 = vld [vmem:[%s1 + $0xf0] sm:$0xff]
  %v531 = vld [vmem:[%s1 + $0xf8] sm:$0xff]
  %v532 = vld [vmem:[%s1 + $0x100] sm:$0xff]
  %v533 = vld [vmem:[%s1 + $0x108] sm:$0xff]
  %v534 = vld [vmem:[%s1 + $0x110] sm:$0xff]
  %v535 = vld [vmem:[%s1 + $0x118] sm:$0xff]
  %v536 = vld [vmem:[%s1 + $0x120] sm:$0xff]
  %v537 = vld [vmem:[%s1 + $0x128] sm:$0xff]
  %v538 = vld [vmem:[%s1 + $0x130] sm:$0xff]
  %v539 = vld [vmem:[%s1 + $0x138] sm:$0xff]
  %v540 = vld [vmem:[%s1 + $0x140] sm:$0xff]
  %v541 = vld [vmem:[%s1 + $0x148] sm:$0xff]
  %v542 = vld [vmem:[%s1 + $0x150] sm:$0xff]
  %v543 = vld [vmem:[%s1 + $0x158] sm:$0xff]
  %v544 = vld [vmem:[%s1 + $0x160] sm:$0xff]
  %v545 = vld [vmem:[%s1 + $0x168] sm:$0xff]
  %v546 = vld [vmem:[%s1 + $0x170] sm:$0xff]
  %v547 = vld [vmem:[%s1 + $0x178] sm:$0xff]
  %v548 = vld [vmem:[%s1 + $0x180] sm:$0xff]
  %v549 = vld [vmem:[%s1 + $0x188] sm:$0xff]
  %v550 = vld [vmem:[%s1 + $0x190] sm:$0xff]
  %v551 = vld [vmem:[%s1 + $0x198] sm:$0xff]
  %v552 = vld [vmem:[%s1 + $0x1a0] sm:$0xff]
  %v553 = vld [vmem:[%s1 + $0x1a8] sm:$0xff]
  %v554 = vld [vmem:[%s1 + $0x1b0] sm:$0xff]
  %v555 = vld [vmem:[%s1 + $0x1b8] sm:$0xff]
  %v556 = vld [vmem:[%s1 + $0x1c0] sm:$0xff]
  %v557 = vld [vmem:[%s1 + $0x1c8] sm:$0xff]
  %v558 = vld [vmem:[%s1 + $0x1d0] sm:$0xff]
  %v559 = vld [vmem:[%s1 + $0x1d8] sm:$0xff]
  %v560 = vld [vmem:[%s1 + $0x1e0] sm:$0xff]
  %v561 = vld [vmem:[%s1 + $0x1e8] sm:$0xff]
  %v562 = vld [vmem:[%s1 + $0x1f0] sm:$0xff]
  %v563 = vld [vmem:[%s1 + $0x1f8] sm:$0xff]
  %564 = vmatpush.msra.mxu0 %v483
  %565 = vmatpush.msra.mxu0 %v482
  %566 = vmatpush.msra.mxu0 %v481
  %567 = vmatpush.msra.mxu0 %v480
  %568 = vmatpush.msra.mxu0 %v479
  %569 = vmatpush.msra.mxu0 %v478
  %570 = vmatpush.msra.mxu0 %v477
  %571 = vmatpush.msra.mxu0 %v476
  %572 = vmatpush.msra.mxu0 %v475
  %573 = vmatpush.msra.mxu0 %v474
  %574 = vmatpush.msra.mxu0 %v473
  %575 = vmatpush.msra.mxu0 %v472
  %576 = vmatpush.msra.mxu0 %v471
  %577 = vmatpush.msra.mxu0 %v470
  %578 = vmatpush.msra.mxu0 %v469
  %579 = vmatpush.msra.mxu0 %v468
  %580 = vmatmul.f32.gmra.mxu0 %v500
  %v581 = vpop.f32.mrf.mxu0
  %v582 = vadd.f32 0.0, %v581
  %583 = vmatmul.f32.gmra.mxu0 %v502
  %v584 = vpop.f32.mrf.mxu0
  %v585 = vadd.f32 0.0, %v584
  %586 = vmatmul.f32.gmra.mxu0 %v504
  %v587 = vpop.f32.mrf.mxu0
  %v588 = vadd.f32 0.0, %v587
  %589 = vmatmul.f32.gmra.mxu0 %v506
  %v590 = vpop.f32.mrf.mxu0
  %v591 = vadd.f32 0.0, %v590
  %592 = vmatmul.f32.gmra.mxu0 %v508
  %v593 = vpop.f32.mrf.mxu0
  %v594 = vadd.f32 0.0, %v593
  %595 = vmatmul.f32.gmra.mxu0 %v510
  %v596 = vpop.f32.mrf.mxu0
  %v597 = vadd.f32 0.0, %v596
  %598 = vmatmul.f32.gmra.mxu0 %v512
  %v599 = vpop.f32.mrf.mxu0
  %v600 = vadd.f32 0.0, %v599
  %601 = vmatmul.f32.gmra.mxu0 %v514
  %v602 = vpop.f32.mrf.mxu0
  %v603 = vadd.f32 0.0, %v602
  %604 = vmatmul.f32.gmra.mxu0 %v516
  %v605 = vpop.f32.mrf.mxu0
  %v606 = vadd.f32 0.0, %v605
  %607 = vmatmul.f32.gmra.mxu0 %v518
  %v608 = vpop.f32.mrf.mxu0
  %v609 = vadd.f32 0.0, %v608
  %610 = vmatmul.f32.gmra.mxu0 %v520
  %v611 = vpop.f32.mrf.mxu0
  %v612 = vadd.f32 0.0, %v611
  %613 = vmatmul.f32.gmra.mxu0 %v522
  %v614 = vpop.f32.mrf.mxu0
  %v615 = vadd.f32 0.0, %v614
  %616 = vmatmul.f32.gmra.mxu0 %v524
  %v617 = vpop.f32.mrf.mxu0
  %v618 = vadd.f32 0.0, %v617
  %619 = vmatmul.f32.gmra.mxu0 %v526
  %v620 = vpop.f32.mrf.mxu0
  %v621 = vadd.f32 0.0, %v620
  %622 = vmatmul.f32.gmra.mxu0 %v528
  %v623 = vpop.f32.mrf.mxu0
  %v624 = vadd.f32 0.0, %v623
  %625 = vmatmul.f32.gmra.mxu0 %v530
  %v626 = vpop.f32.mrf.mxu0
  %v627 = vadd.f32 0.0, %v626
  %628 = vmatmul.f32.gmra.mxu0 %v532
  %v629 = vpop.f32.mrf.mxu0
  %v630 = vadd.f32 0.0, %v629
  %631 = vmatmul.f32.gmra.mxu0 %v534
  %v632 = vpop.f32.mrf.mxu0
  %v633 = vadd.f32 0.0, %v632
  %634 = vmatmul.f32.gmra.mxu0 %v536
  %v635 = vpop.f32.mrf.mxu0
  %v636 = vadd.f32 0.0, %v635
  %637 = vmatmul.f32.gmra.mxu0 %v538
  %v638 = vpop.f32.mrf.mxu0
  %v639 = vadd.f32 0.0, %v638
  %640 = vmatmul.f32.gmra.mxu0 %v540
  %v641 = vpop.f32.mrf.mxu0
  %v642 = vadd.f32 0.0, %v641
  %643 = vmatmul.f32.gmra.mxu0 %v542
  %v644 = vpop.f32.mrf.mxu0
  %v645 = vadd.f32 0.0, %v644
  %646 = vmatmul.f32.gmra.mxu0 %v544
  %v647 = vpop.f32.mrf.mxu0
  %v648 = vadd.f32 0.0, %v647
  %649 = vmatmul.f32.gmra.mxu0 %v546
  %v650 = vpop.f32.mrf.mxu0
  %v651 = vadd.f32 0.0, %v650
  %652 = vmatmul.f32.gmra.mxu0 %v548
  %v653 = vpop.f32.mrf.mxu0
  %v654 = vadd.f32 0.0, %v653
  %655 = vmatmul.f32.gmra.mxu0 %v550
  %v656 = vpop.f32.mrf.mxu0
  %v657 = vadd.f32 0.0, %v656
  %658 = vmatmul.f32.gmra.mxu0 %v552
  %v659 = vpop.f32.mrf.mxu0
  %v660 = vadd.f32 0.0, %v659
  %661 = vmatmul.f32.gmra.mxu0 %v554
  %v662 = vpop.f32.mrf.mxu0
  %v663 = vadd.f32 0.0, %v662
  %664 = vmatmul.f32.gmra.mxu0 %v556
  %v665 = vpop.f32.mrf.mxu0
  %v666 = vadd.f32 0.0, %v665
  %667 = vmatmul.f32.gmra.mxu0 %v558
  %v668 = vpop.f32.mrf.mxu0
  %v669 = vadd.f32 0.0, %v668
  %670 = vmatmul.f32.gmra.mxu0 %v560
  %v671 = vpop.f32.mrf.mxu0
  %v672 = vadd.f32 0.0, %v671
  %673 = vmatmul.f32.gmra.mxu0 %v562
  %v674 = vpop.f32.mrf.mxu0
  %v675 = vadd.f32 0.0, %v674
  %676 = vdwg.mxu0
  %677 = vmatpush.msra.mxu0 %v499
  %678 = vmatpush.msra.mxu0 %v498
  %679 = vmatpush.msra.mxu0 %v497
  %680 = vmatpush.msra.mxu0 %v496
  %681 = vmatpush.msra.mxu0 %v495
  %682 = vmatpush.msra.mxu0 %v494
  %683 = vmatpush.msra.mxu0 %v493
  %684 = vmatpush.msra.mxu0 %v492
  %685 = vmatpush.msra.mxu0 %v491
  %686 = vmatpush.msra.mxu0 %v490
  %687 = vmatpush.msra.mxu0 %v489
  %688 = vmatpush.msra.mxu0 %v488
  %689 = vmatpush.msra.mxu0 %v487
  %690 = vmatpush.msra.mxu0 %v486
  %691 = vmatpush.msra.mxu0 %v485
  %692 = vmatpush.msra.mxu0 %v484
  %693 = vmatmul.f32.gmra.mxu0 %v501
  %v694 = vpop.f32.mrf.mxu0
  %v695 = vadd.f32 %v582, %v694
  %696 = vmatmul.f32.gmra.mxu0 %v503
  %v697 = vpop.f32.mrf.mxu0
  %v698 = vadd.f32 %v585, %v697
  %699 = vmatmul.f32.gmra.mxu0 %v505
  %v700 = vpop.f32.mrf.mxu0
  %v701 = vadd.f32 %v588, %v700
  %702 = vmatmul.f32.gmra.mxu0 %v507
  %v703 = vpop.f32.mrf.mxu0
  %v704 = vadd.f32 %v591, %v703
  %705 = vmatmul.f32.gmra.mxu0 %v509
  %v706 = vpop.f32.mrf.mxu0
  %v707 = vadd.f32 %v594, %v706
  %708 = vmatmul.f32.gmra.mxu0 %v511
  %v709 = vpop.f32.mrf.mxu0
  %v710 = vadd.f32 %v597, %v709
  %711 = vmatmul.f32.gmra.mxu0 %v513
  %v712 = vpop.f32.mrf.mxu0
  %v713 = vadd.f32 %v600, %v712
  %714 = vmatmul.f32.gmra.mxu0 %v515
  %v715 = vpop.f32.mrf.mxu0
  %v716 = vadd.f32 %v603, %v715
  %717 = vmatmul.f32.gmra.mxu0 %v517
  %v718 = vpop.f32.mrf.mxu0
  %v719 = vadd.f32 %v606, %v718
  %720 = vmatmul.f32.gmra.mxu0 %v519
  %v721 = vpop.f32.mrf.mxu0
  %v722 = vadd.f32 %v609, %v721
  %723 = vmatmul.f32.gmra.mxu0 %v521
  %v724 = vpop.f32.mrf.mxu0
  %v725 = vadd.f32 %v612, %v724
  %726 = vmatmul.f32.gmra.mxu0 %v523
  %v727 = vpop.f32.mrf.mxu0
  %v728 = vadd.f32 %v615, %v727
  %729 = vmatmul.f32.gmra.mxu0 %v525
  %v730 = vpop.f32.mrf.mxu0
  %v731 = vadd.f32 %v618, %v730
  %732 = vmatmul.f32.gmra.mxu0 %v527
  %v733 = vpop.f32.mrf.mxu0
  %v734 = vadd.f32 %v621, %v733
  %735 = vmatmul.f32.gmra.mxu0 %v529
  %v736 = vpop.f32.mrf.mxu0
  %v737 = vadd.f32 %v624, %v736
  %738 = vmatmul.f32.gmra.mxu0 %v531
  %v739 = vpop.f32.mrf.mxu0
  %v740 = vadd.f32 %v627, %v739
  %741 = vmatmul.f32.gmra.mxu0 %v533
  %v742 = vpop.f32.mrf.mxu0
  %v743 = vadd.f32 %v630, %v742
  %744 = vmatmul.f32.gmra.mxu0 %v535
  %v745 = vpop.f32.mrf.mxu0
  %v746 = vadd.f32 %v633, %v745
  %747 = vmatmul.f32.gmra.mxu0 %v537
  %v748 = vpop.f32.mrf.mxu0
  %v749 = vadd.f32 %v636, %v748
  %750 = vmatmul.f32.gmra.mxu0 %v539
  %v751 = vpop.f32.mrf.mxu0
  %v752 = vadd.f32 %v639, %v751
  %753 = vmatmul.f32.gmra.mxu0 %v541
  %v754 = vpop.f32.mrf.mxu0
  %v755 = vadd.f32 %v642, %v754
  %756 = vmatmul.f32.gmra.mxu0 %v543
  %v757 = vpop.f32.mrf.mxu0
  %v758 = vadd.f32 %v645, %v757
  %759 = vmatmul.f32.gmra.mxu0 %v545
  %v760 = vpop.f32.mrf.mxu0
  %v761 = vadd.f32 %v648, %v760
  %762 = vmatmul.f32.gmra.mxu0 %v547
  %v763 = vpop.f32.mrf.mxu0
  %v764 = vadd.f32 %v651, %v763
  %765 = vmatmul.f32.gmra.mxu0 %v549
  %v766 = vpop.f32.mrf.mxu0
  %v767 = vadd.f32 %v654, %v766
  %768 = vmatmul.f32.gmra.mxu0 %v551
  %v769 = vpop.f32.mrf.mxu0
  %v770 = vadd.f32 %v657, %v769
  %771 = vmatmul.f32.gmra.mxu0 %v553
  %v772 = vpop.f32.mrf.mxu0
  %v773 = vadd.f32 %v660, %v772
  %774 = vmatmul.f32.gmra.mxu0 %v555
  %v775 = vpop.f32.mrf.mxu0
  %v776 = vadd.f32 %v663, %v775
  %777 = vmatmul.f32.gmra.mxu0 %v557
  %v778 = vpop.f32.mrf.mxu0
  %v779 = vadd.f32 %v666, %v778
  %780 = vmatmul.f32.gmra.mxu0 %v559
  %v781 = vpop.f32.mrf.mxu0
  %v782 = vadd.f32 %v669, %v781
  %783 = vmatmul.f32.gmra.mxu0 %v561
  %v784 = vpop.f32.mrf.mxu0
  %v785 = vadd.f32 %v672, %v784
  %786 = vmatmul.f32.gmra.mxu0 %v563
  %v787 = vpop.f32.mrf.mxu0
  %v788 = vadd.f32 %v675, %v787
  %789 = vdwg.mxu0
  %790 = vst [vmem:[%s4] sm:$0xff] %v695
  %791 = vst [vmem:[%s4 + $0x8] sm:$0xff] %v698
  %792 = vst [vmem:[%s4 + $0x10] sm:$0xff] %v701
  %793 = vst [vmem:[%s4 + $0x18] sm:$0xff] %v704
  %794 = vst [vmem:[%s4 + $0x20] sm:$0xff] %v707
  %795 = vst [vmem:[%s4 + $0x28] sm:$0xff] %v710
  %796 = vst [vmem:[%s4 + $0x30] sm:$0xff] %v713
  %797 = vst [vmem:[%s4 + $0x38] sm:$0xff] %v716
  %798 = vst [vmem:[%s4 + $0x40] sm:$0xff] %v719
  %799 = vst [vmem:[%s4 + $0x48] sm:$0xff] %v722
  %800 = vst [vmem:[%s4 + $0x50] sm:$0xff] %v725
  %801 = vst [vmem:[%s4 + $0x58] sm:$0xff] %v728
  %802 = vst [vmem:[%s4 + $0x60] sm:$0xff] %v731
  %803 = vst [vmem:[%s4 + $0x68] sm:$0xff] %v734
  %804 = vst [vmem:[%s4 + $0x70] sm:$0xff] %v737
  %805 = vst [vmem:[%s4 + $0x78] sm:$0xff] %v740
  %806 = vst [vmem:[%s4 + $0x80] sm:$0xff] %v743
  %807 = vst [vmem:[%s4 + $0x88] sm:$0xff] %v746
  %808 = vst [vmem:[%s4 + $0x90] sm:$0xff] %v749
  %809 = vst [vmem:[%s4 + $0x98] sm:$0xff] %v752
  %810 = vst [vmem:[%s4 + $0xa0] sm:$0xff] %v755
  %811 = vst [vmem:[%s4 + $0xa8] sm:$0xff] %v758
  %812 = vst [vmem:[%s4 + $0xb0] sm:$0xff] %v761
  %813 = vst [vmem:[%s4 + $0xb8] sm:$0xff] %v764
  %814 = vst [vmem:[%s4 + $0xc0] sm:$0xff] %v767
  %815 = vst [vmem:[%s4 + $0xc8] sm:$0xff] %v770
  %816 = vst [vmem:[%s4 + $0xd0] sm:$0xff] %v773
  %817 = vst [vmem:[%s4 + $0xd8] sm:$0xff] %v776
  %818 = vst [vmem:[%s4 + $0xe0] sm:$0xff] %v779
  %819 = vst [vmem:[%s4 + $0xe8] sm:$0xff] %v782
  %820 = vst [vmem:[%s4 + $0xf0] sm:$0xff] %v785
  %821 = vst [vmem:[%s4 + $0xf8] sm:$0xff] %v788
  %p822 = scmp.eq.s32.totalorder 0, 0
  // Predicated region
  $region18: #{sepconv4d_forward.4} parent=0 // pred_check
    %p823 = pneg %p822
  $region19: #{sepconv4d_forward.4} parent=0 // pred_check_branch
    %825 = sbr.rel (%p823) target = $region21
  $region20: #{sepconv4d_forward.4} parent=0 // pred_region
    %vm826 = vcmask 7168
    %827 = vst.msk [vmem:[#allocation2] sm:$0xff] %vm826, 0.0
    %828 = vst.msk [vmem:[#allocation2 + $0x8] sm:$0xff] %vm826, 0.0
    %829 = vst.msk [vmem:[#allocation2 + $0x10] sm:$0xff] %vm826, 0.0
    %830 = vst.msk [vmem:[#allocation2 + $0x18] sm:$0xff] %vm826, 0.0
    %831 = vst.msk [vmem:[#allocation2 + $0x20] sm:$0xff] %vm826, 0.0
    %832 = vst.msk [vmem:[#allocation2 + $0x28] sm:$0xff] %vm826, 0.0
    %833 = vst.msk [vmem:[#allocation2 + $0x30] sm:$0xff] %vm826, 0.0
    %834 = vst.msk [vmem:[#allocation2 + $0x38] sm:$0xff] %vm826, 0.0
    %835 = vst.msk [vmem:[#allocation2 + $0x40] sm:$0xff] %vm826, 0.0
    %836 = vst.msk [vmem:[#allocation2 + $0x48] sm:$0xff] %vm826, 0.0
    %837 = vst.msk [vmem:[#allocation2 + $0x50] sm:$0xff] %vm826, 0.0
    %838 = vst.msk [vmem:[#allocation2 + $0x58] sm:$0xff] %vm826, 0.0
    %839 = vst.msk [vmem:[#allocation2 + $0x60] sm:$0xff] %vm826, 0.0
    %840 = vst.msk [vmem:[#allocation2 + $0x68] sm:$0xff] %vm826, 0.0
    %841 = vst.msk [vmem:[#allocation2 + $0x70] sm:$0xff] %vm826, 0.0
    %842 = vst.msk [vmem:[#allocation2 + $0x78] sm:$0xff] %vm826, 0.0
    %843 = vst.msk [vmem:[#allocation2 + $0x80] sm:$0xff] %vm826, 0.0
    %844 = vst.msk [vmem:[#allocation2 + $0x88] sm:$0xff] %vm826, 0.0
    %845 = vst.msk [vmem:[#allocation2 + $0x90] sm:$0xff] %vm826, 0.0
    %846 = vst.msk [vmem:[#allocation2 + $0x98] sm:$0xff] %vm826, 0.0
    %847 = vst.msk [vmem:[#allocation2 + $0xa0] sm:$0xff] %vm826, 0.0
    %848 = vst.msk [vmem:[#allocation2 + $0xa8] sm:$0xff] %vm826, 0.0
    %849 = vst.msk [vmem:[#allocation2 + $0xb0] sm:$0xff] %vm826, 0.0
    %850 = vst.msk [vmem:[#allocation2 + $0xb8] sm:$0xff] %vm826, 0.0
    %851 = vst.msk [vmem:[#allocation2 + $0xc0] sm:$0xff] %vm826, 0.0
    %852 = vst.msk [vmem:[#allocation2 + $0xc8] sm:$0xff] %vm826, 0.0
    %853 = vst.msk [vmem:[#allocation2 + $0xd0] sm:$0xff] %vm826, 0.0
    %854 = vst.msk [vmem:[#allocation2 + $0xd8] sm:$0xff] %vm826, 0.0
    %855 = vst.msk [vmem:[#allocation2 + $0xe0] sm:$0xff] %vm826, 0.0
    %856 = vst.msk [vmem:[#allocation2 + $0xe8] sm:$0xff] %vm826, 0.0
    %857 = vst.msk [vmem:[#allocation2 + $0xf0] sm:$0xff] %vm826, 0.0
    %858 = vst.msk [vmem:[#allocation2 + $0xf8] sm:$0xff] %vm826, 0.0
    %859 = vst.msk [vmem:[#allocation3] sm:$0xff] %vm826, 0.0
    %860 = vst.msk [vmem:[#allocation3 + $0x8] sm:$0xff] %vm826, 0.0
    %861 = vst.msk [vmem:[#allocation3 + $0x10] sm:$0xff] %vm826, 0.0
    %862 = vst.msk [vmem:[#allocation3 + $0x18] sm:$0xff] %vm826, 0.0
    %863 = vst.msk [vmem:[#allocation3 + $0x20] sm:$0xff] %vm826, 0.0
    %864 = vst.msk [vmem:[#allocation3 + $0x28] sm:$0xff] %vm826, 0.0
    %865 = vst.msk [vmem:[#allocation3 + $0x30] sm:$0xff] %vm826, 0.0
    %866 = vst.msk [vmem:[#allocation3 + $0x38] sm:$0xff] %vm826, 0.0
    %867 = vst.msk [vmem:[#allocation3 + $0x40] sm:$0xff] %vm826, 0.0
    %868 = vst.msk [vmem:[#allocation3 + $0x48] sm:$0xff] %vm826, 0.0
    %869 = vst.msk [vmem:[#allocation3 + $0x50] sm:$0xff] %vm826, 0.0
    %870 = vst.msk [vmem:[#allocation3 + $0x58] sm:$0xff] %vm826, 0.0
    %871 = vst.msk [vmem:[#allocation3 + $0x60] sm:$0xff] %vm826, 0.0
    %872 = vst.msk [vmem:[#allocation3 + $0x68] sm:$0xff] %vm826, 0.0
    %873 = vst.msk [vmem:[#allocation3 + $0x70] sm:$0xff] %vm826, 0.0
    %874 = vst.msk [vmem:[#allocation3 + $0x78] sm:$0xff] %vm826, 0.0
    %875 = vst.msk [vmem:[#allocation3 + $0x80] sm:$0xff] %vm826, 0.0
    %876 = vst.msk [vmem:[#allocation3 + $0x88] sm:$0xff] %vm826, 0.0
    %877 = vst.msk [vmem:[#allocation3 + $0x90] sm:$0xff] %vm826, 0.0
    %878 = vst.msk [vmem:[#allocation3 + $0x98] sm:$0xff] %vm826, 0.0
    %879 = vst.msk [vmem:[#allocation3 + $0xa0] sm:$0xff] %vm826, 0.0
    %880 = vst.msk [vmem:[#allocation3 + $0xa8] sm:$0xff] %vm826, 0.0
    %881 = vst.msk [vmem:[#allocation3 + $0xb0] sm:$0xff] %vm826, 0.0
    %882 = vst.msk [vmem:[#allocation3 + $0xb8] sm:$0xff] %vm826, 0.0
    %883 = vst.msk [vmem:[#allocation3 + $0xc0] sm:$0xff] %vm826, 0.0
    %884 = vst.msk [vmem:[#allocation3 + $0xc8] sm:$0xff] %vm826, 0.0
    %885 = vst.msk [vmem:[#allocation3 + $0xd0] sm:$0xff] %vm826, 0.0
    %886 = vst.msk [vmem:[#allocation3 + $0xd8] sm:$0xff] %vm826, 0.0
    %887 = vst.msk [vmem:[#allocation3 + $0xe0] sm:$0xff] %vm826, 0.0
    %888 = vst.msk [vmem:[#allocation3 + $0xe8] sm:$0xff] %vm826, 0.0
    %889 = vst.msk [vmem:[#allocation3 + $0xf0] sm:$0xff] %vm826, 0.0
    %890 = vst.msk [vmem:[#allocation3 + $0xf8] sm:$0xff] %vm826, 0.0
  $region21: #{sepconv4d_forward.4} parent=0 // pred_fallthru
    _
  %v891 = vld [vmem:[#allocation2] sm:$0xff]
  %v892 = vld [vmem:[#allocation2 + $0x8] sm:$0xff]
  %v893 = vld [vmem:[#allocation2 + $0x10] sm:$0xff]
  %v894 = vld [vmem:[#allocation2 + $0x18] sm:$0xff]
  %v895 = vld [vmem:[#allocation2 + $0x20] sm:$0xff]
  %v896 = vld [vmem:[#allocation2 + $0x28] sm:$0xff]
  %v897 = vld [vmem:[#allocation2 + $0x30] sm:$0xff]
  %v898 = vld [vmem:[#allocation2 + $0x38] sm:$0xff]
  %v899 = vld [vmem:[#allocation2 + $0x40] sm:$0xff]
  %v900 = vld [vmem:[#allocation2 + $0x48] sm:$0xff]
  %v901 = vld [vmem:[#allocation2 + $0x50] sm:$0xff]
  %v902 = vld [vmem:[#allocation2 + $0x58] sm:$0xff]
  %v903 = vld [vmem:[#allocation2 + $0x60] sm:$0xff]
  %v904 = vld [vmem:[#allocation2 + $0x68] sm:$0xff]
  %v905 = vld [vmem:[#allocation2 + $0x70] sm:$0xff]
  %v906 = vld [vmem:[#allocation2 + $0x78] sm:$0xff]
  %v907 = vld [vmem:[#allocation2 + $0x80] sm:$0xff]
  %v908 = vld [vmem:[#allocation2 + $0x88] sm:$0xff]
  %v909 = vld [vmem:[#allocation2 + $0x90] sm:$0xff]
  %v910 = vld [vmem:[#allocation2 + $0x98] sm:$0xff]
  %v911 = vld [vmem:[#allocation2 + $0xa0] sm:$0xff]
  %v912 = vld [vmem:[#allocation2 + $0xa8] sm:$0xff]
  %v913 = vld [vmem:[#allocation2 + $0xb0] sm:$0xff]
  %v914 = vld [vmem:[#allocation2 + $0xb8] sm:$0xff]
  %v915 = vld [vmem:[#allocation2 + $0xc0] sm:$0xff]
  %v916 = vld [vmem:[#allocation2 + $0xc8] sm:$0xff]
  %v917 = vld [vmem:[#allocation2 + $0xd0] sm:$0xff]
  %v918 = vld [vmem:[#allocation2 + $0xd8] sm:$0xff]
  %v919 = vld [vmem:[#allocation2 + $0xe0] sm:$0xff]
  %v920 = vld [vmem:[#allocation2 + $0xe8] sm:$0xff]
  %v921 = vld [vmem:[#allocation2 + $0xf0] sm:$0xff]
  %v922 = vld [vmem:[#allocation2 + $0xf8] sm:$0xff]
  %923 = vadd.xlane.f32.xlu0 %v695
  %v924 = vpop.xlane.xlu0 %923
  %925 = vadd.xlane.f32.xlu0 %v698
  %v926 = vpop.xlane.xlu0 %925
  %927 = vadd.xlane.f32.xlu0 %v701
  %v928 = vpop.xlane.xlu0 %927
  %929 = vadd.xlane.f32.xlu0 %v704
  %v930 = vpop.xlane.xlu0 %929
  %931 = vadd.xlane.f32.xlu0 %v707
  %v932 = vpop.xlane.xlu0 %931
  %933 = vadd.xlane.f32.xlu0 %v710
  %v934 = vpop.xlane.xlu0 %933
  %935 = vadd.xlane.f32.xlu0 %v713
  %v936 = vpop.xlane.xlu0 %935
  %937 = vadd.xlane.f32.xlu0 %v716
  %v938 = vpop.xlane.xlu0 %937
  %939 = vadd.xlane.f32.xlu0 %v719
  %v940 = vpop.xlane.xlu0 %939
  %941 = vadd.xlane.f32.xlu0 %v722
  %v942 = vpop.xlane.xlu0 %941
  %943 = vadd.xlane.f32.xlu0 %v725
  %v944 = vpop.xlane.xlu0 %943
  %945 = vadd.xlane.f32.xlu0 %v728
  %v946 = vpop.xlane.xlu0 %945
  %947 = vadd.xlane.f32.xlu0 %v731
  %v948 = vpop.xlane.xlu0 %947
  %949 = vadd.xlane.f32.xlu0 %v734
  %v950 = vpop.xlane.xlu0 %949
  %951 = vadd.xlane.f32.xlu0 %v737
  %v952 = vpop.xlane.xlu0 %951
  %953 = vadd.xlane.f32.xlu0 %v740
  %v954 = vpop.xlane.xlu0 %953
  %955 = vadd.xlane.f32.xlu0 %v743
  %v956 = vpop.xlane.xlu0 %955
  %957 = vadd.xlane.f32.xlu0 %v746
  %v958 = vpop.xlane.xlu0 %957
  %959 = vadd.xlane.f32.xlu0 %v749
  %v960 = vpop.xlane.xlu0 %959
  %961 = vadd.xlane.f32.xlu0 %v752
  %v962 = vpop.xlane.xlu0 %961
  %963 = vadd.xlane.f32.xlu0 %v755
  %v964 = vpop.xlane.xlu0 %963
  %965 = vadd.xlane.f32.xlu0 %v758
  %v966 = vpop.xlane.xlu0 %965
  %967 = vadd.xlane.f32.xlu0 %v761
  %v968 = vpop.xlane.xlu0 %967
  %969 = vadd.xlane.f32.xlu0 %v764
  %v970 = vpop.xlane.xlu0 %969
  %971 = vadd.xlane.f32.xlu0 %v767
  %v972 = vpop.xlane.xlu0 %971
  %973 = vadd.xlane.f32.xlu0 %v770
  %v974 = vpop.xlane.xlu0 %973
  %975 = vadd.xlane.f32.xlu0 %v773
  %v976 = vpop.xlane.xlu0 %975
  %977 = vadd.xlane.f32.xlu0 %v776
  %v978 = vpop.xlane.xlu0 %977
  %979 = vadd.xlane.f32.xlu0 %v779
  %v980 = vpop.xlane.xlu0 %979
  %981 = vadd.xlane.f32.xlu0 %v782
  %v982 = vpop.xlane.xlu0 %981
  %983 = vadd.xlane.f32.xlu0 %v785
  %v984 = vpop.xlane.xlu0 %983
  %985 = vadd.xlane.f32.xlu0 %v788
  %v986 = vpop.xlane.xlu0 %985
  %v987 = vadd.f32 %v891, %v924
  %v988 = vadd.f32 %v892, %v926
  %v989 = vadd.f32 %v893, %v928
  %v990 = vadd.f32 %v894, %v930
  %v991 = vadd.f32 %v895, %v932
  %v992 = vadd.f32 %v896, %v934
  %v993 = vadd.f32 %v897, %v936
  %v994 = vadd.f32 %v898, %v938
  %v995 = vadd.f32 %v899, %v940
  %v996 = vadd.f32 %v900, %v942
  %v997 = vadd.f32 %v901, %v944
  %v998 = vadd.f32 %v902, %v946
  %v999 = vadd.f32 %v903, %v948
  %v1000 = vadd.f32 %v904, %v950
  %v1001 = vadd.f32 %v905, %v952
  %v1002 = vadd.f32 %v906, %v954
  %v1003 = vadd.f32 %v907, %v956
  %v1004 = vadd.f32 %v908, %v958
  %v1005 = vadd.f32 %v909, %v960
  %v1006 = vadd.f32 %v910, %v962
  %v1007 = vadd.f32 %v911, %v964
  %v1008 = vadd.f32 %v912, %v966
  %v1009 = vadd.f32 %v913, %v968
  %v1010 = vadd.f32 %v914, %v970
  %v1011 = vadd.f32 %v915, %v972
  %v1012 = vadd.f32 %v916, %v974
  %v1013 = vadd.f32 %v917, %v976
  %v1014 = vadd.f32 %v918, %v978
  %v1015 = vadd.f32 %v919, %v980
  %v1016 = vadd.f32 %v920, %v982
  %v1017 = vadd.f32 %v921, %v984
  %v1018 = vadd.f32 %v922, %v986
  %vm1019 = vcmask 7168
  %1020 = vst.msk [vmem:[#allocation2] sm:$0xff] %vm1019, %v987
  %1021 = vst.msk [vmem:[#allocation2 + $0x8] sm:$0xff] %vm1019, %v988
  %1022 = vst.msk [vmem:[#allocation2 + $0x10] sm:$0xff] %vm1019, %v989
  %1023 = vst.msk [vmem:[#allocation2 + $0x18] sm:$0xff] %vm1019, %v990
  %1024 = vst.msk [vmem:[#allocation2 + $0x20] sm:$0xff] %vm1019, %v991
  %1025 = vst.msk [vmem:[#allocation2 + $0x28] sm:$0xff] %vm1019, %v992
  %1026 = vst.msk [vmem:[#allocation2 + $0x30] sm:$0xff] %vm1019, %v993
  %1027 = vst.msk [vmem:[#allocation2 + $0x38] sm:$0xff] %vm1019, %v994
  %1028 = vst.msk [vmem:[#allocation2 + $0x40] sm:$0xff] %vm1019, %v995
  %1029 = vst.msk [vmem:[#allocation2 + $0x48] sm:$0xff] %vm1019, %v996
  %1030 = vst.msk [vmem:[#allocation2 + $0x50] sm:$0xff] %vm1019, %v997
  %1031 = vst.msk [vmem:[#allocation2 + $0x58] sm:$0xff] %vm1019, %v998
  %1032 = vst.msk [vmem:[#allocation2 + $0x60] sm:$0xff] %vm1019, %v999
  %1033 = vst.msk [vmem:[#allocation2 + $0x68] sm:$0xff] %vm1019, %v1000
  %1034 = vst.msk [vmem:[#allocation2 + $0x70] sm:$0xff] %vm1019, %v1001
  %1035 = vst.msk [vmem:[#allocation2 + $0x78] sm:$0xff] %vm1019, %v1002
  %1036 = vst.msk [vmem:[#allocation2 + $0x80] sm:$0xff] %vm1019, %v1003
  %1037 = vst.msk [vmem:[#allocation2 + $0x88] sm:$0xff] %vm1019, %v1004
  %1038 = vst.msk [vmem:[#allocation2 + $0x90] sm:$0xff] %vm1019, %v1005
  %1039 = vst.msk [vmem:[#allocation2 + $0x98] sm:$0xff] %vm1019, %v1006
  %1040 = vst.msk [vmem:[#allocation2 + $0xa0] sm:$0xff] %vm1019, %v1007
  %1041 = vst.msk [vmem:[#allocation2 + $0xa8] sm:$0xff] %vm1019, %v1008
  %1042 = vst.msk [vmem:[#allocation2 + $0xb0] sm:$0xff] %vm1019, %v1009
  %1043 = vst.msk [vmem:[#allocation2 + $0xb8] sm:$0xff] %vm1019, %v1010
  %1044 = vst.msk [vmem:[#allocation2 + $0xc0] sm:$0xff] %vm1019, %v1011
  %1045 = vst.msk [vmem:[#allocation2 + $0xc8] sm:$0xff] %vm1019, %v1012
  %1046 = vst.msk [vmem:[#allocation2 + $0xd0] sm:$0xff] %vm1019, %v1013
  %1047 = vst.msk [vmem:[#allocation2 + $0xd8] sm:$0xff] %vm1019, %v1014
  %1048 = vst.msk [vmem:[#allocation2 + $0xe0] sm:$0xff] %vm1019, %v1015
  %1049 = vst.msk [vmem:[#allocation2 + $0xe8] sm:$0xff] %vm1019, %v1016
  %1050 = vst.msk [vmem:[#allocation2 + $0xf0] sm:$0xff] %vm1019, %v1017
  %1051 = vst.msk [vmem:[#allocation2 + $0xf8] sm:$0xff] %vm1019, %v1018
  %v1052 = vld [vmem:[#allocation3] sm:$0xff]
  %v1053 = vld [vmem:[#allocation3 + $0x8] sm:$0xff]
  %v1054 = vld [vmem:[#allocation3 + $0x10] sm:$0xff]
  %v1055 = vld [vmem:[#allocation3 + $0x18] sm:$0xff]
  %v1056 = vld [vmem:[#allocation3 + $0x20] sm:$0xff]
  %v1057 = vld [vmem:[#allocation3 + $0x28] sm:$0xff]
  %v1058 = vld [vmem:[#allocation3 + $0x30] sm:$0xff]
  %v1059 = vld [vmem:[#allocation3 + $0x38] sm:$0xff]
  %v1060 = vld [vmem:[#allocation3 + $0x40] sm:$0xff]
  %v1061 = vld [vmem:[#allocation3 + $0x48] sm:$0xff]
  %v1062 = vld [vmem:[#allocation3 + $0x50] sm:$0xff]
  %v1063 = vld [vmem:[#allocation3 + $0x58] sm:$0xff]
  %v1064 = vld [vmem:[#allocation3 + $0x60] sm:$0xff]
  %v1065 = vld [vmem:[#allocation3 + $0x68] sm:$0xff]
  %v1066 = vld [vmem:[#allocation3 + $0x70] sm:$0xff]
  %v1067 = vld [vmem:[#allocation3 + $0x78] sm:$0xff]
  %v1068 = vld [vmem:[#allocation3 + $0x80] sm:$0xff]
  %v1069 = vld [vmem:[#allocation3 + $0x88] sm:$0xff]
  %v1070 = vld [vmem:[#allocation3 + $0x90] sm:$0xff]
  %v1071 = vld [vmem:[#allocation3 + $0x98] sm:$0xff]
  %v1072 = vld [vmem:[#allocation3 + $0xa0] sm:$0xff]
  %v1073 = vld [vmem:[#allocation3 + $0xa8] sm:$0xff]
  %v1074 = vld [vmem:[#allocation3 + $0xb0] sm:$0xff]
  %v1075 = vld [vmem:[#allocation3 + $0xb8] sm:$0xff]
  %v1076 = vld [vmem:[#allocation3 + $0xc0] sm:$0xff]
  %v1077 = vld [vmem:[#allocation3 + $0xc8] sm:$0xff]
  %v1078 = vld [vmem:[#allocation3 + $0xd0] sm:$0xff]
  %v1079 = vld [vmem:[#allocation3 + $0xd8] sm:$0xff]
  %v1080 = vld [vmem:[#allocation3 + $0xe0] sm:$0xff]
  %v1081 = vld [vmem:[#allocation3 + $0xe8] sm:$0xff]
  %v1082 = vld [vmem:[#allocation3 + $0xf0] sm:$0xff]
  %v1083 = vld [vmem:[#allocation3 + $0xf8] sm:$0xff]
  %v1084 = vmul.f32 %v695, %v695
  %v1085 = vmul.f32 %v698, %v698
  %v1086 = vmul.f32 %v701, %v701
  %v1087 = vmul.f32 %v704, %v704
  %v1088 = vmul.f32 %v707, %v707
  %v1089 = vmul.f32 %v710, %v710
  %v1090 = vmul.f32 %v713, %v713
  %v1091 = vmul.f32 %v716, %v716
  %v1092 = vmul.f32 %v719, %v719
  %v1093 = vmul.f32 %v722, %v722
  %v1094 = vmul.f32 %v725, %v725
  %v1095 = vmul.f32 %v728, %v728
  %v1096 = vmul.f32 %v731, %v731
  %v1097 = vmul.f32 %v734, %v734
  %v1098 = vmul.f32 %v737, %v737
  %v1099 = vmul.f32 %v740, %v740
  %v1100 = vmul.f32 %v743, %v743
  %v1101 = vmul.f32 %v746, %v746
  %v1102 = vmul.f32 %v749, %v749
  %v1103 = vmul.f32 %v752, %v752
  %v1104 = vmul.f32 %v755, %v755
  %v1105 = vmul.f32 %v758, %v758
  %v1106 = vmul.f32 %v761, %v761
  %v1107 = vmul.f32 %v764, %v764
  %v1108 = vmul.f32 %v767, %v767
  %v1109 = vmul.f32 %v770, %v770
  %v1110 = vmul.f32 %v773, %v773
  %v1111 = vmul.f32 %v776, %v776
  %v1112 = vmul.f32 %v779, %v779
  %v1113 = vmul.f32 %v782, %v782
  %v1114 = vmul.f32 %v785, %v785
  %v1115 = vmul.f32 %v788, %v788
  %1116 = vadd.xlane.f32.xlu0 %v1084
  %v1117 = vpop.xlane.xlu0 %1116
  %1118 = vadd.xlane.f32.xlu0 %v1085
  %v1119 = vpop.xlane.xlu0 %1118
  %1120 = vadd.xlane.f32.xlu0 %v1086
  %v1121 = vpop.xlane.xlu0 %1120
  %1122 = vadd.xlane.f32.xlu0 %v1087
  %v1123 = vpop.xlane.xlu0 %1122
  %1124 = vadd.xlane.f32.xlu0 %v1088
  %v1125 = vpop.xlane.xlu0 %1124
  %1126 = vadd.xlane.f32.xlu0 %v1089
  %v1127 = vpop.xlane.xlu0 %1126
  %1128 = vadd.xlane.f32.xlu0 %v1090
  %v1129 = vpop.xlane.xlu0 %1128
  %1130 = vadd.xlane.f32.xlu0 %v1091
  %v1131 = vpop.xlane.xlu0 %1130
  %1132 = vadd.xlane.f32.xlu0 %v1092
  %v1133 = vpop.xlane.xlu0 %1132
  %1134 = vadd.xlane.f32.xlu0 %v1093
  %v1135 = vpop.xlane.xlu0 %1134
  %1136 = vadd.xlane.f32.xlu0 %v1094
  %v1137 = vpop.xlane.xlu0 %1136
  %1138 = vadd.xlane.f32.xlu0 %v1095
  %v1139 = vpop.xlane.xlu0 %1138
  %1140 = vadd.xlane.f32.xlu0 %v1096
  %v1141 = vpop.xlane.xlu0 %1140
  %1142 = vadd.xlane.f32.xlu0 %v1097
  %v1143 = vpop.xlane.xlu0 %1142
  %1144 = vadd.xlane.f32.xlu0 %v1098
  %v1145 = vpop.xlane.xlu0 %1144
  %1146 = vadd.xlane.f32.xlu0 %v1099
  %v1147 = vpop.xlane.xlu0 %1146
  %1148 = vadd.xlane.f32.xlu0 %v1100
  %v1149 = vpop.xlane.xlu0 %1148
  %1150 = vadd.xlane.f32.xlu0 %v1101
  %v1151 = vpop.xlane.xlu0 %1150
  %1152 = vadd.xlane.f32.xlu0 %v1102
  %v1153 = vpop.xlane.xlu0 %1152
  %1154 = vadd.xlane.f32.xlu0 %v1103
  %v1155 = vpop.xlane.xlu0 %1154
  %1156 = vadd.xlane.f32.xlu0 %v1104
  %v1157 = vpop.xlane.xlu0 %1156
  %1158 = vadd.xlane.f32.xlu0 %v1105
  %v1159 = vpop.xlane.xlu0 %1158
  %1160 = vadd.xlane.f32.xlu0 %v1106
  %v1161 = vpop.xlane.xlu0 %1160
  %1162 = vadd.xlane.f32.xlu0 %v1107
  %v1163 = vpop.xlane.xlu0 %1162
  %1164 = vadd.xlane.f32.xlu0 %v1108
  %v1165 = vpop.xlane.xlu0 %1164
  %1166 = vadd.xlane.f32.xlu0 %v1109
  %v1167 = vpop.xlane.xlu0 %1166
  %1168 = vadd.xlane.f32.xlu0 %v1110
  %v1169 = vpop.xlane.xlu0 %1168
  %1170 = vadd.xlane.f32.xlu0 %v1111
  %v1171 = vpop.xlane.xlu0 %1170
  %1172 = vadd.xlane.f32.xlu0 %v1112
  %v1173 = vpop.xlane.xlu0 %1172
  %1174 = vadd.xlane.f32.xlu0 %v1113
  %v1175 = vpop.xlane.xlu0 %1174
  %1176 = vadd.xlane.f32.xlu0 %v1114
  %v1177 = vpop.xlane.xlu0 %1176
  %1178 = vadd.xlane.f32.xlu0 %v1115
  %v1179 = vpop.xlane.xlu0 %1178
  %v1180 = vadd.f32 %v1052, %v1117
  %v1181 = vadd.f32 %v1053, %v1119
  %v1182 = vadd.f32 %v1054, %v1121
  %v1183 = vadd.f32 %v1055, %v1123
  %v1184 = vadd.f32 %v1056, %v1125
  %v1185 = vadd.f32 %v1057, %v1127
  %v1186 = vadd.f32 %v1058, %v1129
  %v1187 = vadd.f32 %v1059, %v1131
  %v1188 = vadd.f32 %v1060, %v1133
  %v1189 = vadd.f32 %v1061, %v1135
  %v1190 = vadd.f32 %v1062, %v1137
  %v1191 = vadd.f32 %v1063, %v1139
  %v1192 = vadd.f32 %v1064, %v1141
  %v1193 = vadd.f32 %v1065, %v1143
  %v1194 = vadd.f32 %v1066, %v1145
  %v1195 = vadd.f32 %v1067, %v1147
  %v1196 = vadd.f32 %v1068, %v1149
  %v1197 = vadd.f32 %v1069, %v1151
  %v1198 = vadd.f32 %v1070, %v1153
  %v1199 = vadd.f32 %v1071, %v1155
  %v1200 = vadd.f32 %v1072, %v1157
  %v1201 = vadd.f32 %v1073, %v1159
  %v1202 = vadd.f32 %v1074, %v1161
  %v1203 = vadd.f32 %v1075, %v1163
  %v1204 = vadd.f32 %v1076, %v1165
  %v1205 = vadd.f32 %v1077, %v1167
  %v1206 = vadd.f32 %v1078, %v1169
  %v1207 = vadd.f32 %v1079, %v1171
  %v1208 = vadd.f32 %v1080, %v1173
  %v1209 = vadd.f32 %v1081, %v1175
  %v1210 = vadd.f32 %v1082, %v1177
  %v1211 = vadd.f32 %v1083, %v1179
  %1212 = vst.msk [vmem:[#allocation3] sm:$0xff] %vm1019, %v1180
  %1213 = vst.msk [vmem:[#allocation3 + $0x8] sm:$0xff] %vm1019, %v1181
  %1214 = vst.msk [vmem:[#allocation3 + $0x10] sm:$0xff] %vm1019, %v1182
  %1215 = vst.msk [vmem:[#allocation3 + $0x18] sm:$0xff] %vm1019, %v1183
  %1216 = vst.msk [vmem:[#allocation3 + $0x20] sm:$0xff] %vm1019, %v1184
  %1217 = vst.msk [vmem:[#allocation3 + $0x28] sm:$0xff] %vm1019, %v1185
  %1218 = vst.msk [vmem:[#allocation3 + $0x30] sm:$0xff] %vm1019, %v1186
  %1219 = vst.msk [vmem:[#allocation3 + $0x38] sm:$0xff] %vm1019, %v1187
  %1220 = vst.msk [vmem:[#allocation3 + $0x40] sm:$0xff] %vm1019, %v1188
  %1221 = vst.msk [vmem:[#allocation3 + $0x48] sm:$0xff] %vm1019, %v1189
  %1222 = vst.msk [vmem:[#allocation3 + $0x50] sm:$0xff] %vm1019, %v1190
  %1223 = vst.msk [vmem:[#allocation3 + $0x58] sm:$0xff] %vm1019, %v1191
  %1224 = vst.msk [vmem:[#allocation3 + $0x60] sm:$0xff] %vm1019, %v1192
  %1225 = vst.msk [vmem:[#allocation3 + $0x68] sm:$0xff] %vm1019, %v1193
  %1226 = vst.msk [vmem:[#allocation3 + $0x70] sm:$0xff] %vm1019, %v1194
  %1227 = vst.msk [vmem:[#allocation3 + $0x78] sm:$0xff] %vm1019, %v1195
  %1228 = vst.msk [vmem:[#allocation3 + $0x80] sm:$0xff] %vm1019, %v1196
  %1229 = vst.msk [vmem:[#allocation3 + $0x88] sm:$0xff] %vm1019, %v1197
  %1230 = vst.msk [vmem:[#allocation3 + $0x90] sm:$0xff] %vm1019, %v1198
  %1231 = vst.msk [vmem:[#allocation3 + $0x98] sm:$0xff] %vm1019, %v1199
  %1232 = vst.msk [vmem:[#allocation3 + $0xa0] sm:$0xff] %vm1019, %v1200
  %1233 = vst.msk [vmem:[#allocation3 + $0xa8] sm:$0xff] %vm1019, %v1201
  %1234 = vst.msk [vmem:[#allocation3 + $0xb0] sm:$0xff] %vm1019, %v1202
  %1235 = vst.msk [vmem:[#allocation3 + $0xb8] sm:$0xff] %vm1019, %v1203
  %1236 = vst.msk [vmem:[#allocation3 + $0xc0] sm:$0xff] %vm1019, %v1204
  %1237 = vst.msk [vmem:[#allocation3 + $0xc8] sm:$0xff] %vm1019, %v1205
  %1238 = vst.msk [vmem:[#allocation3 + $0xd0] sm:$0xff] %vm1019, %v1206
  %1239 = vst.msk [vmem:[#allocation3 + $0xd8] sm:$0xff] %vm1019, %v1207
  %1240 = vst.msk [vmem:[#allocation3 + $0xe0] sm:$0xff] %vm1019, %v1208
  %1241 = vst.msk [vmem:[#allocation3 + $0xe8] sm:$0xff] %vm1019, %v1209
  %1242 = vst.msk [vmem:[#allocation3 + $0xf0] sm:$0xff] %vm1019, %v1210
  %1243 = vst.msk [vmem:[#allocation3 + $0xf8] sm:$0xff] %vm1019, %v1211
  // Predicated region
  $region22: #{sepconv4d_forward.4} parent=0 // pred_check
    %p1244 = pneg %p822
  $region23: #{sepconv4d_forward.4} parent=0 // pred_check_branch
    %1246 = sbr.rel (%p1244) target = $region25
  $region24: #{sepconv4d_forward.4} parent=0 // pred_region
    %v1247 = vld [vmem:[#allocation2] sm:$0xff]
    %v1248 = vld [vmem:[#allocation2 + $0x8] sm:$0xff]
    %v1249 = vld [vmem:[#allocation2 + $0x10] sm:$0xff]
    %v1250 = vld [vmem:[#allocation2 + $0x18] sm:$0xff]
    %v1251 = vld [vmem:[#allocation2 + $0x20] sm:$0xff]
    %v1252 = vld [vmem:[#allocation2 + $0x28] sm:$0xff]
    %v1253 = vld [vmem:[#allocation2 + $0x30] sm:$0xff]
    %v1254 = vld [vmem:[#allocation2 + $0x38] sm:$0xff]
    %v1255 = vld [vmem:[#allocation2 + $0x40] sm:$0xff]
    %v1256 = vld [vmem:[#allocation2 + $0x48] sm:$0xff]
    %v1257 = vld [vmem:[#allocation2 + $0x50] sm:$0xff]
    %v1258 = vld [vmem:[#allocation2 + $0x58] sm:$0xff]
    %v1259 = vld [vmem:[#allocation2 + $0x60] sm:$0xff]
    %v1260 = vld [vmem:[#allocation2 + $0x68] sm:$0xff]
    %v1261 = vld [vmem:[#allocation2 + $0x70] sm:$0xff]
    %v1262 = vld [vmem:[#allocation2 + $0x78] sm:$0xff]
    %v1263 = vld [vmem:[#allocation2 + $0x80] sm:$0xff]
    %v1264 = vld [vmem:[#allocation2 + $0x88] sm:$0xff]
    %v1265 = vld [vmem:[#allocation2 + $0x90] sm:$0xff]
    %v1266 = vld [vmem:[#allocation2 + $0x98] sm:$0xff]
    %v1267 = vld [vmem:[#allocation2 + $0xa0] sm:$0xff]
    %v1268 = vld [vmem:[#allocation2 + $0xa8] sm:$0xff]
    %v1269 = vld [vmem:[#allocation2 + $0xb0] sm:$0xff]
    %v1270 = vld [vmem:[#allocation2 + $0xb8] sm:$0xff]
    %v1271 = vld [vmem:[#allocation2 + $0xc0] sm:$0xff]
    %v1272 = vld [vmem:[#allocation2 + $0xc8] sm:$0xff]
    %v1273 = vld [vmem:[#allocation2 + $0xd0] sm:$0xff]
    %v1274 = vld [vmem:[#allocation2 + $0xd8] sm:$0xff]
    %v1275 = vld [vmem:[#allocation2 + $0xe0] sm:$0xff]
    %v1276 = vld [vmem:[#allocation2 + $0xe8] sm:$0xff]
    %v1277 = vld [vmem:[#allocation2 + $0xf0] sm:$0xff]
    %v1278 = vld [vmem:[#allocation2 + $0xf8] sm:$0xff]
    %1279 = vst.msk [vmem:[%s5] sm:$0xff] %vm1019, %v1247
    %1280 = vst.msk [vmem:[%s5 + $0x8] sm:$0xff] %vm1019, %v1248
    %1281 = vst.msk [vmem:[%s5 + $0x10] sm:$0xff] %vm1019, %v1249
    %1282 = vst.msk [vmem:[%s5 + $0x18] sm:$0xff] %vm1019, %v1250
    %1283 = vst.msk [vmem:[%s5 + $0x20] sm:$0xff] %vm1019, %v1251
    %1284 = vst.msk [vmem:[%s5 + $0x28] sm:$0xff] %vm1019, %v1252
    %1285 = vst.msk [vmem:[%s5 + $0x30] sm:$0xff] %vm1019, %v1253
    %1286 = vst.msk [vmem:[%s5 + $0x38] sm:$0xff] %vm1019, %v1254
    %1287 = vst.msk [vmem:[%s5 + $0x40] sm:$0xff] %vm1019, %v1255
    %1288 = vst.msk [vmem:[%s5 + $0x48] sm:$0xff] %vm1019, %v1256
    %1289 = vst.msk [vmem:[%s5 + $0x50] sm:$0xff] %vm1019, %v1257
    %1290 = vst.msk [vmem:[%s5 + $0x58] sm:$0xff] %vm1019, %v1258
    %1291 = vst.msk [vmem:[%s5 + $0x60] sm:$0xff] %vm1019, %v1259
    %1292 = vst.msk [vmem:[%s5 + $0x68] sm:$0xff] %vm1019, %v1260
    %1293 = vst.msk [vmem:[%s5 + $0x70] sm:$0xff] %vm1019, %v1261
    %1294 = vst.msk [vmem:[%s5 + $0x78] sm:$0xff] %vm1019, %v1262
    %1295 = vst.msk [vmem:[%s5 + $0x80] sm:$0xff] %vm1019, %v1263
    %1296 = vst.msk [vmem:[%s5 + $0x88] sm:$0xff] %vm1019, %v1264
    %1297 = vst.msk [vmem:[%s5 + $0x90] sm:$0xff] %vm1019, %v1265
    %1298 = vst.msk [vmem:[%s5 + $0x98] sm:$0xff] %vm1019, %v1266
    %1299 = vst.msk [vmem:[%s5 + $0xa0] sm:$0xff] %vm1019, %v1267
    %1300 = vst.msk [vmem:[%s5 + $0xa8] sm:$0xff] %vm1019, %v1268
    %1301 = vst.msk [vmem:[%s5 + $0xb0] sm:$0xff] %vm1019, %v1269
    %1302 = vst.msk [vmem:[%s5 + $0xb8] sm:$0xff] %vm1019, %v1270
    %1303 = vst.msk [vmem:[%s5 + $0xc0] sm:$0xff] %vm1019, %v1271
    %1304 = vst.msk [vmem:[%s5 + $0xc8] sm:$0xff] %vm1019, %v1272
    %1305 = vst.msk [vmem:[%s5 + $0xd0] sm:$0xff] %vm1019, %v1273
    %1306 = vst.msk [vmem:[%s5 + $0xd8] sm:$0xff] %vm1019, %v1274
    %1307 = vst.msk [vmem:[%s5 + $0xe0] sm:$0xff] %vm1019, %v1275
    %1308 = vst.msk [vmem:[%s5 + $0xe8] sm:$0xff] %vm1019, %v1276
    %1309 = vst.msk [vmem:[%s5 + $0xf0] sm:$0xff] %vm1019, %v1277
    %1310 = vst.msk [vmem:[%s5 + $0xf8] sm:$0xff] %vm1019, %v1278
    %v1311 = vld [vmem:[#allocation3] sm:$0xff]
    %v1312 = vld [vmem:[#allocation3 + $0x8] sm:$0xff]
    %v1313 = vld [vmem:[#allocation3 + $0x10] sm:$0xff]
    %v1314 = vld [vmem:[#allocation3 + $0x18] sm:$0xff]
    %v1315 = vld [vmem:[#allocation3 + $0x20] sm:$0xff]
    %v1316 = vld [vmem:[#allocation3 + $0x28] sm:$0xff]
    %v1317 = vld [vmem:[#allocation3 + $0x30] sm:$0xff]
    %v1318 = vld [vmem:[#allocation3 + $0x38] sm:$0xff]
    %v1319 = vld [vmem:[#allocation3 + $0x40] sm:$0xff]
    %v1320 = vld [vmem:[#allocation3 + $0x48] sm:$0xff]
    %v1321 = vld [vmem:[#allocation3 + $0x50] sm:$0xff]
    %v1322 = vld [vmem:[#allocation3 + $0x58] sm:$0xff]
    %v1323 = vld [vmem:[#allocation3 + $0x60] sm:$0xff]
    %v1324 = vld [vmem:[#allocation3 + $0x68] sm:$0xff]
    %v1325 = vld [vmem:[#allocation3 + $0x70] sm:$0xff]
    %v1326 = vld [vmem:[#allocation3 + $0x78] sm:$0xff]
    %v1327 = vld [vmem:[#allocation3 + $0x80] sm:$0xff]
    %v1328 = vld [vmem:[#allocation3 + $0x88] sm:$0xff]
    %v1329 = vld [vmem:[#allocation3 + $0x90] sm:$0xff]
    %v1330 = vld [vmem:[#allocation3 + $0x98] sm:$0xff]
    %v1331 = vld [vmem:[#allocation3 + $0xa0] sm:$0xff]
    %v1332 = vld [vmem:[#allocation3 + $0xa8] sm:$0xff]
    %v1333 = vld [vmem:[#allocation3 + $0xb0] sm:$0xff]
    %v1334 = vld [vmem:[#allocation3 + $0xb8] sm:$0xff]
    %v1335 = vld [vmem:[#allocation3 + $0xc0] sm:$0xff]
    %v1336 = vld [vmem:[#allocation3 + $0xc8] sm:$0xff]
    %v1337 = vld [vmem:[#allocation3 + $0xd0] sm:$0xff]
    %v1338 = vld [vmem:[#allocation3 + $0xd8] sm:$0xff]
    %v1339 = vld [vmem:[#allocation3 + $0xe0] sm:$0xff]
    %v1340 = vld [vmem:[#allocation3 + $0xe8] sm:$0xff]
    %v1341 = vld [vmem:[#allocation3 + $0xf0] sm:$0xff]
    %v1342 = vld [vmem:[#allocation3 + $0xf8] sm:$0xff]
    %1343 = vst.msk [vmem:[%s6] sm:$0xff] %vm1019, %v1311
    %1344 = vst.msk [vmem:[%s6 + $0x8] sm:$0xff] %vm1019, %v1312
    %1345 = vst.msk [vmem:[%s6 + $0x10] sm:$0xff] %vm1019, %v1313
    %1346 = vst.msk [vmem:[%s6 + $0x18] sm:$0xff] %vm1019, %v1314
    %1347 = vst.msk [vmem:[%s6 + $0x20] sm:$0xff] %vm1019, %v1315
    %1348 = vst.msk [vmem:[%s6 + $0x28] sm:$0xff] %vm1019, %v1316
    %1349 = vst.msk [vmem:[%s6 + $0x30] sm:$0xff] %vm1019, %v1317
    %1350 = vst.msk [vmem:[%s6 + $0x38] sm:$0xff] %vm1019, %v1318
    %1351 = vst.msk [vmem:[%s6 + $0x40] sm:$0xff] %vm1019, %v1319
    %1352 = vst.msk [vmem:[%s6 + $0x48] sm:$0xff] %vm1019, %v1320
    %1353 = vst.msk [vmem:[%s6 + $0x50] sm:$0xff] %vm1019, %v1321
    %1354 = vst.msk [vmem:[%s6 + $0x58] sm:$0xff] %vm1019, %v1322
    %1355 = vst.msk [vmem:[%s6 + $0x60] sm:$0xff] %vm1019, %v1323
    %1356 = vst.msk [vmem:[%s6 + $0x68] sm:$0xff] %vm1019, %v1324
    %1357 = vst.msk [vmem:[%s6 + $0x70] sm:$0xff] %vm1019, %v1325
    %1358 = vst.msk [vmem:[%s6 + $0x78] sm:$0xff] %vm1019, %v1326
    %1359 = vst.msk [vmem:[%s6 + $0x80] sm:$0xff] %vm1019, %v1327
    %1360 = vst.msk [vmem:[%s6 + $0x88] sm:$0xff] %vm1019, %v1328
    %1361 = vst.msk [vmem:[%s6 + $0x90] sm:$0xff] %vm1019, %v1329
    %1362 = vst.msk [vmem:[%s6 + $0x98] sm:$0xff] %vm1019, %v1330
    %1363 = vst.msk [vmem:[%s6 + $0xa0] sm:$0xff] %vm1019, %v1331
    %1364 = vst.msk [vmem:[%s6 + $0xa8] sm:$0xff] %vm1019, %v1332
    %1365 = vst.msk [vmem:[%s6 + $0xb0] sm:$0xff] %vm1019, %v1333
    %1366 = vst.msk [vmem:[%s6 + $0xb8] sm:$0xff] %vm1019, %v1334
    %1367 = vst.msk [vmem:[%s6 + $0xc0] sm:$0xff] %vm1019, %v1335
    %1368 = vst.msk [vmem:[%s6 + $0xc8] sm:$0xff] %vm1019, %v1336
    %1369 = vst.msk [vmem:[%s6 + $0xd0] sm:$0xff] %vm1019, %v1337
    %1370 = vst.msk [vmem:[%s6 + $0xd8] sm:$0xff] %vm1019, %v1338
    %1371 = vst.msk [vmem:[%s6 + $0xe0] sm:$0xff] %vm1019, %v1339
    %1372 = vst.msk [vmem:[%s6 + $0xe8] sm:$0xff] %vm1019, %v1340
    %1373 = vst.msk [vmem:[%s6 + $0xf0] sm:$0xff] %vm1019, %v1341
    %1374 = vst.msk [vmem:[%s6 + $0xf8] sm:$0xff] %vm1019, %v1342
  $region25: #{sepconv4d_forward.4} parent=0 // pred_fallthru
    _
  // Predicated region
  $region26: #{sepconv4d_forward.4} parent=0 // pred_check
    _
  $region27: #{sepconv4d_forward.4} parent=0 // pred_check_branch
    %1376 = sbr.rel (0) target = $region29
  $region28: #{sepconv4d_forward.4} parent=0 // pred_region
    _
  $region29: #{sepconv4d_forward.4} parent=0 // pred_fallthru
    _
  // Predicated region
  $region30: #{sepconv4d_forward.4} parent=0 // pred_check
    _
  $region31: #{sepconv4d_forward.4} parent=0 // pred_check_branch
    %1378 = sbr.rel (0) target = $region33
  $region32: #{sepconv4d_forward.4} parent=0 // pred_region
    _
  $region33: #{sepconv4d_forward.4} parent=0 // pred_fallthru
    _
  // Predicated region
  $region34: #{sepconv4d_forward.4} parent=0 // pred_check
    _
  $region35: #{sepconv4d_forward.4} parent=0 // pred_check_branch
    %1380 = sbr.rel (0) target = $region37
  $region36: #{sepconv4d_forward.4} parent=0 // pred_region
    _
  $region37: #{sepconv4d_forward.4} parent=0 // pred_fallthru
    _
  // Predicated region
  $region38: #{sepconv4d_forward.4} parent=0 // pred_check
    _
  $region39: #{sepconv4d_forward.4} parent=0 // pred_check_branch
    %1382 = sbr.rel (0) target = $region41
  $region40: #{sepconv4d_forward.4} parent=0 // pred_region
    _
  $region41: #{sepconv4d_forward.4} parent=0 // pred_fallthru
    _
  // Predicated region
  $region42: #{sepconv4d_forward.4} parent=0 // pred_check
    _
  $region43: #{sepconv4d_forward.4} parent=0 // pred_check_branch
    %1384 = sbr.rel (0) target = $region45
  $region44: #{sepconv4d_forward.4} parent=0 // pred_region
    _
  $region45: #{sepconv4d_forward.4} parent=0 // pred_fallthru
    _
  // Predicated region
  $region46: #{sepconv4d_forward.4} parent=0 // pred_check
    _
  $region47: #{sepconv4d_forward.4} parent=0 // pred_check_branch
    %1386 = sbr.rel (0) target = $region49
  $region48: #{sepconv4d_forward.4} parent=0 // pred_region
    _
  $region49: #{sepconv4d_forward.4} parent=0 // pred_fallthru
    _

// kernel: sepconv4d_forward.5
$region0: #{sepconv4d_forward.5}
  #allocation0 [shape = 'u32[]', space=smem, size = 0x4, offset = 0x4, fixed_abs, tag = 'smem constant byte address 0x4 - core index']
  #allocation1 [shape = 'u32[72,128]{1,0:T(1,128)}', space=vmem, size = 0x9000, scoped, tag = 'internal scratch']
  #allocation2 [shape = 'f32[256,1]{1,0:T(8,128)}', space=vmem, size = 0x20000, scoped, tag = 'scratch operand']
  #allocation3 [shape = 'f32[256,1]{1,0:T(8,128)}', space=vmem, size = 0x20000, scoped, tag = 'scratch operand']
  %s0 = inlined_call_operand.vmem [shape: f32[256,128], index: 0, kind: input, shape index: {}]
  %s1 = inlined_call_operand.vmem [shape: f32[256,256], index: 1, kind: input, shape index: {}]
  %s2 = inlined_call_operand.vmem [shape: f32[256,1], index: 2, kind: input, shape index: {}]
  %s3 = inlined_call_operand.vmem [shape: f32[256,1], index: 3, kind: input, shape index: {}]
  %s4 = inlined_call_operand.vmem [shape: f32[256,128], index: 4, kind: output, shape index: {0}]
  %s5 = inlined_call_operand.vmem [shape: f32[256,1], index: 5, kind: output, shape index: {1}]
  %s6 = inlined_call_operand.vmem [shape: f32[256,1], index: 6, kind: output, shape index: {2}]
  %7 = xla_tuple %s4, %s5, %s6
  %s8 = sld [smem:[#allocation0]]
  $region50: #{sepconv4d_forward.5} parent=0
    _
  %s10 = ssub.s32 1, %s8
  %s11 = scalar_select 0, %s10, %s8
  // Predicated region
  $region2: #{sepconv4d_forward.5} parent=0 // pred_check
    _
  $region3: #{sepconv4d_forward.5} parent=0 // pred_check_branch
    %13 = sbr.rel (0) target = $region5
  $region4: #{sepconv4d_forward.5} parent=0 // pred_region
    _
  $region5: #{sepconv4d_forward.5} parent=0 // pred_fallthru
    _
  // Predicated region
  $region6: #{sepconv4d_forward.5} parent=0 // pred_check
    _
  $region7: #{sepconv4d_forward.5} parent=0 // pred_check_branch
    %15 = sbr.rel (0) target = $region9
  $region8: #{sepconv4d_forward.5} parent=0 // pred_region
    _
  $region9: #{sepconv4d_forward.5} parent=0 // pred_fallthru
    _
  // Predicated region
  $region10: #{sepconv4d_forward.5} parent=0 // pred_check
    _
  $region11: #{sepconv4d_forward.5} parent=0 // pred_check_branch
    %17 = sbr.rel (0) target = $region13
  $region12: #{sepconv4d_forward.5} parent=0 // pred_region
    _
  $region13: #{sepconv4d_forward.5} parent=0 // pred_fallthru
    _
  // Predicated region
  $region14: #{sepconv4d_forward.5} parent=0 // pred_check
    _
  $region15: #{sepconv4d_forward.5} parent=0 // pred_check_branch
    %19 = sbr.rel (0) target = $region17
  $region16: #{sepconv4d_forward.5} parent=0 // pred_region
    _
  $region17: #{sepconv4d_forward.5} parent=0 // pred_fallthru
    _
  %v20 = vld [vmem:[%s0] sm:$0xff]
  %v21 = vld [vmem:[%s0 + $0x8] sm:$0xff]
  %v22 = vld [vmem:[%s0 + $0x10] sm:$0xff]
  %v23 = vld [vmem:[%s0 + $0x18] sm:$0xff]
  %v24 = vld [vmem:[%s0 + $0x20] sm:$0xff]
  %v25 = vld [vmem:[%s0 + $0x28] sm:$0xff]
  %v26 = vld [vmem:[%s0 + $0x30] sm:$0xff]
  %v27 = vld [vmem:[%s0 + $0x38] sm:$0xff]
  %v28 = vld [vmem:[%s0 + $0x40] sm:$0xff]
  %v29 = vld [vmem:[%s0 + $0x48] sm:$0xff]
  %v30 = vld [vmem:[%s0 + $0x50] sm:$0xff]
  %v31 = vld [vmem:[%s0 + $0x58] sm:$0xff]
  %v32 = vld [vmem:[%s0 + $0x60] sm:$0xff]
  %v33 = vld [vmem:[%s0 + $0x68] sm:$0xff]
  %v34 = vld [vmem:[%s0 + $0x70] sm:$0xff]
  %v35 = vld [vmem:[%s0 + $0x78] sm:$0xff]
  %v36 = vld [vmem:[%s0 + $0x80] sm:$0xff]
  %v37 = vld [vmem:[%s0 + $0x88] sm:$0xff]
  %v38 = vld [vmem:[%s0 + $0x90] sm:$0xff]
  %v39 = vld [vmem:[%s0 + $0x98] sm:$0xff]
  %v40 = vld [vmem:[%s0 + $0xa0] sm:$0xff]
  %v41 = vld [vmem:[%s0 + $0xa8] sm:$0xff]
  %v42 = vld [vmem:[%s0 + $0xb0] sm:$0xff]
  %v43 = vld [vmem:[%s0 + $0xb8] sm:$0xff]
  %v44 = vld [vmem:[%s0 + $0xc0] sm:$0xff]
  %v45 = vld [vmem:[%s0 + $0xc8] sm:$0xff]
  %v46 = vld [vmem:[%s0 + $0xd0] sm:$0xff]
  %v47 = vld [vmem:[%s0 + $0xd8] sm:$0xff]
  %v48 = vld [vmem:[%s0 + $0xe0] sm:$0xff]
  %v49 = vld [vmem:[%s0 + $0xe8] sm:$0xff]
  %v50 = vld [vmem:[%s0 + $0xf0] sm:$0xff]
  %v51 = vld [vmem:[%s0 + $0xf8] sm:$0xff]
  %v52 = vld [vmem:[%s2] sm:$0xff]
  %v53 = vld [vmem:[%s2 + $0x8] sm:$0xff]
  %v54 = vld [vmem:[%s2 + $0x10] sm:$0xff]
  %v55 = vld [vmem:[%s2 + $0x18] sm:$0xff]
  %v56 = vld [vmem:[%s2 + $0x20] sm:$0xff]
  %v57 = vld [vmem:[%s2 + $0x28] sm:$0xff]
  %v58 = vld [vmem:[%s2 + $0x30] sm:$0xff]
  %v59 = vld [vmem:[%s2 + $0x38] sm:$0xff]
  %v60 = vld [vmem:[%s2 + $0x40] sm:$0xff]
  %v61 = vld [vmem:[%s2 + $0x48] sm:$0xff]
  %v62 = vld [vmem:[%s2 + $0x50] sm:$0xff]
  %v63 = vld [vmem:[%s2 + $0x58] sm:$0xff]
  %v64 = vld [vmem:[%s2 + $0x60] sm:$0xff]
  %v65 = vld [vmem:[%s2 + $0x68] sm:$0xff]
  %v66 = vld [vmem:[%s2 + $0x70] sm:$0xff]
  %v67 = vld [vmem:[%s2 + $0x78] sm:$0xff]
  %v68 = vld [vmem:[%s2 + $0x80] sm:$0xff]
  %v69 = vld [vmem:[%s2 + $0x88] sm:$0xff]
  %v70 = vld [vmem:[%s2 + $0x90] sm:$0xff]
  %v71 = vld [vmem:[%s2 + $0x98] sm:$0xff]
  %v72 = vld [vmem:[%s2 + $0xa0] sm:$0xff]
  %v73 = vld [vmem:[%s2 + $0xa8] sm:$0xff]
  %v74 = vld [vmem:[%s2 + $0xb0] sm:$0xff]
  %v75 = vld [vmem:[%s2 + $0xb8] sm:$0xff]
  %v76 = vld [vmem:[%s2 + $0xc0] sm:$0xff]
  %v77 = vld [vmem:[%s2 + $0xc8] sm:$0xff]
  %v78 = vld [vmem:[%s2 + $0xd0] sm:$0xff]
  %v79 = vld [vmem:[%s2 + $0xd8] sm:$0xff]
  %v80 = vld [vmem:[%s2 + $0xe0] sm:$0xff]
  %v81 = vld [vmem:[%s2 + $0xe8] sm:$0xff]
  %v82 = vld [vmem:[%s2 + $0xf0] sm:$0xff]
  %v83 = vld [vmem:[%s2 + $0xf8] sm:$0xff]
  %85 = vset.pattern.permute.xlu0 0
  %86 = vperm.xlu0 %85, %v52
  %v87 = vpop.permute.xlu0 %86
  %90 = vset.pattern.permute.xlu0 0
  %91 = vperm.xlu0 %90, %v53
  %v92 = vpop.permute.xlu0 %91
  %95 = vset.pattern.permute.xlu0 0
  %96 = vperm.xlu0 %95, %v54
  %v97 = vpop.permute.xlu0 %96
  %100 = vset.pattern.permute.xlu0 0
  %101 = vperm.xlu0 %100, %v55
  %v102 = vpop.permute.xlu0 %101
  %105 = vset.pattern.permute.xlu0 0
  %106 = vperm.xlu0 %105, %v56
  %v107 = vpop.permute.xlu0 %106
  %110 = vset.pattern.permute.xlu0 0
  %111 = vperm.xlu0 %110, %v57
  %v112 = vpop.permute.xlu0 %111
  %115 = vset.pattern.permute.xlu0 0
  %116 = vperm.xlu0 %115, %v58
  %v117 = vpop.permute.xlu0 %116
  %120 = vset.pattern.permute.xlu0 0
  %121 = vperm.xlu0 %120, %v59
  %v122 = vpop.permute.xlu0 %121
  %125 = vset.pattern.permute.xlu0 0
  %126 = vperm.xlu0 %125, %v60
  %v127 = vpop.permute.xlu0 %126
  %130 = vset.pattern.permute.xlu0 0
  %131 = vperm.xlu0 %130, %v61
  %v132 = vpop.permute.xlu0 %131
  %135 = vset.pattern.permute.xlu0 0
  %136 = vperm.xlu0 %135, %v62
  %v137 = vpop.permute.xlu0 %136
  %140 = vset.pattern.permute.xlu0 0
  %141 = vperm.xlu0 %140, %v63
  %v142 = vpop.permute.xlu0 %141
  %145 = vset.pattern.permute.xlu0 0
  %146 = vperm.xlu0 %145, %v64
  %v147 = vpop.permute.xlu0 %146
  %150 = vset.pattern.permute.xlu0 0
  %151 = vperm.xlu0 %150, %v65
  %v152 = vpop.permute.xlu0 %151
  %155 = vset.pattern.permute.xlu0 0
  %156 = vperm.xlu0 %155, %v66
  %v157 = vpop.permute.xlu0 %156
  %160 = vset.pattern.permute.xlu0 0
  %161 = vperm.xlu0 %160, %v67
  %v162 = vpop.permute.xlu0 %161
  %165 = vset.pattern.permute.xlu0 0
  %166 = vperm.xlu0 %165, %v68
  %v167 = vpop.permute.xlu0 %166
  %170 = vset.pattern.permute.xlu0 0
  %171 = vperm.xlu0 %170, %v69
  %v172 = vpop.permute.xlu0 %171
  %175 = vset.pattern.permute.xlu0 0
  %176 = vperm.xlu0 %175, %v70
  %v177 = vpop.permute.xlu0 %176
  %180 = vset.pattern.permute.xlu0 0
  %181 = vperm.xlu0 %180, %v71
  %v182 = vpop.permute.xlu0 %181
  %185 = vset.pattern.permute.xlu0 0
  %186 = vperm.xlu0 %185, %v72
  %v187 = vpop.permute.xlu0 %186
  %190 = vset.pattern.permute.xlu0 0
  %191 = vperm.xlu0 %190, %v73
  %v192 = vpop.permute.xlu0 %191
  %195 = vset.pattern.permute.xlu0 0
  %196 = vperm.xlu0 %195, %v74
  %v197 = vpop.permute.xlu0 %196
  %200 = vset.pattern.permute.xlu0 0
  %201 = vperm.xlu0 %200, %v75
  %v202 = vpop.permute.xlu0 %201
  %205 = vset.pattern.permute.xlu0 0
  %206 = vperm.xlu0 %205, %v76
  %v207 = vpop.permute.xlu0 %206
  %210 = vset.pattern.permute.xlu0 0
  %211 = vperm.xlu0 %210, %v77
  %v212 = vpop.permute.xlu0 %211
  %215 = vset.pattern.permute.xlu0 0
  %216 = vperm.xlu0 %215, %v78
  %v217 = vpop.permute.xlu0 %216
  %220 = vset.pattern.permute.xlu0 0
  %221 = vperm.xlu0 %220, %v79
  %v222 = vpop.permute.xlu0 %221
  %225 = vset.pattern.permute.xlu0 0
  %226 = vperm.xlu0 %225, %v80
  %v227 = vpop.permute.xlu0 %226
  %230 = vset.pattern.permute.xlu0 0
  %231 = vperm.xlu0 %230, %v81
  %v232 = vpop.permute.xlu0 %231
  %235 = vset.pattern.permute.xlu0 0
  %236 = vperm.xlu0 %235, %v82
  %v237 = vpop.permute.xlu0 %236
  %240 = vset.pattern.permute.xlu0 0
  %241 = vperm.xlu0 %240, %v83
  %v242 = vpop.permute.xlu0 %241
  %v244 = vmul.f32 %v20, %v87
  %v245 = vmul.f32 %v21, %v92
  %v246 = vmul.f32 %v22, %v97
  %v247 = vmul.f32 %v23, %v102
  %v248 = vmul.f32 %v24, %v107
  %v249 = vmul.f32 %v25, %v112
  %v250 = vmul.f32 %v26, %v117
  %v251 = vmul.f32 %v27, %v122
  %v252 = vmul.f32 %v28, %v127
  %v253 = vmul.f32 %v29, %v132
  %v254 = vmul.f32 %v30, %v137
  %v255 = vmul.f32 %v31, %v142
  %v256 = vmul.f32 %v32, %v147
  %v257 = vmul.f32 %v33, %v152
  %v258 = vmul.f32 %v34, %v157
  %v259 = vmul.f32 %v35, %v162
  %v260 = vmul.f32 %v36, %v167
  %v261 = vmul.f32 %v37, %v172
  %v262 = vmul.f32 %v38, %v177
  %v263 = vmul.f32 %v39, %v182
  %v264 = vmul.f32 %v40, %v187
  %v265 = vmul.f32 %v41, %v192
  %v266 = vmul.f32 %v42, %v197
  %v267 = vmul.f32 %v43, %v202
  %v268 = vmul.f32 %v44, %v207
  %v269 = vmul.f32 %v45, %v212
  %v270 = vmul.f32 %v46, %v217
  %v271 = vmul.f32 %v47, %v222
  %v272 = vmul.f32 %v48, %v227
  %v273 = vmul.f32 %v49, %v232
  %v274 = vmul.f32 %v50, %v237
  %v275 = vmul.f32 %v51, %v242
  %v276 = vld [vmem:[%s3] sm:$0xff]
  %v277 = vld [vmem:[%s3 + $0x8] sm:$0xff]
  %v278 = vld [vmem:[%s3 + $0x10] sm:$0xff]
  %v279 = vld [vmem:[%s3 + $0x18] sm:$0xff]
  %v280 = vld [vmem:[%s3 + $0x20] sm:$0xff]
  %v281 = vld [vmem:[%s3 + $0x28] sm:$0xff]
  %v282 = vld [vmem:[%s3 + $0x30] sm:$0xff]
  %v283 = vld [vmem:[%s3 + $0x38] sm:$0xff]
  %v284 = vld [vmem:[%s3 + $0x40] sm:$0xff]
  %v285 = vld [vmem:[%s3 + $0x48] sm:$0xff]
  %v286 = vld [vmem:[%s3 + $0x50] sm:$0xff]
  %v287 = vld [vmem:[%s3 + $0x58] sm:$0xff]
  %v288 = vld [vmem:[%s3 + $0x60] sm:$0xff]
  %v289 = vld [vmem:[%s3 + $0x68] sm:$0xff]
  %v290 = vld [vmem:[%s3 + $0x70] sm:$0xff]
  %v291 = vld [vmem:[%s3 + $0x78] sm:$0xff]
  %v292 = vld [vmem:[%s3 + $0x80] sm:$0xff]
  %v293 = vld [vmem:[%s3 + $0x88] sm:$0xff]
  %v294 = vld [vmem:[%s3 + $0x90] sm:$0xff]
  %v295 = vld [vmem:[%s3 + $0x98] sm:$0xff]
  %v296 = vld [vmem:[%s3 + $0xa0] sm:$0xff]
  %v297 = vld [vmem:[%s3 + $0xa8] sm:$0xff]
  %v298 = vld [vmem:[%s3 + $0xb0] sm:$0xff]
  %v299 = vld [vmem:[%s3 + $0xb8] sm:$0xff]
  %v300 = vld [vmem:[%s3 + $0xc0] sm:$0xff]
  %v301 = vld [vmem:[%s3 + $0xc8] sm:$0xff]
  %v302 = vld [vmem:[%s3 + $0xd0] sm:$0xff]
  %v303 = vld [vmem:[%s3 + $0xd8] sm:$0xff]
  %v304 = vld [vmem:[%s3 + $0xe0] sm:$0xff]
  %v305 = vld [vmem:[%s3 + $0xe8] sm:$0xff]
  %v306 = vld [vmem:[%s3 + $0xf0] sm:$0xff]
  %v307 = vld [vmem:[%s3 + $0xf8] sm:$0xff]
  %309 = vset.pattern.permute.xlu0 0
  %310 = vperm.xlu0 %309, %v276
  %v311 = vpop.permute.xlu0 %310
  %314 = vset.pattern.permute.xlu0 0
  %315 = vperm.xlu0 %314, %v277
  %v316 = vpop.permute.xlu0 %315
  %319 = vset.pattern.permute.xlu0 0
  %320 = vperm.xlu0 %319, %v278
  %v321 = vpop.permute.xlu0 %320
  %324 = vset.pattern.permute.xlu0 0
  %325 = vperm.xlu0 %324, %v279
  %v326 = vpop.permute.xlu0 %325
  %329 = vset.pattern.permute.xlu0 0
  %330 = vperm.xlu0 %329, %v280
  %v331 = vpop.permute.xlu0 %330
  %334 = vset.pattern.permute.xlu0 0
  %335 = vperm.xlu0 %334, %v281
  %v336 = vpop.permute.xlu0 %335
  %339 = vset.pattern.permute.xlu0 0
  %340 = vperm.xlu0 %339, %v282
  %v341 = vpop.permute.xlu0 %340
  %344 = vset.pattern.permute.xlu0 0
  %345 = vperm.xlu0 %344, %v283
  %v346 = vpop.permute.xlu0 %345
  %349 = vset.pattern.permute.xlu0 0
  %350 = vperm.xlu0 %349, %v284
  %v351 = vpop.permute.xlu0 %350
  %354 = vset.pattern.permute.xlu0 0
  %355 = vperm.xlu0 %354, %v285
  %v356 = vpop.permute.xlu0 %355
  %359 = vset.pattern.permute.xlu0 0
  %360 = vperm.xlu0 %359, %v286
  %v361 = vpop.permute.xlu0 %360
  %364 = vset.pattern.permute.xlu0 0
  %365 = vperm.xlu0 %364, %v287
  %v366 = vpop.permute.xlu0 %365
  %369 = vset.pattern.permute.xlu0 0
  %370 = vperm.xlu0 %369, %v288
  %v371 = vpop.permute.xlu0 %370
  %374 = vset.pattern.permute.xlu0 0
  %375 = vperm.xlu0 %374, %v289
  %v376 = vpop.permute.xlu0 %375
  %379 = vset.pattern.permute.xlu0 0
  %380 = vperm.xlu0 %379, %v290
  %v381 = vpop.permute.xlu0 %380
  %384 = vset.pattern.permute.xlu0 0
  %385 = vperm.xlu0 %384, %v291
  %v386 = vpop.permute.xlu0 %385
  %389 = vset.pattern.permute.xlu0 0
  %390 = vperm.xlu0 %389, %v292
  %v391 = vpop.permute.xlu0 %390
  %394 = vset.pattern.permute.xlu0 0
  %395 = vperm.xlu0 %394, %v293
  %v396 = vpop.permute.xlu0 %395
  %399 = vset.pattern.permute.xlu0 0
  %400 = vperm.xlu0 %399, %v294
  %v401 = vpop.permute.xlu0 %400
  %404 = vset.pattern.permute.xlu0 0
  %405 = vperm.xlu0 %404, %v295
  %v406 = vpop.permute.xlu0 %405
  %409 = vset.pattern.permute.xlu0 0
  %410 = vperm.xlu0 %409, %v296
  %v411 = vpop.permute.xlu0 %410
  %414 = vset.pattern.permute.xlu0 0
  %415 = vperm.xlu0 %414, %v297
  %v416 = vpop.permute.xlu0 %415
  %419 = vset.pattern.permute.xlu0 0
  %420 = vperm.xlu0 %419, %v298
  %v421 = vpop.permute.xlu0 %420
  %424 = vset.pattern.permute.xlu0 0
  %425 = vperm.xlu0 %424, %v299
  %v426 = vpop.permute.xlu0 %425
  %429 = vset.pattern.permute.xlu0 0
  %430 = vperm.xlu0 %429, %v300
  %v431 = vpop.permute.xlu0 %430
  %434 = vset.pattern.permute.xlu0 0
  %435 = vperm.xlu0 %434, %v301
  %v436 = vpop.permute.xlu0 %435
  %439 = vset.pattern.permute.xlu0 0
  %440 = vperm.xlu0 %439, %v302
  %v441 = vpop.permute.xlu0 %440
  %444 = vset.pattern.permute.xlu0 0
  %445 = vperm.xlu0 %444, %v303
  %v446 = vpop.permute.xlu0 %445
  %449 = vset.pattern.permute.xlu0 0
  %450 = vperm.xlu0 %449, %v304
  %v451 = vpop.permute.xlu0 %450
  %454 = vset.pattern.permute.xlu0 0
  %455 = vperm.xlu0 %454, %v305
  %v456 = vpop.permute.xlu0 %455
  %459 = vset.pattern.permute.xlu0 0
  %460 = vperm.xlu0 %459, %v306
  %v461 = vpop.permute.xlu0 %460
  %464 = vset.pattern.permute.xlu0 0
  %465 = vperm.xlu0 %464, %v307
  %v466 = vpop.permute.xlu0 %465
  %v468 = vadd.f32 %v244, %v311
  %v469 = vadd.f32 %v245, %v316
  %v470 = vadd.f32 %v246, %v321
  %v471 = vadd.f32 %v247, %v326
  %v472 = vadd.f32 %v248, %v331
  %v473 = vadd.f32 %v249, %v336
  %v474 = vadd.f32 %v250, %v341
  %v475 = vadd.f32 %v251, %v346
  %v476 = vadd.f32 %v252, %v351
  %v477 = vadd.f32 %v253, %v356
  %v478 = vadd.f32 %v254, %v361
  %v479 = vadd.f32 %v255, %v366
  %v480 = vadd.f32 %v256, %v371
  %v481 = vadd.f32 %v257, %v376
  %v482 = vadd.f32 %v258, %v381
  %v483 = vadd.f32 %v259, %v386
  %v484 = vadd.f32 %v260, %v391
  %v485 = vadd.f32 %v261, %v396
  %v486 = vadd.f32 %v262, %v401
  %v487 = vadd.f32 %v263, %v406
  %v488 = vadd.f32 %v264, %v411
  %v489 = vadd.f32 %v265, %v416
  %v490 = vadd.f32 %v266, %v421
  %v491 = vadd.f32 %v267, %v426
  %v492 = vadd.f32 %v268, %v431
  %v493 = vadd.f32 %v269, %v436
  %v494 = vadd.f32 %v270, %v441
  %v495 = vadd.f32 %v271, %v446
  %v496 = vadd.f32 %v272, %v451
  %v497 = vadd.f32 %v273, %v456
  %v498 = vadd.f32 %v274, %v461
  %v499 = vadd.f32 %v275, %v466
  %v500 = vmax.f32 %v468, 0.0
  %v501 = vmax.f32 %v469, 0.0
  %v502 = vmax.f32 %v470, 0.0
  %v503 = vmax.f32 %v471, 0.0
  %v504 = vmax.f32 %v472, 0.0
  %v505 = vmax.f32 %v473, 0.0
  %v506 = vmax.f32 %v474, 0.0
  %v507 = vmax.f32 %v475, 0.0
  %v508 = vmax.f32 %v476, 0.0
  %v509 = vmax.f32 %v477, 0.0
  %v510 = vmax.f32 %v478, 0.0
  %v511 = vmax.f32 %v479, 0.0
  %v512 = vmax.f32 %v480, 0.0
  %v513 = vmax.f32 %v481, 0.0
  %v514 = vmax.f32 %v482, 0.0
  %v515 = vmax.f32 %v483, 0.0
  %v516 = vmax.f32 %v484, 0.0
  %v517 = vmax.f32 %v485, 0.0
  %v518 = vmax.f32 %v486, 0.0
  %v519 = vmax.f32 %v487, 0.0
  %v520 = vmax.f32 %v488, 0.0
  %v521 = vmax.f32 %v489, 0.0
  %v522 = vmax.f32 %v490, 0.0
  %v523 = vmax.f32 %v491, 0.0
  %v524 = vmax.f32 %v492, 0.0
  %v525 = vmax.f32 %v493, 0.0
  %v526 = vmax.f32 %v494, 0.0
  %v527 = vmax.f32 %v495, 0.0
  %v528 = vmax.f32 %v496, 0.0
  %v529 = vmax.f32 %v497, 0.0
  %v530 = vmax.f32 %v498, 0.0
  %v531 = vmax.f32 %v499, 0.0
  %v532 = vld [vmem:[%s1] sm:$0xff]
  %v533 = vld [vmem:[%s1 + $0x8] sm:$0xff]
  %v534 = vld [vmem:[%s1 + $0x10] sm:$0xff]
  %v535 = vld [vmem:[%s1 + $0x18] sm:$0xff]
  %v536 = vld [vmem:[%s1 + $0x20] sm:$0xff]
  %v537 = vld [vmem:[%s1 + $0x28] sm:$0xff]
  %v538 = vld [vmem:[%s1 + $0x30] sm:$0xff]
  %v539 = vld [vmem:[%s1 + $0x38] sm:$0xff]
  %v540 = vld [vmem:[%s1 + $0x40] sm:$0xff]
  %v541 = vld [vmem:[%s1 + $0x48] sm:$0xff]
  %v542 = vld [vmem:[%s1 + $0x50] sm:$0xff]
  %v543 = vld [vmem:[%s1 + $0x58] sm:$0xff]
  %v544 = vld [vmem:[%s1 + $0x60] sm:$0xff]
  %v545 = vld [vmem:[%s1 + $0x68] sm:$0xff]
  %v546 = vld [vmem:[%s1 + $0x70] sm:$0xff]
  %v547 = vld [vmem:[%s1 + $0x78] sm:$0xff]
  %v548 = vld [vmem:[%s1 + $0x80] sm:$0xff]
  %v549 = vld [vmem:[%s1 + $0x88] sm:$0xff]
  %v550 = vld [vmem:[%s1 + $0x90] sm:$0xff]
  %v551 = vld [vmem:[%s1 + $0x98] sm:$0xff]
  %v552 = vld [vmem:[%s1 + $0xa0] sm:$0xff]
  %v553 = vld [vmem:[%s1 + $0xa8] sm:$0xff]
  %v554 = vld [vmem:[%s1 + $0xb0] sm:$0xff]
  %v555 = vld [vmem:[%s1 + $0xb8] sm:$0xff]
  %v556 = vld [vmem:[%s1 + $0xc0] sm:$0xff]
  %v557 = vld [vmem:[%s1 + $0xc8] sm:$0xff]
  %v558 = vld [vmem:[%s1 + $0xd0] sm:$0xff]
  %v559 = vld [vmem:[%s1 + $0xd8] sm:$0xff]
  %v560 = vld [vmem:[%s1 + $0xe0] sm:$0xff]
  %v561 = vld [vmem:[%s1 + $0xe8] sm:$0xff]
  %v562 = vld [vmem:[%s1 + $0xf0] sm:$0xff]
  %v563 = vld [vmem:[%s1 + $0xf8] sm:$0xff]
  %v564 = vld [vmem:[%s1 + $0x100] sm:$0xff]
  %v565 = vld [vmem:[%s1 + $0x108] sm:$0xff]
  %v566 = vld [vmem:[%s1 + $0x110] sm:$0xff]
  %v567 = vld [vmem:[%s1 + $0x118] sm:$0xff]
  %v568 = vld [vmem:[%s1 + $0x120] sm:$0xff]
  %v569 = vld [vmem:[%s1 + $0x128] sm:$0xff]
  %v570 = vld [vmem:[%s1 + $0x130] sm:$0xff]
  %v571 = vld [vmem:[%s1 + $0x138] sm:$0xff]
  %v572 = vld [vmem:[%s1 + $0x140] sm:$0xff]
  %v573 = vld [vmem:[%s1 + $0x148] sm:$0xff]
  %v574 = vld [vmem:[%s1 + $0x150] sm:$0xff]
  %v575 = vld [vmem:[%s1 + $0x158] sm:$0xff]
  %v576 = vld [vmem:[%s1 + $0x160] sm:$0xff]
  %v577 = vld [vmem:[%s1 + $0x168] sm:$0xff]
  %v578 = vld [vmem:[%s1 + $0x170] sm:$0xff]
  %v579 = vld [vmem:[%s1 + $0x178] sm:$0xff]
  %v580 = vld [vmem:[%s1 + $0x180] sm:$0xff]
  %v581 = vld [vmem:[%s1 + $0x188] sm:$0xff]
  %v582 = vld [vmem:[%s1 + $0x190] sm:$0xff]
  %v583 = vld [vmem:[%s1 + $0x198] sm:$0xff]
  %v584 = vld [vmem:[%s1 + $0x1a0] sm:$0xff]
  %v585 = vld [vmem:[%s1 + $0x1a8] sm:$0xff]
  %v586 = vld [vmem:[%s1 + $0x1b0] sm:$0xff]
  %v587 = vld [vmem:[%s1 + $0x1b8] sm:$0xff]
  %v588 = vld [vmem:[%s1 + $0x1c0] sm:$0xff]
  %v589 = vld [vmem:[%s1 + $0x1c8] sm:$0xff]
  %v590 = vld [vmem:[%s1 + $0x1d0] sm:$0xff]
  %v591 = vld [vmem:[%s1 + $0x1d8] sm:$0xff]
  %v592 = vld [vmem:[%s1 + $0x1e0] sm:$0xff]
  %v593 = vld [vmem:[%s1 + $0x1e8] sm:$0xff]
  %v594 = vld [vmem:[%s1 + $0x1f0] sm:$0xff]
  %v595 = vld [vmem:[%s1 + $0x1f8] sm:$0xff]
  %596 = vmatpush.msra.mxu0 %v515
  %597 = vmatpush.msra.mxu0 %v514
  %598 = vmatpush.msra.mxu0 %v513
  %599 = vmatpush.msra.mxu0 %v512
  %600 = vmatpush.msra.mxu0 %v511
  %601 = vmatpush.msra.mxu0 %v510
  %602 = vmatpush.msra.mxu0 %v509
  %603 = vmatpush.msra.mxu0 %v508
  %604 = vmatpush.msra.mxu0 %v507
  %605 = vmatpush.msra.mxu0 %v506
  %606 = vmatpush.msra.mxu0 %v505
  %607 = vmatpush.msra.mxu0 %v504
  %608 = vmatpush.msra.mxu0 %v503
  %609 = vmatpush.msra.mxu0 %v502
  %610 = vmatpush.msra.mxu0 %v501
  %611 = vmatpush.msra.mxu0 %v500
  %612 = vmatmul.f32.gmra.mxu0 %v532
  %v613 = vpop.f32.mrf.mxu0
  %v614 = vadd.f32 0.0, %v613
  %615 = vmatmul.f32.gmra.mxu0 %v534
  %v616 = vpop.f32.mrf.mxu0
  %v617 = vadd.f32 0.0, %v616
  %618 = vmatmul.f32.gmra.mxu0 %v536
  %v619 = vpop.f32.mrf.mxu0
  %v620 = vadd.f32 0.0, %v619
  %621 = vmatmul.f32.gmra.mxu0 %v538
  %v622 = vpop.f32.mrf.mxu0
  %v623 = vadd.f32 0.0, %v622
  %624 = vmatmul.f32.gmra.mxu0 %v540
  %v625 = vpop.f32.mrf.mxu0
  %v626 = vadd.f32 0.0, %v625
  %627 = vmatmul.f32.gmra.mxu0 %v542
  %v628 = vpop.f32.mrf.mxu0
  %v629 = vadd.f32 0.0, %v628
  %630 = vmatmul.f32.gmra.mxu0 %v544
  %v631 = vpop.f32.mrf.mxu0
  %v632 = vadd.f32 0.0, %v631
  %633 = vmatmul.f32.gmra.mxu0 %v546
  %v634 = vpop.f32.mrf.mxu0
  %v635 = vadd.f32 0.0, %v634
  %636 = vmatmul.f32.gmra.mxu0 %v548
  %v637 = vpop.f32.mrf.mxu0
  %v638 = vadd.f32 0.0, %v637
  %639 = vmatmul.f32.gmra.mxu0 %v550
  %v640 = vpop.f32.mrf.mxu0
  %v641 = vadd.f32 0.0, %v640
  %642 = vmatmul.f32.gmra.mxu0 %v552
  %v643 = vpop.f32.mrf.mxu0
  %v644 = vadd.f32 0.0, %v643
  %645 = vmatmul.f32.gmra.mxu0 %v554
  %v646 = vpop.f32.mrf.mxu0
  %v647 = vadd.f32 0.0, %v646
  %648 = vmatmul.f32.gmra.mxu0 %v556
  %v649 = vpop.f32.mrf.mxu0
  %v650 = vadd.f32 0.0, %v649
  %651 = vmatmul.f32.gmra.mxu0 %v558
  %v652 = vpop.f32.mrf.mxu0
  %v653 = vadd.f32 0.0, %v652
  %654 = vmatmul.f32.gmra.mxu0 %v560
  %v655 = vpop.f32.mrf.mxu0
  %v656 = vadd.f32 0.0, %v655
  %657 = vmatmul.f32.gmra.mxu0 %v562
  %v658 = vpop.f32.mrf.mxu0
  %v659 = vadd.f32 0.0, %v658
  %660 = vmatmul.f32.gmra.mxu0 %v564
  %v661 = vpop.f32.mrf.mxu0
  %v662 = vadd.f32 0.0, %v661
  %663 = vmatmul.f32.gmra.mxu0 %v566
  %v664 = vpop.f32.mrf.mxu0
  %v665 = vadd.f32 0.0, %v664
  %666 = vmatmul.f32.gmra.mxu0 %v568
  %v667 = vpop.f32.mrf.mxu0
  %v668 = vadd.f32 0.0, %v667
  %669 = vmatmul.f32.gmra.mxu0 %v570
  %v670 = vpop.f32.mrf.mxu0
  %v671 = vadd.f32 0.0, %v670
  %672 = vmatmul.f32.gmra.mxu0 %v572
  %v673 = vpop.f32.mrf.mxu0
  %v674 = vadd.f32 0.0, %v673
  %675 = vmatmul.f32.gmra.mxu0 %v574
  %v676 = vpop.f32.mrf.mxu0
  %v677 = vadd.f32 0.0, %v676
  %678 = vmatmul.f32.gmra.mxu0 %v576
  %v679 = vpop.f32.mrf.mxu0
  %v680 = vadd.f32 0.0, %v679
  %681 = vmatmul.f32.gmra.mxu0 %v578
  %v682 = vpop.f32.mrf.mxu0
  %v683 = vadd.f32 0.0, %v682
  %684 = vmatmul.f32.gmra.mxu0 %v580
  %v685 = vpop.f32.mrf.mxu0
  %v686 = vadd.f32 0.0, %v685
  %687 = vmatmul.f32.gmra.mxu0 %v582
  %v688 = vpop.f32.mrf.mxu0
  %v689 = vadd.f32 0.0, %v688
  %690 = vmatmul.f32.gmra.mxu0 %v584
  %v691 = vpop.f32.mrf.mxu0
  %v692 = vadd.f32 0.0, %v691
  %693 = vmatmul.f32.gmra.mxu0 %v586
  %v694 = vpop.f32.mrf.mxu0
  %v695 = vadd.f32 0.0, %v694
  %696 = vmatmul.f32.gmra.mxu0 %v588
  %v697 = vpop.f32.mrf.mxu0
  %v698 = vadd.f32 0.0, %v697
  %699 = vmatmul.f32.gmra.mxu0 %v590
  %v700 = vpop.f32.mrf.mxu0
  %v701 = vadd.f32 0.0, %v700
  %702 = vmatmul.f32.gmra.mxu0 %v592
  %v703 = vpop.f32.mrf.mxu0
  %v704 = vadd.f32 0.0, %v703
  %705 = vmatmul.f32.gmra.mxu0 %v594
  %v706 = vpop.f32.mrf.mxu0
  %v707 = vadd.f32 0.0, %v706
  %708 = vdwg.mxu0
  %709 = vmatpush.msra.mxu0 %v531
  %710 = vmatpush.msra.mxu0 %v530
  %711 = vmatpush.msra.mxu0 %v529
  %712 = vmatpush.msra.mxu0 %v528
  %713 = vmatpush.msra.mxu0 %v527
  %714 = vmatpush.msra.mxu0 %v526
  %715 = vmatpush.msra.mxu0 %v525
  %716 = vmatpush.msra.mxu0 %v524
  %717 = vmatpush.msra.mxu0 %v523
  %718 = vmatpush.msra.mxu0 %v522
  %719 = vmatpush.msra.mxu0 %v521
  %720 = vmatpush.msra.mxu0 %v520
  %721 = vmatpush.msra.mxu0 %v519
  %722 = vmatpush.msra.mxu0 %v518
  %723 = vmatpush.msra.mxu0 %v517
  %724 = vmatpush.msra.mxu0 %v516
  %725 = vmatmul.f32.gmra.mxu0 %v533
  %v726 = vpop.f32.mrf.mxu0
  %v727 = vadd.f32 %v614, %v726
  %728 = vmatmul.f32.gmra.mxu0 %v535
  %v729 = vpop.f32.mrf.mxu0
  %v730 = vadd.f32 %v617, %v729
  %731 = vmatmul.f32.gmra.mxu0 %v537
  %v732 = vpop.f32.mrf.mxu0
  %v733 = vadd.f32 %v620, %v732
  %734 = vmatmul.f32.gmra.mxu0 %v539
  %v735 = vpop.f32.mrf.mxu0
  %v736 = vadd.f32 %v623, %v735
  %737 = vmatmul.f32.gmra.mxu0 %v541
  %v738 = vpop.f32.mrf.mxu0
  %v739 = vadd.f32 %v626, %v738
  %740 = vmatmul.f32.gmra.mxu0 %v543
  %v741 = vpop.f32.mrf.mxu0
  %v742 = vadd.f32 %v629, %v741
  %743 = vmatmul.f32.gmra.mxu0 %v545
  %v744 = vpop.f32.mrf.mxu0
  %v745 = vadd.f32 %v632, %v744
  %746 = vmatmul.f32.gmra.mxu0 %v547
  %v747 = vpop.f32.mrf.mxu0
  %v748 = vadd.f32 %v635, %v747
  %749 = vmatmul.f32.gmra.mxu0 %v549
  %v750 = vpop.f32.mrf.mxu0
  %v751 = vadd.f32 %v638, %v750
  %752 = vmatmul.f32.gmra.mxu0 %v551
  %v753 = vpop.f32.mrf.mxu0
  %v754 = vadd.f32 %v641, %v753
  %755 = vmatmul.f32.gmra.mxu0 %v553
  %v756 = vpop.f32.mrf.mxu0
  %v757 = vadd.f32 %v644, %v756
  %758 = vmatmul.f32.gmra.mxu0 %v555
  %v759 = vpop.f32.mrf.mxu0
  %v760 = vadd.f32 %v647, %v759
  %761 = vmatmul.f32.gmra.mxu0 %v557
  %v762 = vpop.f32.mrf.mxu0
  %v763 = vadd.f32 %v650, %v762
  %764 = vmatmul.f32.gmra.mxu0 %v559
  %v765 = vpop.f32.mrf.mxu0
  %v766 = vadd.f32 %v653, %v765
  %767 = vmatmul.f32.gmra.mxu0 %v561
  %v768 = vpop.f32.mrf.mxu0
  %v769 = vadd.f32 %v656, %v768
  %770 = vmatmul.f32.gmra.mxu0 %v563
  %v771 = vpop.f32.mrf.mxu0
  %v772 = vadd.f32 %v659, %v771
  %773 = vmatmul.f32.gmra.mxu0 %v565
  %v774 = vpop.f32.mrf.mxu0
  %v775 = vadd.f32 %v662, %v774
  %776 = vmatmul.f32.gmra.mxu0 %v567
  %v777 = vpop.f32.mrf.mxu0
  %v778 = vadd.f32 %v665, %v777
  %779 = vmatmul.f32.gmra.mxu0 %v569
  %v780 = vpop.f32.mrf.mxu0
  %v781 = vadd.f32 %v668, %v780
  %782 = vmatmul.f32.gmra.mxu0 %v571
  %v783 = vpop.f32.mrf.mxu0
  %v784 = vadd.f32 %v671, %v783
  %785 = vmatmul.f32.gmra.mxu0 %v573
  %v786 = vpop.f32.mrf.mxu0
  %v787 = vadd.f32 %v674, %v786
  %788 = vmatmul.f32.gmra.mxu0 %v575
  %v789 = vpop.f32.mrf.mxu0
  %v790 = vadd.f32 %v677, %v789
  %791 = vmatmul.f32.gmra.mxu0 %v577
  %v792 = vpop.f32.mrf.mxu0
  %v793 = vadd.f32 %v680, %v792
  %794 = vmatmul.f32.gmra.mxu0 %v579
  %v795 = vpop.f32.mrf.mxu0
  %v796 = vadd.f32 %v683, %v795
  %797 = vmatmul.f32.gmra.mxu0 %v581
  %v798 = vpop.f32.mrf.mxu0
  %v799 = vadd.f32 %v686, %v798
  %800 = vmatmul.f32.gmra.mxu0 %v583
  %v801 = vpop.f32.mrf.mxu0
  %v802 = vadd.f32 %v689, %v801
  %803 = vmatmul.f32.gmra.mxu0 %v585
  %v804 = vpop.f32.mrf.mxu0
  %v805 = vadd.f32 %v692, %v804
  %806 = vmatmul.f32.gmra.mxu0 %v587
  %v807 = vpop.f32.mrf.mxu0
  %v808 = vadd.f32 %v695, %v807
  %809 = vmatmul.f32.gmra.mxu0 %v589
  %v810 = vpop.f32.mrf.mxu0
  %v811 = vadd.f32 %v698, %v810
  %812 = vmatmul.f32.gmra.mxu0 %v591
  %v813 = vpop.f32.mrf.mxu0
  %v814 = vadd.f32 %v701, %v813
  %815 = vmatmul.f32.gmra.mxu0 %v593
  %v816 = vpop.f32.mrf.mxu0
  %v817 = vadd.f32 %v704, %v816
  %818 = vmatmul.f32.gmra.mxu0 %v595
  %v819 = vpop.f32.mrf.mxu0
  %v820 = vadd.f32 %v707, %v819
  %821 = vdwg.mxu0
  %822 = vst [vmem:[%s4] sm:$0xff] %v727
  %823 = vst [vmem:[%s4 + $0x8] sm:$0xff] %v730
  %824 = vst [vmem:[%s4 + $0x10] sm:$0xff] %v733
  %825 = vst [vmem:[%s4 + $0x18] sm:$0xff] %v736
  %826 = vst [vmem:[%s4 + $0x20] sm:$0xff] %v739
  %827 = vst [vmem:[%s4 + $0x28] sm:$0xff] %v742
  %828 = vst [vmem:[%s4 + $0x30] sm:$0xff] %v745
  %829 = vst [vmem:[%s4 + $0x38] sm:$0xff] %v748
  %830 = vst [vmem:[%s4 + $0x40] sm:$0xff] %v751
  %831 = vst [vmem:[%s4 + $0x48] sm:$0xff] %v754
  %832 = vst [vmem:[%s4 + $0x50] sm:$0xff] %v757
  %833 = vst [vmem:[%s4 + $0x58] sm:$0xff] %v760
  %834 = vst [vmem:[%s4 + $0x60] sm:$0xff] %v763
  %835 = vst [vmem:[%s4 + $0x68] sm:$0xff] %v766
  %836 = vst [vmem:[%s4 + $0x70] sm:$0xff] %v769
  %837 = vst [vmem:[%s4 + $0x78] sm:$0xff] %v772
  %838 = vst [vmem:[%s4 + $0x80] sm:$0xff] %v775
  %839 = vst [vmem:[%s4 + $0x88] sm:$0xff] %v778
  %840 = vst [vmem:[%s4 + $0x90] sm:$0xff] %v781
  %841 = vst [vmem:[%s4 + $0x98] sm:$0xff] %v784
  %842 = vst [vmem:[%s4 + $0xa0] sm:$0xff] %v787
  %843 = vst [vmem:[%s4 + $0xa8] sm:$0xff] %v790
  %844 = vst [vmem:[%s4 + $0xb0] sm:$0xff] %v793
  %845 = vst [vmem:[%s4 + $0xb8] sm:$0xff] %v796
  %846 = vst [vmem:[%s4 + $0xc0] sm:$0xff] %v799
  %847 = vst [vmem:[%s4 + $0xc8] sm:$0xff] %v802
  %848 = vst [vmem:[%s4 + $0xd0] sm:$0xff] %v805
  %849 = vst [vmem:[%s4 + $0xd8] sm:$0xff] %v808
  %850 = vst [vmem:[%s4 + $0xe0] sm:$0xff] %v811
  %851 = vst [vmem:[%s4 + $0xe8] sm:$0xff] %v814
  %852 = vst [vmem:[%s4 + $0xf0] sm:$0xff] %v817
  %853 = vst [vmem:[%s4 + $0xf8] sm:$0xff] %v820
  %p854 = scmp.eq.s32.totalorder 0, 0
  // Predicated region
  $region18: #{sepconv4d_forward.5} parent=0 // pred_check
    %p855 = pneg %p854
  $region19: #{sepconv4d_forward.5} parent=0 // pred_check_branch
    %857 = sbr.rel (%p855) target = $region21
  $region20: #{sepconv4d_forward.5} parent=0 // pred_region
    %vm858 = vcmask 7168
    %859 = vst.msk [vmem:[#allocation2] sm:$0xff] %vm858, 0.0
    %860 = vst.msk [vmem:[#allocation2 + $0x8] sm:$0xff] %vm858, 0.0
    %861 = vst.msk [vmem:[#allocation2 + $0x10] sm:$0xff] %vm858, 0.0
    %862 = vst.msk [vmem:[#allocation2 + $0x18] sm:$0xff] %vm858, 0.0
    %863 = vst.msk [vmem:[#allocation2 + $0x20] sm:$0xff] %vm858, 0.0
    %864 = vst.msk [vmem:[#allocation2 + $0x28] sm:$0xff] %vm858, 0.0
    %865 = vst.msk [vmem:[#allocation2 + $0x30] sm:$0xff] %vm858, 0.0
    %866 = vst.msk [vmem:[#allocation2 + $0x38] sm:$0xff] %vm858, 0.0
    %867 = vst.msk [vmem:[#allocation2 + $0x40] sm:$0xff] %vm858, 0.0
    %868 = vst.msk [vmem:[#allocation2 + $0x48] sm:$0xff] %vm858, 0.0
    %869 = vst.msk [vmem:[#allocation2 + $0x50] sm:$0xff] %vm858, 0.0
    %870 = vst.msk [vmem:[#allocation2 + $0x58] sm:$0xff] %vm858, 0.0
    %871 = vst.msk [vmem:[#allocation2 + $0x60] sm:$0xff] %vm858, 0.0
    %872 = vst.msk [vmem:[#allocation2 + $0x68] sm:$0xff] %vm858, 0.0
    %873 = vst.msk [vmem:[#allocation2 + $0x70] sm:$0xff] %vm858, 0.0
    %874 = vst.msk [vmem:[#allocation2 + $0x78] sm:$0xff] %vm858, 0.0
    %875 = vst.msk [vmem:[#allocation2 + $0x80] sm:$0xff] %vm858, 0.0
    %876 = vst.msk [vmem:[#allocation2 + $0x88] sm:$0xff] %vm858, 0.0
    %877 = vst.msk [vmem:[#allocation2 + $0x90] sm:$0xff] %vm858, 0.0
    %878 = vst.msk [vmem:[#allocation2 + $0x98] sm:$0xff] %vm858, 0.0
    %879 = vst.msk [vmem:[#allocation2 + $0xa0] sm:$0xff] %vm858, 0.0
    %880 = vst.msk [vmem:[#allocation2 + $0xa8] sm:$0xff] %vm858, 0.0
    %881 = vst.msk [vmem:[#allocation2 + $0xb0] sm:$0xff] %vm858, 0.0
    %882 = vst.msk [vmem:[#allocation2 + $0xb8] sm:$0xff] %vm858, 0.0
    %883 = vst.msk [vmem:[#allocation2 + $0xc0] sm:$0xff] %vm858, 0.0
    %884 = vst.msk [vmem:[#allocation2 + $0xc8] sm:$0xff] %vm858, 0.0
    %885 = vst.msk [vmem:[#allocation2 + $0xd0] sm:$0xff] %vm858, 0.0
    %886 = vst.msk [vmem:[#allocation2 + $0xd8] sm:$0xff] %vm858, 0.0
    %887 = vst.msk [vmem:[#allocation2 + $0xe0] sm:$0xff] %vm858, 0.0
    %888 = vst.msk [vmem:[#allocation2 + $0xe8] sm:$0xff] %vm858, 0.0
    %889 = vst.msk [vmem:[#allocation2 + $0xf0] sm:$0xff] %vm858, 0.0
    %890 = vst.msk [vmem:[#allocation2 + $0xf8] sm:$0xff] %vm858, 0.0
    %891 = vst.msk [vmem:[#allocation3] sm:$0xff] %vm858, 0.0
    %892 = vst.msk [vmem:[#allocation3 + $0x8] sm:$0xff] %vm858, 0.0
    %893 = vst.msk [vmem:[#allocation3 + $0x10] sm:$0xff] %vm858, 0.0
    %894 = vst.msk [vmem:[#allocation3 + $0x18] sm:$0xff] %vm858, 0.0
    %895 = vst.msk [vmem:[#allocation3 + $0x20] sm:$0xff] %vm858, 0.0
    %896 = vst.msk [vmem:[#allocation3 + $0x28] sm:$0xff] %vm858, 0.0
    %897 = vst.msk [vmem:[#allocation3 + $0x30] sm:$0xff] %vm858, 0.0
    %898 = vst.msk [vmem:[#allocation3 + $0x38] sm:$0xff] %vm858, 0.0
    %899 = vst.msk [vmem:[#allocation3 + $0x40] sm:$0xff] %vm858, 0.0
    %900 = vst.msk [vmem:[#allocation3 + $0x48] sm:$0xff] %vm858, 0.0
    %901 = vst.msk [vmem:[#allocation3 + $0x50] sm:$0xff] %vm858, 0.0
    %902 = vst.msk [vmem:[#allocation3 + $0x58] sm:$0xff] %vm858, 0.0
    %903 = vst.msk [vmem:[#allocation3 + $0x60] sm:$0xff] %vm858, 0.0
    %904 = vst.msk [vmem:[#allocation3 + $0x68] sm:$0xff] %vm858, 0.0
    %905 = vst.msk [vmem:[#allocation3 + $0x70] sm:$0xff] %vm858, 0.0
    %906 = vst.msk [vmem:[#allocation3 + $0x78] sm:$0xff] %vm858, 0.0
    %907 = vst.msk [vmem:[#allocation3 + $0x80] sm:$0xff] %vm858, 0.0
    %908 = vst.msk [vmem:[#allocation3 + $0x88] sm:$0xff] %vm858, 0.0
    %909 = vst.msk [vmem:[#allocation3 + $0x90] sm:$0xff] %vm858, 0.0
    %910 = vst.msk [vmem:[#allocation3 + $0x98] sm:$0xff] %vm858, 0.0
    %911 = vst.msk [vmem:[#allocation3 + $0xa0] sm:$0xff] %vm858, 0.0
    %912 = vst.msk [vmem:[#allocation3 + $0xa8] sm:$0xff] %vm858, 0.0
    %913 = vst.msk [vmem:[#allocation3 + $0xb0] sm:$0xff] %vm858, 0.0
    %914 = vst.msk [vmem:[#allocation3 + $0xb8] sm:$0xff] %vm858, 0.0
    %915 = vst.msk [vmem:[#allocation3 + $0xc0] sm:$0xff] %vm858, 0.0
    %916 = vst.msk [vmem:[#allocation3 + $0xc8] sm:$0xff] %vm858, 0.0
    %917 = vst.msk [vmem:[#allocation3 + $0xd0] sm:$0xff] %vm858, 0.0
    %918 = vst.msk [vmem:[#allocation3 + $0xd8] sm:$0xff] %vm858, 0.0
    %919 = vst.msk [vmem:[#allocation3 + $0xe0] sm:$0xff] %vm858, 0.0
    %920 = vst.msk [vmem:[#allocation3 + $0xe8] sm:$0xff] %vm858, 0.0
    %921 = vst.msk [vmem:[#allocation3 + $0xf0] sm:$0xff] %vm858, 0.0
    %922 = vst.msk [vmem:[#allocation3 + $0xf8] sm:$0xff] %vm858, 0.0
  $region21: #{sepconv4d_forward.5} parent=0 // pred_fallthru
    _
  %v923 = vld [vmem:[#allocation2] sm:$0xff]
  %v924 = vld [vmem:[#allocation2 + $0x8] sm:$0xff]
  %v925 = vld [vmem:[#allocation2 + $0x10] sm:$0xff]
  %v926 = vld [vmem:[#allocation2 + $0x18] sm:$0xff]
  %v927 = vld [vmem:[#allocation2 + $0x20] sm:$0xff]
  %v928 = vld [vmem:[#allocation2 + $0x28] sm:$0xff]
  %v929 = vld [vmem:[#allocation2 + $0x30] sm:$0xff]
  %v930 = vld [vmem:[#allocation2 + $0x38] sm:$0xff]
  %v931 = vld [vmem:[#allocation2 + $0x40] sm:$0xff]
  %v932 = vld [vmem:[#allocation2 + $0x48] sm:$0xff]
  %v933 = vld [vmem:[#allocation2 + $0x50] sm:$0xff]
  %v934 = vld [vmem:[#allocation2 + $0x58] sm:$0xff]
  %v935 = vld [vmem:[#allocation2 + $0x60] sm:$0xff]
  %v936 = vld [vmem:[#allocation2 + $0x68] sm:$0xff]
  %v937 = vld [vmem:[#allocation2 + $0x70] sm:$0xff]
  %v938 = vld [vmem:[#allocation2 + $0x78] sm:$0xff]
  %v939 = vld [vmem:[#allocation2 + $0x80] sm:$0xff]
  %v940 = vld [vmem:[#allocation2 + $0x88] sm:$0xff]
  %v941 = vld [vmem:[#allocation2 + $0x90] sm:$0xff]
  %v942 = vld [vmem:[#allocation2 + $0x98] sm:$0xff]
  %v943 = vld [vmem:[#allocation2 + $0xa0] sm:$0xff]
  %v944 = vld [vmem:[#allocation2 + $0xa8] sm:$0xff]
  %v945 = vld [vmem:[#allocation2 + $0xb0] sm:$0xff]
  %v946 = vld [vmem:[#allocation2 + $0xb8] sm:$0xff]
  %v947 = vld [vmem:[#allocation2 + $0xc0] sm:$0xff]
  %v948 = vld [vmem:[#allocation2 + $0xc8] sm:$0xff]
  %v949 = vld [vmem:[#allocation2 + $0xd0] sm:$0xff]
  %v950 = vld [vmem:[#allocation2 + $0xd8] sm:$0xff]
  %v951 = vld [vmem:[#allocation2 + $0xe0] sm:$0xff]
  %v952 = vld [vmem:[#allocation2 + $0xe8] sm:$0xff]
  %v953 = vld [vmem:[#allocation2 + $0xf0] sm:$0xff]
  %v954 = vld [vmem:[#allocation2 + $0xf8] sm:$0xff]
  %955 = vadd.xlane.f32.xlu0 %v727
  %v956 = vpop.xlane.xlu0 %955
  %957 = vadd.xlane.f32.xlu0 %v730
  %v958 = vpop.xlane.xlu0 %957
  %959 = vadd.xlane.f32.xlu0 %v733
  %v960 = vpop.xlane.xlu0 %959
  %961 = vadd.xlane.f32.xlu0 %v736
  %v962 = vpop.xlane.xlu0 %961
  %963 = vadd.xlane.f32.xlu0 %v739
  %v964 = vpop.xlane.xlu0 %963
  %965 = vadd.xlane.f32.xlu0 %v742
  %v966 = vpop.xlane.xlu0 %965
  %967 = vadd.xlane.f32.xlu0 %v745
  %v968 = vpop.xlane.xlu0 %967
  %969 = vadd.xlane.f32.xlu0 %v748
  %v970 = vpop.xlane.xlu0 %969
  %971 = vadd.xlane.f32.xlu0 %v751
  %v972 = vpop.xlane.xlu0 %971
  %973 = vadd.xlane.f32.xlu0 %v754
  %v974 = vpop.xlane.xlu0 %973
  %975 = vadd.xlane.f32.xlu0 %v757
  %v976 = vpop.xlane.xlu0 %975
  %977 = vadd.xlane.f32.xlu0 %v760
  %v978 = vpop.xlane.xlu0 %977
  %979 = vadd.xlane.f32.xlu0 %v763
  %v980 = vpop.xlane.xlu0 %979
  %981 = vadd.xlane.f32.xlu0 %v766
  %v982 = vpop.xlane.xlu0 %981
  %983 = vadd.xlane.f32.xlu0 %v769
  %v984 = vpop.xlane.xlu0 %983
  %985 = vadd.xlane.f32.xlu0 %v772
  %v986 = vpop.xlane.xlu0 %985
  %987 = vadd.xlane.f32.xlu0 %v775
  %v988 = vpop.xlane.xlu0 %987
  %989 = vadd.xlane.f32.xlu0 %v778
  %v990 = vpop.xlane.xlu0 %989
  %991 = vadd.xlane.f32.xlu0 %v781
  %v992 = vpop.xlane.xlu0 %991
  %993 = vadd.xlane.f32.xlu0 %v784
  %v994 = vpop.xlane.xlu0 %993
  %995 = vadd.xlane.f32.xlu0 %v787
  %v996 = vpop.xlane.xlu0 %995
  %997 = vadd.xlane.f32.xlu0 %v790
  %v998 = vpop.xlane.xlu0 %997
  %999 = vadd.xlane.f32.xlu0 %v793
  %v1000 = vpop.xlane.xlu0 %999
  %1001 = vadd.xlane.f32.xlu0 %v796
  %v1002 = vpop.xlane.xlu0 %1001
  %1003 = vadd.xlane.f32.xlu0 %v799
  %v1004 = vpop.xlane.xlu0 %1003
  %1005 = vadd.xlane.f32.xlu0 %v802
  %v1006 = vpop.xlane.xlu0 %1005
  %1007 = vadd.xlane.f32.xlu0 %v805
  %v1008 = vpop.xlane.xlu0 %1007
  %1009 = vadd.xlane.f32.xlu0 %v808
  %v1010 = vpop.xlane.xlu0 %1009
  %1011 = vadd.xlane.f32.xlu0 %v811
  %v1012 = vpop.xlane.xlu0 %1011
  %1013 = vadd.xlane.f32.xlu0 %v814
  %v1014 = vpop.xlane.xlu0 %1013
  %1015 = vadd.xlane.f32.xlu0 %v817
  %v1016 = vpop.xlane.xlu0 %1015
  %1017 = vadd.xlane.f32.xlu0 %v820
  %v1018 = vpop.xlane.xlu0 %1017
  %v1019 = vadd.f32 %v923, %v956
  %v1020 = vadd.f32 %v924, %v958
  %v1021 = vadd.f32 %v925, %v960
  %v1022 = vadd.f32 %v926, %v962
  %v1023 = vadd.f32 %v927, %v964
  %v1024 = vadd.f32 %v928, %v966
  %v1025 = vadd.f32 %v929, %v968
  %v1026 = vadd.f32 %v930, %v970
  %v1027 = vadd.f32 %v931, %v972
  %v1028 = vadd.f32 %v932, %v974
  %v1029 = vadd.f32 %v933, %v976
  %v1030 = vadd.f32 %v934, %v978
  %v1031 = vadd.f32 %v935, %v980
  %v1032 = vadd.f32 %v936, %v982
  %v1033 = vadd.f32 %v937, %v984
  %v1034 = vadd.f32 %v938, %v986
  %v1035 = vadd.f32 %v939, %v988
  %v1036 = vadd.f32 %v940, %v990
  %v1037 = vadd.f32 %v941, %v992
  %v1038 = vadd.f32 %v942, %v994
  %v1039 = vadd.f32 %v943, %v996
  %v1040 = vadd.f32 %v944, %v998
  %v1041 = vadd.f32 %v945, %v1000
  %v1042 = vadd.f32 %v946, %v1002
  %v1043 = vadd.f32 %v947, %v1004
  %v1044 = vadd.f32 %v948, %v1006
  %v1045 = vadd.f32 %v949, %v1008
  %v1046 = vadd.f32 %v950, %v1010
  %v1047 = vadd.f32 %v951, %v1012
  %v1048 = vadd.f32 %v952, %v1014
  %v1049 = vadd.f32 %v953, %v1016
  %v1050 = vadd.f32 %v954, %v1018
  %vm1051 = vcmask 7168
  %1052 = vst.msk [vmem:[#allocation2] sm:$0xff] %vm1051, %v1019
  %1053 = vst.msk [vmem:[#allocation2 + $0x8] sm:$0xff] %vm1051, %v1020
  %1054 = vst.msk [vmem:[#allocation2 + $0x10] sm:$0xff] %vm1051, %v1021
  %1055 = vst.msk [vmem:[#allocation2 + $0x18] sm:$0xff] %vm1051, %v1022
  %1056 = vst.msk [vmem:[#allocation2 + $0x20] sm:$0xff] %vm1051, %v1023
  %1057 = vst.msk [vmem:[#allocation2 + $0x28] sm:$0xff] %vm1051, %v1024
  %1058 = vst.msk [vmem:[#allocation2 + $0x30] sm:$0xff] %vm1051, %v1025
  %1059 = vst.msk [vmem:[#allocation2 + $0x38] sm:$0xff] %vm1051, %v1026
  %1060 = vst.msk [vmem:[#allocation2 + $0x40] sm:$0xff] %vm1051, %v1027
  %1061 = vst.msk [vmem:[#allocation2 + $0x48] sm:$0xff] %vm1051, %v1028
  %1062 = vst.msk [vmem:[#allocation2 + $0x50] sm:$0xff] %vm1051, %v1029
  %1063 = vst.msk [vmem:[#allocation2 + $0x58] sm:$0xff] %vm1051, %v1030
  %1064 = vst.msk [vmem:[#allocation2 + $0x60] sm:$0xff] %vm1051, %v1031
  %1065 = vst.msk [vmem:[#allocation2 + $0x68] sm:$0xff] %vm1051, %v1032
  %1066 = vst.msk [vmem:[#allocation2 + $0x70] sm:$0xff] %vm1051, %v1033
  %1067 = vst.msk [vmem:[#allocation2 + $0x78] sm:$0xff] %vm1051, %v1034
  %1068 = vst.msk [vmem:[#allocation2 + $0x80] sm:$0xff] %vm1051, %v1035
  %1069 = vst.msk [vmem:[#allocation2 + $0x88] sm:$0xff] %vm1051, %v1036
  %1070 = vst.msk [vmem:[#allocation2 + $0x90] sm:$0xff] %vm1051, %v1037
  %1071 = vst.msk [vmem:[#allocation2 + $0x98] sm:$0xff] %vm1051, %v1038
  %1072 = vst.msk [vmem:[#allocation2 + $0xa0] sm:$0xff] %vm1051, %v1039
  %1073 = vst.msk [vmem:[#allocation2 + $0xa8] sm:$0xff] %vm1051, %v1040
  %1074 = vst.msk [vmem:[#allocation2 + $0xb0] sm:$0xff] %vm1051, %v1041
  %1075 = vst.msk [vmem:[#allocation2 + $0xb8] sm:$0xff] %vm1051, %v1042
  %1076 = vst.msk [vmem:[#allocation2 + $0xc0] sm:$0xff] %vm1051, %v1043
  %1077 = vst.msk [vmem:[#allocation2 + $0xc8] sm:$0xff] %vm1051, %v1044
  %1078 = vst.msk [vmem:[#allocation2 + $0xd0] sm:$0xff] %vm1051, %v1045
  %1079 = vst.msk [vmem:[#allocation2 + $0xd8] sm:$0xff] %vm1051, %v1046
  %1080 = vst.msk [vmem:[#allocation2 + $0xe0] sm:$0xff] %vm1051, %v1047
  %1081 = vst.msk [vmem:[#allocation2 + $0xe8] sm:$0xff] %vm1051, %v1048
  %1082 = vst.msk [vmem:[#allocation2 + $0xf0] sm:$0xff] %vm1051, %v1049
  %1083 = vst.msk [vmem:[#allocation2 + $0xf8] sm:$0xff] %vm1051, %v1050
  %v1084 = vld [vmem:[#allocation3] sm:$0xff]
  %v1085 = vld [vmem:[#allocation3 + $0x8] sm:$0xff]
  %v1086 = vld [vmem:[#allocation3 + $0x10] sm:$0xff]
  %v1087 = vld [vmem:[#allocation3 + $0x18] sm:$0xff]
  %v1088 = vld [vmem:[#allocation3 + $0x20] sm:$0xff]
  %v1089 = vld [vmem:[#allocation3 + $0x28] sm:$0xff]
  %v1090 = vld [vmem:[#allocation3 + $0x30] sm:$0xff]
  %v1091 = vld [vmem:[#allocation3 + $0x38] sm:$0xff]
  %v1092 = vld [vmem:[#allocation3 + $0x40] sm:$0xff]
  %v1093 = vld [vmem:[#allocation3 + $0x48] sm:$0xff]
  %v1094 = vld [vmem:[#allocation3 + $0x50] sm:$0xff]
  %v1095 = vld [vmem:[#allocation3 + $0x58] sm:$0xff]
  %v1096 = vld [vmem:[#allocation3 + $0x60] sm:$0xff]
  %v1097 = vld [vmem:[#allocation3 + $0x68] sm:$0xff]
  %v1098 = vld [vmem:[#allocation3 + $0x70] sm:$0xff]
  %v1099 = vld [vmem:[#allocation3 + $0x78] sm:$0xff]
  %v1100 = vld [vmem:[#allocation3 + $0x80] sm:$0xff]
  %v1101 = vld [vmem:[#allocation3 + $0x88] sm:$0xff]
  %v1102 = vld [vmem:[#allocation3 + $0x90] sm:$0xff]
  %v1103 = vld [vmem:[#allocation3 + $0x98] sm:$0xff]
  %v1104 = vld [vmem:[#allocation3 + $0xa0] sm:$0xff]
  %v1105 = vld [vmem:[#allocation3 + $0xa8] sm:$0xff]
  %v1106 = vld [vmem:[#allocation3 + $0xb0] sm:$0xff]
  %v1107 = vld [vmem:[#allocation3 + $0xb8] sm:$0xff]
  %v1108 = vld [vmem:[#allocation3 + $0xc0] sm:$0xff]
  %v1109 = vld [vmem:[#allocation3 + $0xc8] sm:$0xff]
  %v1110 = vld [vmem:[#allocation3 + $0xd0] sm:$0xff]
  %v1111 = vld [vmem:[#allocation3 + $0xd8] sm:$0xff]
  %v1112 = vld [vmem:[#allocation3 + $0xe0] sm:$0xff]
  %v1113 = vld [vmem:[#allocation3 + $0xe8] sm:$0xff]
  %v1114 = vld [vmem:[#allocation3 + $0xf0] sm:$0xff]
  %v1115 = vld [vmem:[#allocation3 + $0xf8] sm:$0xff]
  %v1116 = vmul.f32 %v727, %v727
  %v1117 = vmul.f32 %v730, %v730
  %v1118 = vmul.f32 %v733, %v733
  %v1119 = vmul.f32 %v736, %v736
  %v1120 = vmul.f32 %v739, %v739
  %v1121 = vmul.f32 %v742, %v742
  %v1122 = vmul.f32 %v745, %v745
  %v1123 = vmul.f32 %v748, %v748
  %v1124 = vmul.f32 %v751, %v751
  %v1125 = vmul.f32 %v754, %v754
  %v1126 = vmul.f32 %v757, %v757
  %v1127 = vmul.f32 %v760, %v760
  %v1128 = vmul.f32 %v763, %v763
  %v1129 = vmul.f32 %v766, %v766
  %v1130 = vmul.f32 %v769, %v769
  %v1131 = vmul.f32 %v772, %v772
  %v1132 = vmul.f32 %v775, %v775
  %v1133 = vmul.f32 %v778, %v778
  %v1134 = vmul.f32 %v781, %v781
  %v1135 = vmul.f32 %v784, %v784
  %v1136 = vmul.f32 %v787, %v787
  %v1137 = vmul.f32 %v790, %v790
  %v1138 = vmul.f32 %v793, %v793
  %v1139 = vmul.f32 %v796, %v796
  %v1140 = vmul.f32 %v799, %v799
  %v1141 = vmul.f32 %v802, %v802
  %v1142 = vmul.f32 %v805, %v805
  %v1143 = vmul.f32 %v808, %v808
  %v1144 = vmul.f32 %v811, %v811
  %v1145 = vmul.f32 %v814, %v814
  %v1146 = vmul.f32 %v817, %v817
  %v1147 = vmul.f32 %v820, %v820
  %1148 = vadd.xlane.f32.xlu0 %v1116
  %v1149 = vpop.xlane.xlu0 %1148
  %1150 = vadd.xlane.f32.xlu0 %v1117
  %v1151 = vpop.xlane.xlu0 %1150
  %1152 = vadd.xlane.f32.xlu0 %v1118
  %v1153 = vpop.xlane.xlu0 %1152
  %1154 = vadd.xlane.f32.xlu0 %v1119
  %v1155 = vpop.xlane.xlu0 %1154
  %1156 = vadd.xlane.f32.xlu0 %v1120
  %v1157 = vpop.xlane.xlu0 %1156
  %1158 = vadd.xlane.f32.xlu0 %v1121
  %v1159 = vpop.xlane.xlu0 %1158
  %1160 = vadd.xlane.f32.xlu0 %v1122
  %v1161 = vpop.xlane.xlu0 %1160
  %1162 = vadd.xlane.f32.xlu0 %v1123
  %v1163 = vpop.xlane.xlu0 %1162
  %1164 = vadd.xlane.f32.xlu0 %v1124
  %v1165 = vpop.xlane.xlu0 %1164
  %1166 = vadd.xlane.f32.xlu0 %v1125
  %v1167 = vpop.xlane.xlu0 %1166
  %1168 = vadd.xlane.f32.xlu0 %v1126
  %v1169 = vpop.xlane.xlu0 %1168
  %1170 = vadd.xlane.f32.xlu0 %v1127
  %v1171 = vpop.xlane.xlu0 %1170
  %1172 = vadd.xlane.f32.xlu0 %v1128
  %v1173 = vpop.xlane.xlu0 %1172
  %1174 = vadd.xlane.f32.xlu0 %v1129
  %v1175 = vpop.xlane.xlu0 %1174
  %1176 = vadd.xlane.f32.xlu0 %v1130
  %v1177 = vpop.xlane.xlu0 %1176
  %1178 = vadd.xlane.f32.xlu0 %v1131
  %v1179 = vpop.xlane.xlu0 %1178
  %1180 = vadd.xlane.f32.xlu0 %v1132
  %v1181 = vpop.xlane.xlu0 %1180
  %1182 = vadd.xlane.f32.xlu0 %v1133
  %v1183 = vpop.xlane.xlu0 %1182
  %1184 = vadd.xlane.f32.xlu0 %v1134
  %v1185 = vpop.xlane.xlu0 %1184
  %1186 = vadd.xlane.f32.xlu0 %v1135
  %v1187 = vpop.xlane.xlu0 %1186
  %1188 = vadd.xlane.f32.xlu0 %v1136
  %v1189 = vpop.xlane.xlu0 %1188
  %1190 = vadd.xlane.f32.xlu0 %v1137
  %v1191 = vpop.xlane.xlu0 %1190
  %1192 = vadd.xlane.f32.xlu0 %v1138
  %v1193 = vpop.xlane.xlu0 %1192
  %1194 = vadd.xlane.f32.xlu0 %v1139
  %v1195 = vpop.xlane.xlu0 %1194
  %1196 = vadd.xlane.f32.xlu0 %v1140
  %v1197 = vpop.xlane.xlu0 %1196
  %1198 = vadd.xlane.f32.xlu0 %v1141
  %v1199 = vpop.xlane.xlu0 %1198
  %1200 = vadd.xlane.f32.xlu0 %v1142
  %v1201 = vpop.xlane.xlu0 %1200
  %1202 = vadd.xlane.f32.xlu0 %v1143
  %v1203 = vpop.xlane.xlu0 %1202
  %1204 = vadd.xlane.f32.xlu0 %v1144
  %v1205 = vpop.xlane.xlu0 %1204
  %1206 = vadd.xlane.f32.xlu0 %v1145
  %v1207 = vpop.xlane.xlu0 %1206
  %1208 = vadd.xlane.f32.xlu0 %v1146
  %v1209 = vpop.xlane.xlu0 %1208
  %1210 = vadd.xlane.f32.xlu0 %v1147
  %v1211 = vpop.xlane.xlu0 %1210
  %v1212 = vadd.f32 %v1084, %v1149
  %v1213 = vadd.f32 %v1085, %v1151
  %v1214 = vadd.f32 %v1086, %v1153
  %v1215 = vadd.f32 %v1087, %v1155
  %v1216 = vadd.f32 %v1088, %v1157
  %v1217 = vadd.f32 %v1089, %v1159
  %v1218 = vadd.f32 %v1090, %v1161
  %v1219 = vadd.f32 %v1091, %v1163
  %v1220 = vadd.f32 %v1092, %v1165
  %v1221 = vadd.f32 %v1093, %v1167
  %v1222 = vadd.f32 %v1094, %v1169
  %v1223 = vadd.f32 %v1095, %v1171
  %v1224 = vadd.f32 %v1096, %v1173
  %v1225 = vadd.f32 %v1097, %v1175
  %v1226 = vadd.f32 %v1098, %v1177
  %v1227 = vadd.f32 %v1099, %v1179
  %v1228 = vadd.f32 %v1100, %v1181
  %v1229 = vadd.f32 %v1101, %v1183
  %v1230 = vadd.f32 %v1102, %v1185
  %v1231 = vadd.f32 %v1103, %v1187
  %v1232 = vadd.f32 %v1104, %v1189
  %v1233 = vadd.f32 %v1105, %v1191
  %v1234 = vadd.f32 %v1106, %v1193
  %v1235 = vadd.f32 %v1107, %v1195
  %v1236 = vadd.f32 %v1108, %v1197
  %v1237 = vadd.f32 %v1109, %v1199
  %v1238 = vadd.f32 %v1110, %v1201
  %v1239 = vadd.f32 %v1111, %v1203
  %v1240 = vadd.f32 %v1112, %v1205
  %v1241 = vadd.f32 %v1113, %v1207
  %v1242 = vadd.f32 %v1114, %v1209
  %v1243 = vadd.f32 %v1115, %v1211
  %1244 = vst.msk [vmem:[#allocation3] sm:$0xff] %vm1051, %v1212
  %1245 = vst.msk [vmem:[#allocation3 + $0x8] sm:$0xff] %vm1051, %v1213
  %1246 = vst.msk [vmem:[#allocation3 + $0x10] sm:$0xff] %vm1051, %v1214
  %1247 = vst.msk [vmem:[#allocation3 + $0x18] sm:$0xff] %vm1051, %v1215
  %1248 = vst.msk [vmem:[#allocation3 + $0x20] sm:$0xff] %vm1051, %v1216
  %1249 = vst.msk [vmem:[#allocation3 + $0x28] sm:$0xff] %vm1051, %v1217
  %1250 = vst.msk [vmem:[#allocation3 + $0x30] sm:$0xff] %vm1051, %v1218
  %1251 = vst.msk [vmem:[#allocation3 + $0x38] sm:$0xff] %vm1051, %v1219
  %1252 = vst.msk [vmem:[#allocation3 + $0x40] sm:$0xff] %vm1051, %v1220
  %1253 = vst.msk [vmem:[#allocation3 + $0x48] sm:$0xff] %vm1051, %v1221
  %1254 = vst.msk [vmem:[#allocation3 + $0x50] sm:$0xff] %vm1051, %v1222
  %1255 = vst.msk [vmem:[#allocation3 + $0x58] sm:$0xff] %vm1051, %v1223
  %1256 = vst.msk [vmem:[#allocation3 + $0x60] sm:$0xff] %vm1051, %v1224
  %1257 = vst.msk [vmem:[#allocation3 + $0x68] sm:$0xff] %vm1051, %v1225
  %1258 = vst.msk [vmem:[#allocation3 + $0x70] sm:$0xff] %vm1051, %v1226
  %1259 = vst.msk [vmem:[#allocation3 + $0x78] sm:$0xff] %vm1051, %v1227
  %1260 = vst.msk [vmem:[#allocation3 + $0x80] sm:$0xff] %vm1051, %v1228
  %1261 = vst.msk [vmem:[#allocation3 + $0x88] sm:$0xff] %vm1051, %v1229
  %1262 = vst.msk [vmem:[#allocation3 + $0x90] sm:$0xff] %vm1051, %v1230
  %1263 = vst.msk [vmem:[#allocation3 + $0x98] sm:$0xff] %vm1051, %v1231
  %1264 = vst.msk [vmem:[#allocation3 + $0xa0] sm:$0xff] %vm1051, %v1232
  %1265 = vst.msk [vmem:[#allocation3 + $0xa8] sm:$0xff] %vm1051, %v1233
  %1266 = vst.msk [vmem:[#allocation3 + $0xb0] sm:$0xff] %vm1051, %v1234
  %1267 = vst.msk [vmem:[#allocation3 + $0xb8] sm:$0xff] %vm1051, %v1235
  %1268 = vst.msk [vmem:[#allocation3 + $0xc0] sm:$0xff] %vm1051, %v1236
  %1269 = vst.msk [vmem:[#allocation3 + $0xc8] sm:$0xff] %vm1051, %v1237
  %1270 = vst.msk [vmem:[#allocation3 + $0xd0] sm:$0xff] %vm1051, %v1238
  %1271 = vst.msk [vmem:[#allocation3 + $0xd8] sm:$0xff] %vm1051, %v1239
  %1272 = vst.msk [vmem:[#allocation3 + $0xe0] sm:$0xff] %vm1051, %v1240
  %1273 = vst.msk [vmem:[#allocation3 + $0xe8] sm:$0xff] %vm1051, %v1241
  %1274 = vst.msk [vmem:[#allocation3 + $0xf0] sm:$0xff] %vm1051, %v1242
  %1275 = vst.msk [vmem:[#allocation3 + $0xf8] sm:$0xff] %vm1051, %v1243
  // Predicated region
  $region22: #{sepconv4d_forward.5} parent=0 // pred_check
    %p1276 = pneg %p854
  $region23: #{sepconv4d_forward.5} parent=0 // pred_check_branch
    %1278 = sbr.rel (%p1276) target = $region25
  $region24: #{sepconv4d_forward.5} parent=0 // pred_region
    %v1279 = vld [vmem:[#allocation2] sm:$0xff]
    %v1280 = vld [vmem:[#allocation2 + $0x8] sm:$0xff]
    %v1281 = vld [vmem:[#allocation2 + $0x10] sm:$0xff]
    %v1282 = vld [vmem:[#allocation2 + $0x18] sm:$0xff]
    %v1283 = vld [vmem:[#allocation2 + $0x20] sm:$0xff]
    %v1284 = vld [vmem:[#allocation2 + $0x28] sm:$0xff]
    %v1285 = vld [vmem:[#allocation2 + $0x30] sm:$0xff]
    %v1286 = vld [vmem:[#allocation2 + $0x38] sm:$0xff]
    %v1287 = vld [vmem:[#allocation2 + $0x40] sm:$0xff]
    %v1288 = vld [vmem:[#allocation2 + $0x48] sm:$0xff]
    %v1289 = vld [vmem:[#allocation2 + $0x50] sm:$0xff]
    %v1290 = vld [vmem:[#allocation2 + $0x58] sm:$0xff]
    %v1291 = vld [vmem:[#allocation2 + $0x60] sm:$0xff]
    %v1292 = vld [vmem:[#allocation2 + $0x68] sm:$0xff]
    %v1293 = vld [vmem:[#allocation2 + $0x70] sm:$0xff]
    %v1294 = vld [vmem:[#allocation2 + $0x78] sm:$0xff]
    %v1295 = vld [vmem:[#allocation2 + $0x80] sm:$0xff]
    %v1296 = vld [vmem:[#allocation2 + $0x88] sm:$0xff]
    %v1297 = vld [vmem:[#allocation2 + $0x90] sm:$0xff]
    %v1298 = vld [vmem:[#allocation2 + $0x98] sm:$0xff]
    %v1299 = vld [vmem:[#allocation2 + $0xa0] sm:$0xff]
    %v1300 = vld [vmem:[#allocation2 + $0xa8] sm:$0xff]
    %v1301 = vld [vmem:[#allocation2 + $0xb0] sm:$0xff]
    %v1302 = vld [vmem:[#allocation2 + $0xb8] sm:$0xff]
    %v1303 = vld [vmem:[#allocation2 + $0xc0] sm:$0xff]
    %v1304 = vld [vmem:[#allocation2 + $0xc8] sm:$0xff]
    %v1305 = vld [vmem:[#allocation2 + $0xd0] sm:$0xff]
    %v1306 = vld [vmem:[#allocation2 + $0xd8] sm:$0xff]
    %v1307 = vld [vmem:[#allocation2 + $0xe0] sm:$0xff]
    %v1308 = vld [vmem:[#allocation2 + $0xe8] sm:$0xff]
    %v1309 = vld [vmem:[#allocation2 + $0xf0] sm:$0xff]
    %v1310 = vld [vmem:[#allocation2 + $0xf8] sm:$0xff]
    %1311 = vst.msk [vmem:[%s5] sm:$0xff] %vm1051, %v1279
    %1312 = vst.msk [vmem:[%s5 + $0x8] sm:$0xff] %vm1051, %v1280
    %1313 = vst.msk [vmem:[%s5 + $0x10] sm:$0xff] %vm1051, %v1281
    %1314 = vst.msk [vmem:[%s5 + $0x18] sm:$0xff] %vm1051, %v1282
    %1315 = vst.msk [vmem:[%s5 + $0x20] sm:$0xff] %vm1051, %v1283
    %1316 = vst.msk [vmem:[%s5 + $0x28] sm:$0xff] %vm1051, %v1284
    %1317 = vst.msk [vmem:[%s5 + $0x30] sm:$0xff] %vm1051, %v1285
    %1318 = vst.msk [vmem:[%s5 + $0x38] sm:$0xff] %vm1051, %v1286
    %1319 = vst.msk [vmem:[%s5 + $0x40] sm:$0xff] %vm1051, %v1287
    %1320 = vst.msk [vmem:[%s5 + $0x48] sm:$0xff] %vm1051, %v1288
    %1321 = vst.msk [vmem:[%s5 + $0x50] sm:$0xff] %vm1051, %v1289
    %1322 = vst.msk [vmem:[%s5 + $0x58] sm:$0xff] %vm1051, %v1290
    %1323 = vst.msk [vmem:[%s5 + $0x60] sm:$0xff] %vm1051, %v1291
    %1324 = vst.msk [vmem:[%s5 + $0x68] sm:$0xff] %vm1051, %v1292
    %1325 = vst.msk [vmem:[%s5 + $0x70] sm:$0xff] %vm1051, %v1293
    %1326 = vst.msk [vmem:[%s5 + $0x78] sm:$0xff] %vm1051, %v1294
    %1327 = vst.msk [vmem:[%s5 + $0x80] sm:$0xff] %vm1051, %v1295
    %1328 = vst.msk [vmem:[%s5 + $0x88] sm:$0xff] %vm1051, %v1296
    %1329 = vst.msk [vmem:[%s5 + $0x90] sm:$0xff] %vm1051, %v1297
    %1330 = vst.msk [vmem:[%s5 + $0x98] sm:$0xff] %vm1051, %v1298
    %1331 = vst.msk [vmem:[%s5 + $0xa0] sm:$0xff] %vm1051, %v1299
    %1332 = vst.msk [vmem:[%s5 + $0xa8] sm:$0xff] %vm1051, %v1300
    %1333 = vst.msk [vmem:[%s5 + $0xb0] sm:$0xff] %vm1051, %v1301
    %1334 = vst.msk [vmem:[%s5 + $0xb8] sm:$0xff] %vm1051, %v1302
    %1335 = vst.msk [vmem:[%s5 + $0xc0] sm:$0xff] %vm1051, %v1303
    %1336 = vst.msk [vmem:[%s5 + $0xc8] sm:$0xff] %vm1051, %v1304
    %1337 = vst.msk [vmem:[%s5 + $0xd0] sm:$0xff] %vm1051, %v1305
    %1338 = vst.msk [vmem:[%s5 + $0xd8] sm:$0xff] %vm1051, %v1306
    %1339 = vst.msk [vmem:[%s5 + $0xe0] sm:$0xff] %vm1051, %v1307
    %1340 = vst.msk [vmem:[%s5 + $0xe8] sm:$0xff] %vm1051, %v1308
    %1341 = vst.msk [vmem:[%s5 + $0xf0] sm:$0xff] %vm1051, %v1309
    %1342 = vst.msk [vmem:[%s5 + $0xf8] sm:$0xff] %vm1051, %v1310
    %v1343 = vld [vmem:[#allocation3] sm:$0xff]
    %v1344 = vld [vmem:[#allocation3 + $0x8] sm:$0xff]
    %v1345 = vld [vmem:[#allocation3 + $0x10] sm:$0xff]
    %v1346 = vld [vmem:[#allocation3 + $0x18] sm:$0xff]
    %v1347 = vld [vmem:[#allocation3 + $0x20] sm:$0xff]
    %v1348 = vld [vmem:[#allocation3 + $0x28] sm:$0xff]
    %v1349 = vld [vmem:[#allocation3 + $0x30] sm:$0xff]
    %v1350 = vld [vmem:[#allocation3 + $0x38] sm:$0xff]
    %v1351 = vld [vmem:[#allocation3 + $0x40] sm:$0xff]
    %v1352 = vld [vmem:[#allocation3 + $0x48] sm:$0xff]
    %v1353 = vld [vmem:[#allocation3 + $0x50] sm:$0xff]
    %v1354 = vld [vmem:[#allocation3 + $0x58] sm:$0xff]
    %v1355 = vld [vmem:[#allocation3 + $0x60] sm:$0xff]
    %v1356 = vld [vmem:[#allocation3 + $0x68] sm:$0xff]
    %v1357 = vld [vmem:[#allocation3 + $0x70] sm:$0xff]
    %v1358 = vld [vmem:[#allocation3 + $0x78] sm:$0xff]
    %v1359 = vld [vmem:[#allocation3 + $0x80] sm:$0xff]
    %v1360 = vld [vmem:[#allocation3 + $0x88] sm:$0xff]
    %v1361 = vld [vmem:[#allocation3 + $0x90] sm:$0xff]
    %v1362 = vld [vmem:[#allocation3 + $0x98] sm:$0xff]
    %v1363 = vld [vmem:[#allocation3 + $0xa0] sm:$0xff]
    %v1364 = vld [vmem:[#allocation3 + $0xa8] sm:$0xff]
    %v1365 = vld [vmem:[#allocation3 + $0xb0] sm:$0xff]
    %v1366 = vld [vmem:[#allocation3 + $0xb8] sm:$0xff]
    %v1367 = vld [vmem:[#allocation3 + $0xc0] sm:$0xff]
    %v1368 = vld [vmem:[#allocation3 + $0xc8] sm:$0xff]
    %v1369 = vld [vmem:[#allocation3 + $0xd0] sm:$0xff]
    %v1370 = vld [vmem:[#allocation3 + $0xd8] sm:$0xff]
    %v1371 = vld [vmem:[#allocation3 + $0xe0] sm:$0xff]
    %v1372 = vld [vmem:[#allocation3 + $0xe8] sm:$0xff]
    %v1373 = vld [vmem:[#allocation3 + $0xf0] sm:$0xff]
    %v1374 = vld [vmem:[#allocation3 + $0xf8] sm:$0xff]
    %1375 = vst.msk [vmem:[%s6] sm:$0xff] %vm1051, %v1343
    %1376 = vst.msk [vmem:[%s6 + $0x8] sm:$0xff] %vm1051, %v1344
    %1377 = vst.msk [vmem:[%s6 + $0x10] sm:$0xff] %vm1051, %v1345
    %1378 = vst.msk [vmem:[%s6 + $0x18] sm:$0xff] %vm1051, %v1346
    %1379 = vst.msk [vmem:[%s6 + $0x20] sm:$0xff] %vm1051, %v1347
    %1380 = vst.msk [vmem:[%s6 + $0x28] sm:$0xff] %vm1051, %v1348
    %1381 = vst.msk [vmem:[%s6 + $0x30] sm:$0xff] %vm1051, %v1349
    %1382 = vst.msk [vmem:[%s6 + $0x38] sm:$0xff] %vm1051, %v1350
    %1383 = vst.msk [vmem:[%s6 + $0x40] sm:$0xff] %vm1051, %v1351
    %1384 = vst.msk [vmem:[%s6 + $0x48] sm:$0xff] %vm1051, %v1352
    %1385 = vst.msk [vmem:[%s6 + $0x50] sm:$0xff] %vm1051, %v1353
    %1386 = vst.msk [vmem:[%s6 + $0x58] sm:$0xff] %vm1051, %v1354
    %1387 = vst.msk [vmem:[%s6 + $0x60] sm:$0xff] %vm1051, %v1355
    %1388 = vst.msk [vmem:[%s6 + $0x68] sm:$0xff] %vm1051, %v1356
    %1389 = vst.msk [vmem:[%s6 + $0x70] sm:$0xff] %vm1051, %v1357
    %1390 = vst.msk [vmem:[%s6 + $0x78] sm:$0xff] %vm1051, %v1358
    %1391 = vst.msk [vmem:[%s6 + $0x80] sm:$0xff] %vm1051, %v1359
    %1392 = vst.msk [vmem:[%s6 + $0x88] sm:$0xff] %vm1051, %v1360
    %1393 = vst.msk [vmem:[%s6 + $0x90] sm:$0xff] %vm1051, %v1361
    %1394 = vst.msk [vmem:[%s6 + $0x98] sm:$0xff] %vm1051, %v1362
    %1395 = vst.msk [vmem:[%s6 + $0xa0] sm:$0xff] %vm1051, %v1363
    %1396 = vst.msk [vmem:[%s6 + $0xa8] sm:$0xff] %vm1051, %v1364
    %1397 = vst.msk [vmem:[%s6 + $0xb0] sm:$0xff] %vm1051, %v1365
    %1398 = vst.msk [vmem:[%s6 + $0xb8] sm:$0xff] %vm1051, %v1366
    %1399 = vst.msk [vmem:[%s6 + $0xc0] sm:$0xff] %vm1051, %v1367
    %1400 = vst.msk [vmem:[%s6 + $0xc8] sm:$0xff] %vm1051, %v1368
    %1401 = vst.msk [vmem:[%s6 + $0xd0] sm:$0xff] %vm1051, %v1369
    %1402 = vst.msk [vmem:[%s6 + $0xd8] sm:$0xff] %vm1051, %v1370
    %1403 = vst.msk [vmem:[%s6 + $0xe0] sm:$0xff] %vm1051, %v1371
    %1404 = vst.msk [vmem:[%s6 + $0xe8] sm:$0xff] %vm1051, %v1372
    %1405 = vst.msk [vmem:[%s6 + $0xf0] sm:$0xff] %vm1051, %v1373
    %1406 = vst.msk [vmem:[%s6 + $0xf8] sm:$0xff] %vm1051, %v1374
  $region25: #{sepconv4d_forward.5} parent=0 // pred_fallthru
    _
  // Predicated region
  $region26: #{sepconv4d_forward.5} parent=0 // pred_check
    _
  $region27: #{sepconv4d_forward.5} parent=0 // pred_check_branch
    %1408 = sbr.rel (0) target = $region29
  $region28: #{sepconv4d_forward.5} parent=0 // pred_region
    _
  $region29: #{sepconv4d_forward.5} parent=0 // pred_fallthru
    _
  // Predicated region
  $region30: #{sepconv4d_forward.5} parent=0 // pred_check
    _
  $region31: #{sepconv4d_forward.5} parent=0 // pred_check_branch
    %1410 = sbr.rel (0) target = $region33
  $region32: #{sepconv4d_forward.5} parent=0 // pred_region
    _
  $region33: #{sepconv4d_forward.5} parent=0 // pred_fallthru
    _
  // Predicated region
  $region34: #{sepconv4d_forward.5} parent=0 // pred_check
    _
  $region35: #{sepconv4d_forward.5} parent=0 // pred_check_branch
    %1412 = sbr.rel (0) target = $region37
  $region36: #{sepconv4d_forward.5} parent=0 // pred_region
    _
  $region37: #{sepconv4d_forward.5} parent=0 // pred_fallthru
    _
  // Predicated region
  $region38: #{sepconv4d_forward.5} parent=0 // pred_check
    _
  $region39: #{sepconv4d_forward.5} parent=0 // pred_check_branch
    %1414 = sbr.rel (0) target = $region41
  $region40: #{sepconv4d_forward.5} parent=0 // pred_region
    _
  $region41: #{sepconv4d_forward.5} parent=0 // pred_fallthru
    _
  // Predicated region
  $region42: #{sepconv4d_forward.5} parent=0 // pred_check
    _
  $region43: #{sepconv4d_forward.5} parent=0 // pred_check_branch
    %1416 = sbr.rel (0) target = $region45
  $region44: #{sepconv4d_forward.5} parent=0 // pred_region
    _
  $region45: #{sepconv4d_forward.5} parent=0 // pred_fallthru
    _
  // Predicated region
  $region46: #{sepconv4d_forward.5} parent=0 // pred_check
    _
  $region47: #{sepconv4d_forward.5} parent=0 // pred_check_branch
    %1418 = sbr.rel (0) target = $region49
  $region48: #{sepconv4d_forward.5} parent=0 // pred_region
    _
  $region49: #{sepconv4d_forward.5} parent=0 // pred_fallthru
    _

// kernel: sepconv4d_forward.6
$region0: #{sepconv4d_forward.6}
  #allocation0 [shape = 'u32[]', space=smem, size = 0x4, offset = 0x4, fixed_abs, tag = 'smem constant byte address 0x4 - core index']
  #allocation1 [shape = 'u32[72,128]{1,0:T(1,128)}', space=vmem, size = 0x9000, scoped, tag = 'internal scratch']
  #allocation2 [shape = 'f32[8,1]{1,0:T(8,128)}', space=vmem, size = 0x1000, scoped, tag = 'scratch operand']
  #allocation3 [shape = 'f32[8,1]{1,0:T(8,128)}', space=vmem, size = 0x1000, scoped, tag = 'scratch operand']
  %s0 = inlined_call_operand.vmem [shape: f32[8,8192], index: 0, kind: input, shape index: {}]
  %s1 = inlined_call_operand.vmem [shape: f32[8,8], index: 1, kind: input, shape index: {}]
  %s2 = inlined_call_operand.vmem [shape: f32[8,1], index: 2, kind: input, shape index: {}]
  %s3 = inlined_call_operand.vmem [shape: f32[8,1], index: 3, kind: input, shape index: {}]
  %s4 = inlined_call_operand.vmem [shape: f32[8,8192], index: 4, kind: output, shape index: {0}]
  %s5 = inlined_call_operand.vmem [shape: f32[8,1], index: 5, kind: output, shape index: {1}]
  %s6 = inlined_call_operand.vmem [shape: f32[8,1], index: 6, kind: output, shape index: {2}]
  %7 = xla_tuple %s4, %s5, %s6
  %s8 = sld [smem:[#allocation0]]
  $region73: #{sepconv4d_forward.6} parent=0
    _
  %s10 = ssub.s32 1, %s8
  %s11 = scalar_select 0, %s10, %s8
  loop: start=0, step=1, limit=4
  $region2: #{sepconv4d_forward.6} parent=0 // loop_pre_header
    _
  $region3: #{sepconv4d_forward.6} parent=0 // loop_header
    %s13 = sphi 0, %s17
    %p14 = scmp.ge.s32.totalorder %s13, 4
    %s23 = sphi 0, %s25
    %s26 = sphi 0, %s23
    %s27 = sphi 0, %s26
    %s43 = sphi 0, %s27
    %s47 = sphi 0, %s47
    %s49 = sphi 0, %s47
    %s50 = sphi 0, %s49
    %s64 = sphi 0, %s50
    %s68 = sphi 0, %s68
    %s70 = sphi 0, %s68
    %s71 = sphi 0, %s70
    %s85 = sphi 0, %s71
    %s89 = sphi 0, %s89
    %s91 = sphi 0, %s89
    %s92 = sphi 0, %s91
    %s106 = sphi 0, %s92
    %s112 = sphi 0, %s114
    %s115 = sphi 0, %s112
    %s116 = sphi 0, %s115
    %s132 = sphi 0, %s116
    %s136 = sphi 0, %s136
    %s138 = sphi 0, %s136
    %s139 = sphi 0, %s138
    %s153 = sphi 0, %s139
    %s157 = sphi 0, %s157
    %s159 = sphi 0, %s157
    %s160 = sphi 0, %s159
    %s174 = sphi 0, %s160
  $region4: #{sepconv4d_forward.6} parent=0 // loop_header_branch
    %16 = sbr.rel (%p14) target = $region8
  $region5: #{sepconv4d_forward.6} parent=0 // loop_body
    %s18 = ssub.s32 %s13, 1
    %s19 = ssub.s32 %s13, 2
    %s20 = sadd.s32 %s13, 1
    %s21 = ssub.s32 %s13, %s20
    %p22 = scmp.eq.s32.totalorder %s21, 0
    %s24 = sadd.s32 %s23, 1
    %s25 = scalar_select %p22, %s23, %s24
    %p28 = pneg %p22
    %p29 = scmp.eq.s32.totalorder %s13, 1
    %p30 = por %p28, %p29
    %p31 = scmp.ne.s32.totalorder %s23, %s26
    %p32 = scmp.eq.s32.totalorder %s13, 0
    %p33 = por %p31, %p32
    %p34 = scmp.ne.s32.totalorder %s23, %s26
    %p35 = scmp.eq.s32.totalorder %s18, 1
    %p36 = por %p34, %p35
    %p37 = scmp.ne.s32.totalorder %s26, %s27
    %p38 = scmp.eq.s32.totalorder %s18, 0
    %p39 = por %p37, %p38
    %p40 = scmp.ne.s32.totalorder %s26, %s27
    %p41 = scmp.eq.s32.totalorder %s19, 1
    %p42 = por %p40, %p41
    %p44 = scmp.ne.s32.totalorder %s27, %s43
    %p45 = scmp.eq.s32.totalorder %s19, 0
    %p46 = por %p44, %p45
    %s48 = sadd.s32 %s47, 1
    %p51 = scmp.eq.s32.totalorder %s13, 1
    %p52 = scmp.ne.s32.totalorder %s47, %s49
    %p53 = scmp.eq.s32.totalorder %s13, 0
    %p54 = por %p52, %p53
    %p55 = scmp.ne.s32.totalorder %s47, %s49
    %p56 = scmp.eq.s32.totalorder %s18, 1
    %p57 = por %p55, %p56
    %p58 = scmp.ne.s32.totalorder %s49, %s50
    %p59 = scmp.eq.s32.totalorder %s18, 0
    %p60 = por %p58, %p59
    %p61 = scmp.ne.s32.totalorder %s49, %s50
    %p62 = scmp.eq.s32.totalorder %s19, 1
    %p63 = por %p61, %p62
    %p65 = scmp.ne.s32.totalorder %s50, %s64
    %p66 = scmp.eq.s32.totalorder %s19, 0
    %p67 = por %p65, %p66
    %s69 = sadd.s32 %s68, 1
    %p72 = scmp.eq.s32.totalorder %s13, 1
    %p73 = scmp.ne.s32.totalorder %s68, %s70
    %p74 = scmp.eq.s32.totalorder %s13, 0
    %p75 = por %p73, %p74
    %p76 = scmp.ne.s32.totalorder %s68, %s70
    %p77 = scmp.eq.s32.totalorder %s18, 1
    %p78 = por %p76, %p77
    %p79 = scmp.ne.s32.totalorder %s70, %s71
    %p80 = scmp.eq.s32.totalorder %s18, 0
    %p81 = por %p79, %p80
    %p82 = scmp.ne.s32.totalorder %s70, %s71
    %p83 = scmp.eq.s32.totalorder %s19, 1
    %p84 = por %p82, %p83
    %p86 = scmp.ne.s32.totalorder %s71, %s85
    %p87 = scmp.eq.s32.totalorder %s19, 0
    %p88 = por %p86, %p87
    %s90 = sadd.s32 %s89, 1
    %p93 = scmp.eq.s32.totalorder %s13, 1
    %p94 = scmp.ne.s32.totalorder %s89, %s91
    %p95 = scmp.eq.s32.totalorder %s13, 0
    %p96 = por %p94, %p95
    %p97 = scmp.ne.s32.totalorder %s89, %s91
    %p98 = scmp.eq.s32.totalorder %s18, 1
    %p99 = por %p97, %p98
    %p100 = scmp.ne.s32.totalorder %s91, %s92
    %p101 = scmp.eq.s32.totalorder %s18, 0
    %p102 = por %p100, %p101
    %p103 = scmp.ne.s32.totalorder %s91, %s92
    %p104 = scmp.eq.s32.totalorder %s19, 1
    %p105 = por %p103, %p104
    %p107 = scmp.ne.s32.totalorder %s92, %s106
    %p108 = scmp.eq.s32.totalorder %s19, 0
    %p109 = por %p107, %p108
    %s110 = ssub.s32 %s13, %s20
    %p111 = scmp.eq.s32.totalorder %s110, 0
    %s113 = sadd.s32 %s112, 1
    %s114 = scalar_select %p111, %s112, %s113
    %p117 = pneg %p111
    %p118 = scmp.eq.s32.totalorder %s13, 1
    %p119 = por %p117, %p118
    %p120 = scmp.ne.s32.totalorder %s112, %s115
    %p121 = scmp.eq.s32.totalorder %s13, 0
    %p122 = por %p120, %p121
    %p123 = scmp.ne.s32.totalorder %s112, %s115
    %p124 = scmp.eq.s32.totalorder %s18, 1
    %p125 = por %p123, %p124
    %p126 = scmp.ne.s32.totalorder %s115, %s116
    %p127 = scmp.eq.s32.totalorder %s18, 0
    %p128 = por %p126, %p127
    %p129 = scmp.ne.s32.totalorder %s115, %s116
    %p130 = scmp.eq.s32.totalorder %s19, 1
    %p131 = por %p129, %p130
    %p133 = scmp.ne.s32.totalorder %s116, %s132
    %p134 = scmp.eq.s32.totalorder %s19, 0
    %p135 = por %p133, %p134
    %s137 = sadd.s32 %s136, 1
    %p140 = scmp.eq.s32.totalorder %s13, 1
    %p141 = scmp.ne.s32.totalorder %s136, %s138
    %p142 = scmp.eq.s32.totalorder %s13, 0
    %p143 = por %p141, %p142
    %p144 = scmp.ne.s32.totalorder %s136, %s138
    %p145 = scmp.eq.s32.totalorder %s18, 1
    %p146 = por %p144, %p145
    %p147 = scmp.ne.s32.totalorder %s138, %s139
    %p148 = scmp.eq.s32.totalorder %s18, 0
    %p149 = por %p147, %p148
    %p150 = scmp.ne.s32.totalorder %s138, %s139
    %p151 = scmp.eq.s32.totalorder %s19, 1
    %p152 = por %p150, %p151
    %p154 = scmp.ne.s32.totalorder %s139, %s153
    %p155 = scmp.eq.s32.totalorder %s19, 0
    %p156 = por %p154, %p155
    %s158 = sadd.s32 %s157, 1
    %p161 = scmp.eq.s32.totalorder %s13, 1
    %p162 = scmp.ne.s32.totalorder %s157, %s159
    %p163 = scmp.eq.s32.totalorder %s13, 0
    %p164 = por %p162, %p163
    %p165 = scmp.ne.s32.totalorder %s157, %s159
    %p166 = scmp.eq.s32.totalorder %s18, 1
    %p167 = por %p165, %p166
    %p168 = scmp.ne.s32.totalorder %s159, %s160
    %p169 = scmp.eq.s32.totalorder %s18, 0
    %p170 = por %p168, %p169
    %p171 = scmp.ne.s32.totalorder %s159, %s160
    %p172 = scmp.eq.s32.totalorder %s19, 1
    %p173 = por %p171, %p172
    %p175 = scmp.ne.s32.totalorder %s160, %s174
    %p176 = scmp.eq.s32.totalorder %s19, 0
    %p177 = por %p175, %p176
    %p178 = scmp.le.s32.totalorder 1, %s13
    %p179 = scmp.lt.s32.totalorder %s13, 3
    %p180 = pnand %p178, %p179
    %p181 = pneg %p180
    // Predicated region
    $region9: #{sepconv4d_forward.6} parent=5 // pred_check
      _
    $region10: #{sepconv4d_forward.6} parent=5 // pred_check_branch
      %183 = sbr.rel (%p180) target = $region12
    $region11: #{sepconv4d_forward.6} parent=5 // pred_region
      %s184 = ssub.s32 %s13, 1
      // Predicated region
      $region13: #{sepconv4d_forward.6} parent=11 // pred_check
        %p185 = pneg %p60
      $region14: #{sepconv4d_forward.6} parent=11 // pred_check_branch
        %187 = sbr.rel (%p185) target = $region16
      $region15: #{sepconv4d_forward.6} parent=11 // pred_region
        _
      $region16: #{sepconv4d_forward.6} parent=11 // pred_fallthru
        _
      // Predicated region
      $region17: #{sepconv4d_forward.6} parent=11 // pred_check
        %p188 = pneg %p81
      $region18: #{sepconv4d_forward.6} parent=11 // pred_check_branch
        %190 = sbr.rel (%p188) target = $region20
      $region19: #{sepconv4d_forward.6} parent=11 // pred_region
        _
      $region20: #{sepconv4d_forward.6} parent=11 // pred_fallthru
        _
      // Predicated region
      $region21: #{sepconv4d_forward.6} parent=11 // pred_check
        %p191 = pneg %p102
      $region22: #{sepconv4d_forward.6} parent=11 // pred_check_branch
        %193 = sbr.rel (%p191) target = $region24
      $region23: #{sepconv4d_forward.6} parent=11 // pred_region
        _
      $region24: #{sepconv4d_forward.6} parent=11 // pred_fallthru
        _
    $region12: #{sepconv4d_forward.6} parent=5 // pred_fallthru
      _
    %p194 = scmp.lt.s32.totalorder %s13, 2
    // Predicated region
    $region25: #{sepconv4d_forward.6} parent=5 // pred_check
      %p195 = pneg %p194
    $region26: #{sepconv4d_forward.6} parent=5 // pred_check_branch
      %197 = sbr.rel (%p195) target = $region28
    $region27: #{sepconv4d_forward.6} parent=5 // pred_region
      // Predicated region
      $region29: #{sepconv4d_forward.6} parent=27 // pred_check
        %p198 = pneg %p33
      $region30: #{sepconv4d_forward.6} parent=27 // pred_check_branch
        %200 = sbr.rel (%p198) target = $region32
      $region31: #{sepconv4d_forward.6} parent=27 // pred_region
        %s201 = smul.u32 32, %s13
        %p202 = scmp.lt.s32.totalorder %s201, 63
        %s203 = scalar_select %p202, %s201, 63
        %s204 = smul.addr %s203, 8
        %s205 = scalar_lea.vmem %s0, %s204
        %s206 = smul.u32 32, %s13
      $region32: #{sepconv4d_forward.6} parent=27 // pred_fallthru
        _
    $region28: #{sepconv4d_forward.6} parent=5 // pred_fallthru
      _
    %p207 = scmp.le.s32.totalorder 1, %s13
    %p208 = scmp.lt.s32.totalorder %s13, 3
    %p209 = pnand %p207, %p208
    %p210 = pneg %p209
    // Predicated region
    $region33: #{sepconv4d_forward.6} parent=5 // pred_check
      _
    $region34: #{sepconv4d_forward.6} parent=5 // pred_check_branch
      %212 = sbr.rel (%p209) target = $region36
    $region35: #{sepconv4d_forward.6} parent=5 // pred_region
      %s213 = ssub.s32 %s13, 1
      %s214 = smul.u32 32, %s18
      %p215 = scmp.lt.s32.totalorder %s214, 63
      %s216 = scalar_select %p215, %s214, 63
      %s217 = smul.addr %s216, 8
      %s218 = scalar_lea.vmem %s0, %s217
      %p219 = pneg %p39
      %p220 = pneg %p36
      %p221 = pneg %p60
      %p222 = pneg %p57
      %p223 = pneg %p81
      %p224 = pneg %p78
      %p225 = pneg %p102
      %p226 = pneg %p99
      %p227 = pneg %p128
      %p228 = pneg %p125
      %s229 = smul.u32 32, %s18
      %p230 = scmp.lt.s32.totalorder %s229, 63
      %s231 = scalar_select %p230, %s229, 63
      %s232 = smul.addr %s231, 8
      %s233 = scalar_lea.vmem %s4, %s232
      %p234 = pneg %p149
      %p235 = pneg %p146
      %p236 = pneg %p170
      %p237 = pneg %p167
      %s238 = smul.u32 32, %s18
      %p239 = scmp.lt.s32.totalorder %s238, 63
      %s240 = scalar_select %p239, %s238, 63
      %s241 = smul.addr %s240, 8
      %s242 = scalar_lea.vmem %s0, %s241
      %s243 = smul.u32 32, %s18
      %s244 = smul.u32 32, %s18
      %p245 = scmp.lt.s32.totalorder %s244, 63
      %s246 = scalar_select %p245, %s244, 63
      %s247 = smul.addr %s246, 8
      %s248 = scalar_lea.vmem %s4, %s247
      %s249 = smul.u32 32, %s18
      %v250 = vld [vmem:[%s242] sm:$0xff]
      %v251 = vld [vmem:[%s242 + $0x8] sm:$0xff]
      %v252 = vld [vmem:[%s242 + $0x10] sm:$0xff]
      %v253 = vld [vmem:[%s242 + $0x18] sm:$0xff]
      %v254 = vld [vmem:[%s242 + $0x20] sm:$0xff]
      %v255 = vld [vmem:[%s242 + $0x28] sm:$0xff]
      %v256 = vld [vmem:[%s242 + $0x30] sm:$0xff]
      %v257 = vld [vmem:[%s242 + $0x38] sm:$0xff]
      %v258 = vld [vmem:[%s242 + $0x40] sm:$0xff]
      %v259 = vld [vmem:[%s242 + $0x48] sm:$0xff]
      %v260 = vld [vmem:[%s242 + $0x50] sm:$0xff]
      %v261 = vld [vmem:[%s242 + $0x58] sm:$0xff]
      %v262 = vld [vmem:[%s242 + $0x60] sm:$0xff]
      %v263 = vld [vmem:[%s242 + $0x68] sm:$0xff]
      %v264 = vld [vmem:[%s242 + $0x70] sm:$0xff]
      %v265 = vld [vmem:[%s242 + $0x78] sm:$0xff]
      %v266 = vld [vmem:[%s242 + $0x80] sm:$0xff]
      %v267 = vld [vmem:[%s242 + $0x88] sm:$0xff]
      %v268 = vld [vmem:[%s242 + $0x90] sm:$0xff]
      %v269 = vld [vmem:[%s242 + $0x98] sm:$0xff]
      %v270 = vld [vmem:[%s242 + $0xa0] sm:$0xff]
      %v271 = vld [vmem:[%s242 + $0xa8] sm:$0xff]
      %v272 = vld [vmem:[%s242 + $0xb0] sm:$0xff]
      %v273 = vld [vmem:[%s242 + $0xb8] sm:$0xff]
      %v274 = vld [vmem:[%s242 + $0xc0] sm:$0xff]
      %v275 = vld [vmem:[%s242 + $0xc8] sm:$0xff]
      %v276 = vld [vmem:[%s242 + $0xd0] sm:$0xff]
      %v277 = vld [vmem:[%s242 + $0xd8] sm:$0xff]
      %v278 = vld [vmem:[%s242 + $0xe0] sm:$0xff]
      %v279 = vld [vmem:[%s242 + $0xe8] sm:$0xff]
      %v280 = vld [vmem:[%s242 + $0xf0] sm:$0xff]
      %v281 = vld [vmem:[%s242 + $0xf8] sm:$0xff]
      %v282 = vld [vmem:[%s2] sm:$0xff]
      %284 = vset.pattern.permute.xlu0 0
      %285 = vperm.xlu0 %284, %v282
      %v286 = vpop.permute.xlu0 %285
      %v288 = vmul.f32 %v250, %v286
      %v289 = vmul.f32 %v251, %v286
      %v290 = vmul.f32 %v252, %v286
      %v291 = vmul.f32 %v253, %v286
      %v292 = vmul.f32 %v254, %v286
      %v293 = vmul.f32 %v255, %v286
      %v294 = vmul.f32 %v256, %v286
      %v295 = vmul.f32 %v257, %v286
      %v296 = vmul.f32 %v258, %v286
      %v297 = vmul.f32 %v259, %v286
      %v298 = vmul.f32 %v260, %v286
      %v299 = vmul.f32 %v261, %v286
      %v300 = vmul.f32 %v262, %v286
      %v301 = vmul.f32 %v263, %v286
      %v302 = vmul.f32 %v264, %v286
      %v303 = vmul.f32 %v265, %v286
      %v304 = vmul.f32 %v266, %v286
      %v305 = vmul.f32 %v267, %v286
      %v306 = vmul.f32 %v268, %v286
      %v307 = vmul.f32 %v269, %v286
      %v308 = vmul.f32 %v270, %v286
      %v309 = vmul.f32 %v271, %v286
      %v310 = vmul.f32 %v272, %v286
      %v311 = vmul.f32 %v273, %v286
      %v312 = vmul.f32 %v274, %v286
      %v313 = vmul.f32 %v275, %v286
      %v314 = vmul.f32 %v276, %v286
      %v315 = vmul.f32 %v277, %v286
      %v316 = vmul.f32 %v278, %v286
      %v317 = vmul.f32 %v279, %v286
      %v318 = vmul.f32 %v280, %v286
      %v319 = vmul.f32 %v281, %v286
      %v320 = vld [vmem:[%s3] sm:$0xff]
      %322 = vset.pattern.permute.xlu0 0
      %323 = vperm.xlu0 %322, %v320
      %v324 = vpop.permute.xlu0 %323
      %v326 = vadd.f32 %v288, %v324
      %v327 = vadd.f32 %v289, %v324
      %v328 = vadd.f32 %v290, %v324
      %v329 = vadd.f32 %v291, %v324
      %v330 = vadd.f32 %v292, %v324
      %v331 = vadd.f32 %v293, %v324
      %v332 = vadd.f32 %v294, %v324
      %v333 = vadd.f32 %v295, %v324
      %v334 = vadd.f32 %v296, %v324
      %v335 = vadd.f32 %v297, %v324
      %v336 = vadd.f32 %v298, %v324
      %v337 = vadd.f32 %v299, %v324
      %v338 = vadd.f32 %v300, %v324
      %v339 = vadd.f32 %v301, %v324
      %v340 = vadd.f32 %v302, %v324
      %v341 = vadd.f32 %v303, %v324
      %v342 = vadd.f32 %v304, %v324
      %v343 = vadd.f32 %v305, %v324
      %v344 = vadd.f32 %v306, %v324
      %v345 = vadd.f32 %v307, %v324
      %v346 = vadd.f32 %v308, %v324
      %v347 = vadd.f32 %v309, %v324
      %v348 = vadd.f32 %v310, %v324
      %v349 = vadd.f32 %v311, %v324
      %v350 = vadd.f32 %v312, %v324
      %v351 = vadd.f32 %v313, %v324
      %v352 = vadd.f32 %v314, %v324
      %v353 = vadd.f32 %v315, %v324
      %v354 = vadd.f32 %v316, %v324
      %v355 = vadd.f32 %v317, %v324
      %v356 = vadd.f32 %v318, %v324
      %v357 = vadd.f32 %v319, %v324
      %v358 = vld [vmem:[%s1] sm:$0xff]
      %vm359 = vcmask 64512
      %v361 = vsel %vm359, %v358, 0
      %363 = vmatpush.msra.mxu0 0.0
      %364 = vmatpush.msra.mxu0 0.0
      %365 = vmatpush.msra.mxu0 0.0
      %366 = vmatpush.msra.mxu0 0.0
      %367 = vmatpush.msra.mxu0 0.0
      %368 = vmatpush.msra.mxu0 0.0
      %369 = vmatpush.msra.mxu0 0.0
      %370 = vmatpush.msra.mxu0 0.0
      %371 = vmatpush.msra.mxu0 0.0
      %372 = vmatpush.msra.mxu0 0.0
      %373 = vmatpush.msra.mxu0 0.0
      %374 = vmatpush.msra.mxu0 0.0
      %375 = vmatpush.msra.mxu0 0.0
      %376 = vmatpush.msra.mxu0 0.0
      %377 = vmatpush.msra.mxu0 0.0
      %378 = vmatpush.msra.mxu0 %v326
      %379 = vmatmul.f32.gmra.mxu0 %v361
      %v380 = vpop.f32.mrf.mxu0
      %v381 = vadd.f32 0.0, %v380
      %382 = vdwg.mxu0
      %383 = vmatpush.msra.mxu0 0.0
      %384 = vmatpush.msra.mxu0 0.0
      %385 = vmatpush.msra.mxu0 0.0
      %386 = vmatpush.msra.mxu0 0.0
      %387 = vmatpush.msra.mxu0 0.0
      %388 = vmatpush.msra.mxu0 0.0
      %389 = vmatpush.msra.mxu0 0.0
      %390 = vmatpush.msra.mxu0 0.0
      %391 = vmatpush.msra.mxu0 0.0
      %392 = vmatpush.msra.mxu0 0.0
      %393 = vmatpush.msra.mxu0 0.0
      %394 = vmatpush.msra.mxu0 0.0
      %395 = vmatpush.msra.mxu0 0.0
      %396 = vmatpush.msra.mxu0 0.0
      %397 = vmatpush.msra.mxu0 0.0
      %398 = vmatpush.msra.mxu0 %v327
      %399 = vmatmul.f32.gmra.mxu0 %v361
      %v400 = vpop.f32.mrf.mxu0
      %v401 = vadd.f32 0.0, %v400
      %402 = vdwg.mxu0
      %403 = vmatpush.msra.mxu0 0.0
      %404 = vmatpush.msra.mxu0 0.0
      %405 = vmatpush.msra.mxu0 0.0
      %406 = vmatpush.msra.mxu0 0.0
      %407 = vmatpush.msra.mxu0 0.0
      %408 = vmatpush.msra.mxu0 0.0
      %409 = vmatpush.msra.mxu0 0.0
      %410 = vmatpush.msra.mxu0 0.0
      %411 = vmatpush.msra.mxu0 0.0
      %412 = vmatpush.msra.mxu0 0.0
      %413 = vmatpush.msra.mxu0 0.0
      %414 = vmatpush.msra.mxu0 0.0
      %415 = vmatpush.msra.mxu0 0.0
      %416 = vmatpush.msra.mxu0 0.0
      %417 = vmatpush.msra.mxu0 0.0
      %418 = vmatpush.msra.mxu0 %v328
      %419 = vmatmul.f32.gmra.mxu0 %v361
      %v420 = vpop.f32.mrf.mxu0
      %v421 = vadd.f32 0.0, %v420
      %422 = vdwg.mxu0
      %423 = vmatpush.msra.mxu0 0.0
      %424 = vmatpush.msra.mxu0 0.0
      %425 = vmatpush.msra.mxu0 0.0
      %426 = vmatpush.msra.mxu0 0.0
      %427 = vmatpush.msra.mxu0 0.0
      %428 = vmatpush.msra.mxu0 0.0
      %429 = vmatpush.msra.mxu0 0.0
      %430 = vmatpush.msra.mxu0 0.0
      %431 = vmatpush.msra.mxu0 0.0
      %432 = vmatpush.msra.mxu0 0.0
      %433 = vmatpush.msra.mxu0 0.0
      %434 = vmatpush.msra.mxu0 0.0
      %435 = vmatpush.msra.mxu0 0.0
      %436 = vmatpush.msra.mxu0 0.0
      %437 = vmatpush.msra.mxu0 0.0
      %438 = vmatpush.msra.mxu0 %v329
      %439 = vmatmul.f32.gmra.mxu0 %v361
      %v440 = vpop.f32.mrf.mxu0
      %v441 = vadd.f32 0.0, %v440
      %442 = vdwg.mxu0
      %443 = vmatpush.msra.mxu0 0.0
      %444 = vmatpush.msra.mxu0 0.0
      %445 = vmatpush.msra.mxu0 0.0
      %446 = vmatpush.msra.mxu0 0.0
      %447 = vmatpush.msra.mxu0 0.0
      %448 = vmatpush.msra.mxu0 0.0
      %449 = vmatpush.msra.mxu0 0.0
      %450 = vmatpush.msra.mxu0 0.0
      %451 = vmatpush.msra.mxu0 0.0
      %452 = vmatpush.msra.mxu0 0.0
      %453 = vmatpush.msra.mxu0 0.0
      %454 = vmatpush.msra.mxu0 0.0
      %455 = vmatpush.msra.mxu0 0.0
      %456 = vmatpush.msra.mxu0 0.0
      %457 = vmatpush.msra.mxu0 0.0
      %458 = vmatpush.msra.mxu0 %v330
      %459 = vmatmul.f32.gmra.mxu0 %v361
      %v460 = vpop.f32.mrf.mxu0
      %v461 = vadd.f32 0.0, %v460
      %462 = vdwg.mxu0
      %463 = vmatpush.msra.mxu0 0.0
      %464 = vmatpush.msra.mxu0 0.0
      %465 = vmatpush.msra.mxu0 0.0
      %466 = vmatpush.msra.mxu0 0.0
      %467 = vmatpush.msra.mxu0 0.0
      %468 = vmatpush.msra.mxu0 0.0
      %469 = vmatpush.msra.mxu0 0.0
      %470 = vmatpush.msra.mxu0 0.0
      %471 = vmatpush.msra.mxu0 0.0
      %472 = vmatpush.msra.mxu0 0.0
      %473 = vmatpush.msra.mxu0 0.0
      %474 = vmatpush.msra.mxu0 0.0
      %475 = vmatpush.msra.mxu0 0.0
      %476 = vmatpush.msra.mxu0 0.0
      %477 = vmatpush.msra.mxu0 0.0
      %478 = vmatpush.msra.mxu0 %v331
      %479 = vmatmul.f32.gmra.mxu0 %v361
      %v480 = vpop.f32.mrf.mxu0
      %v481 = vadd.f32 0.0, %v480
      %482 = vdwg.mxu0
      %483 = vmatpush.msra.mxu0 0.0
      %484 = vmatpush.msra.mxu0 0.0
      %485 = vmatpush.msra.mxu0 0.0
      %486 = vmatpush.msra.mxu0 0.0
      %487 = vmatpush.msra.mxu0 0.0
      %488 = vmatpush.msra.mxu0 0.0
      %489 = vmatpush.msra.mxu0 0.0
      %490 = vmatpush.msra.mxu0 0.0
      %491 = vmatpush.msra.mxu0 0.0
      %492 = vmatpush.msra.mxu0 0.0
      %493 = vmatpush.msra.mxu0 0.0
      %494 = vmatpush.msra.mxu0 0.0
      %495 = vmatpush.msra.mxu0 0.0
      %496 = vmatpush.msra.mxu0 0.0
      %497 = vmatpush.msra.mxu0 0.0
      %498 = vmatpush.msra.mxu0 %v332
      %499 = vmatmul.f32.gmra.mxu0 %v361
      %v500 = vpop.f32.mrf.mxu0
      %v501 = vadd.f32 0.0, %v500
      %502 = vdwg.mxu0
      %503 = vmatpush.msra.mxu0 0.0
      %504 = vmatpush.msra.mxu0 0.0
      %505 = vmatpush.msra.mxu0 0.0
      %506 = vmatpush.msra.mxu0 0.0
      %507 = vmatpush.msra.mxu0 0.0
      %508 = vmatpush.msra.mxu0 0.0
      %509 = vmatpush.msra.mxu0 0.0
      %510 = vmatpush.msra.mxu0 0.0
      %511 = vmatpush.msra.mxu0 0.0
      %512 = vmatpush.msra.mxu0 0.0
      %513 = vmatpush.msra.mxu0 0.0
      %514 = vmatpush.msra.mxu0 0.0
      %515 = vmatpush.msra.mxu0 0.0
      %516 = vmatpush.msra.mxu0 0.0
      %517 = vmatpush.msra.mxu0 0.0
      %518 = vmatpush.msra.mxu0 %v333
      %519 = vmatmul.f32.gmra.mxu0 %v361
      %v520 = vpop.f32.mrf.mxu0
      %v521 = vadd.f32 0.0, %v520
      %522 = vdwg.mxu0
      %523 = vmatpush.msra.mxu0 0.0
      %524 = vmatpush.msra.mxu0 0.0
      %525 = vmatpush.msra.mxu0 0.0
      %526 = vmatpush.msra.mxu0 0.0
      %527 = vmatpush.msra.mxu0 0.0
      %528 = vmatpush.msra.mxu0 0.0
      %529 = vmatpush.msra.mxu0 0.0
      %530 = vmatpush.msra.mxu0 0.0
      %531 = vmatpush.msra.mxu0 0.0
      %532 = vmatpush.msra.mxu0 0.0
      %533 = vmatpush.msra.mxu0 0.0
      %534 = vmatpush.msra.mxu0 0.0
      %535 = vmatpush.msra.mxu0 0.0
      %536 = vmatpush.msra.mxu0 0.0
      %537 = vmatpush.msra.mxu0 0.0
      %538 = vmatpush.msra.mxu0 %v334
      %539 = vmatmul.f32.gmra.mxu0 %v361
      %v540 = vpop.f32.mrf.mxu0
      %v541 = vadd.f32 0.0, %v540
      %542 = vdwg.mxu0
      %543 = vmatpush.msra.mxu0 0.0
      %544 = vmatpush.msra.mxu0 0.0
      %545 = vmatpush.msra.mxu0 0.0
      %546 = vmatpush.msra.mxu0 0.0
      %547 = vmatpush.msra.mxu0 0.0
      %548 = vmatpush.msra.mxu0 0.0
      %549 = vmatpush.msra.mxu0 0.0
      %550 = vmatpush.msra.mxu0 0.0
      %551 = vmatpush.msra.mxu0 0.0
      %552 = vmatpush.msra.mxu0 0.0
      %553 = vmatpush.msra.mxu0 0.0
      %554 = vmatpush.msra.mxu0 0.0
      %555 = vmatpush.msra.mxu0 0.0
      %556 = vmatpush.msra.mxu0 0.0
      %557 = vmatpush.msra.mxu0 0.0
      %558 = vmatpush.msra.mxu0 %v335
      %559 = vmatmul.f32.gmra.mxu0 %v361
      %v560 = vpop.f32.mrf.mxu0
      %v561 = vadd.f32 0.0, %v560
      %562 = vdwg.mxu0
      %563 = vmatpush.msra.mxu0 0.0
      %564 = vmatpush.msra.mxu0 0.0
      %565 = vmatpush.msra.mxu0 0.0
      %566 = vmatpush.msra.mxu0 0.0
      %567 = vmatpush.msra.mxu0 0.0
      %568 = vmatpush.msra.mxu0 0.0
      %569 = vmatpush.msra.mxu0 0.0
      %570 = vmatpush.msra.mxu0 0.0
      %571 = vmatpush.msra.mxu0 0.0
      %572 = vmatpush.msra.mxu0 0.0
      %573 = vmatpush.msra.mxu0 0.0
      %574 = vmatpush.msra.mxu0 0.0
      %575 = vmatpush.msra.mxu0 0.0
      %576 = vmatpush.msra.mxu0 0.0
      %577 = vmatpush.msra.mxu0 0.0
      %578 = vmatpush.msra.mxu0 %v336
      %579 = vmatmul.f32.gmra.mxu0 %v361
      %v580 = vpop.f32.mrf.mxu0
      %v581 = vadd.f32 0.0, %v580
      %582 = vdwg.mxu0
      %583 = vmatpush.msra.mxu0 0.0
      %584 = vmatpush.msra.mxu0 0.0
      %585 = vmatpush.msra.mxu0 0.0
      %586 = vmatpush.msra.mxu0 0.0
      %587 = vmatpush.msra.mxu0 0.0
      %588 = vmatpush.msra.mxu0 0.0
      %589 = vmatpush.msra.mxu0 0.0
      %590 = vmatpush.msra.mxu0 0.0
      %591 = vmatpush.msra.mxu0 0.0
      %592 = vmatpush.msra.mxu0 0.0
      %593 = vmatpush.msra.mxu0 0.0
      %594 = vmatpush.msra.mxu0 0.0
      %595 = vmatpush.msra.mxu0 0.0
      %596 = vmatpush.msra.mxu0 0.0
      %597 = vmatpush.msra.mxu0 0.0
      %598 = vmatpush.msra.mxu0 %v337
      %599 = vmatmul.f32.gmra.mxu0 %v361
      %v600 = vpop.f32.mrf.mxu0
      %v601 = vadd.f32 0.0, %v600
      %602 = vdwg.mxu0
      %603 = vmatpush.msra.mxu0 0.0
      %604 = vmatpush.msra.mxu0 0.0
      %605 = vmatpush.msra.mxu0 0.0
      %606 = vmatpush.msra.mxu0 0.0
      %607 = vmatpush.msra.mxu0 0.0
      %608 = vmatpush.msra.mxu0 0.0
      %609 = vmatpush.msra.mxu0 0.0
      %610 = vmatpush.msra.mxu0 0.0
      %611 = vmatpush.msra.mxu0 0.0
      %612 = vmatpush.msra.mxu0 0.0
      %613 = vmatpush.msra.mxu0 0.0
      %614 = vmatpush.msra.mxu0 0.0
      %615 = vmatpush.msra.mxu0 0.0
      %616 = vmatpush.msra.mxu0 0.0
      %617 = vmatpush.msra.mxu0 0.0
      %618 = vmatpush.msra.mxu0 %v338
      %619 = vmatmul.f32.gmra.mxu0 %v361
      %v620 = vpop.f32.mrf.mxu0
      %v621 = vadd.f32 0.0, %v620
      %622 = vdwg.mxu0
      %623 = vmatpush.msra.mxu0 0.0
      %624 = vmatpush.msra.mxu0 0.0
      %625 = vmatpush.msra.mxu0 0.0
      %626 = vmatpush.msra.mxu0 0.0
      %627 = vmatpush.msra.mxu0 0.0
      %628 = vmatpush.msra.mxu0 0.0
      %629 = vmatpush.msra.mxu0 0.0
      %630 = vmatpush.msra.mxu0 0.0
      %631 = vmatpush.msra.mxu0 0.0
      %632 = vmatpush.msra.mxu0 0.0
      %633 = vmatpush.msra.mxu0 0.0
      %634 = vmatpush.msra.mxu0 0.0
      %635 = vmatpush.msra.mxu0 0.0
      %636 = vmatpush.msra.mxu0 0.0
      %637 = vmatpush.msra.mxu0 0.0
      %638 = vmatpush.msra.mxu0 %v339
      %639 = vmatmul.f32.gmra.mxu0 %v361
      %v640 = vpop.f32.mrf.mxu0
      %v641 = vadd.f32 0.0, %v640
      %642 = vdwg.mxu0
      %643 = vmatpush.msra.mxu0 0.0
      %644 = vmatpush.msra.mxu0 0.0
      %645 = vmatpush.msra.mxu0 0.0
      %646 = vmatpush.msra.mxu0 0.0
      %647 = vmatpush.msra.mxu0 0.0
      %648 = vmatpush.msra.mxu0 0.0
      %649 = vmatpush.msra.mxu0 0.0
      %650 = vmatpush.msra.mxu0 0.0
      %651 = vmatpush.msra.mxu0 0.0
      %652 = vmatpush.msra.mxu0 0.0
      %653 = vmatpush.msra.mxu0 0.0
      %654 = vmatpush.msra.mxu0 0.0
      %655 = vmatpush.msra.mxu0 0.0
      %656 = vmatpush.msra.mxu0 0.0
      %657 = vmatpush.msra.mxu0 0.0
      %658 = vmatpush.msra.mxu0 %v340
      %659 = vmatmul.f32.gmra.mxu0 %v361
      %v660 = vpop.f32.mrf.mxu0
      %v661 = vadd.f32 0.0, %v660
      %662 = vdwg.mxu0
      %663 = vmatpush.msra.mxu0 0.0
      %664 = vmatpush.msra.mxu0 0.0
      %665 = vmatpush.msra.mxu0 0.0
      %666 = vmatpush.msra.mxu0 0.0
      %667 = vmatpush.msra.mxu0 0.0
      %668 = vmatpush.msra.mxu0 0.0
      %669 = vmatpush.msra.mxu0 0.0
      %670 = vmatpush.msra.mxu0 0.0
      %671 = vmatpush.msra.mxu0 0.0
      %672 = vmatpush.msra.mxu0 0.0
      %673 = vmatpush.msra.mxu0 0.0
      %674 = vmatpush.msra.mxu0 0.0
      %675 = vmatpush.msra.mxu0 0.0
      %676 = vmatpush.msra.mxu0 0.0
      %677 = vmatpush.msra.mxu0 0.0
      %678 = vmatpush.msra.mxu0 %v341
      %679 = vmatmul.f32.gmra.mxu0 %v361
      %v680 = vpop.f32.mrf.mxu0
      %v681 = vadd.f32 0.0, %v680
      %682 = vdwg.mxu0
      %683 = vmatpush.msra.mxu0 0.0
      %684 = vmatpush.msra.mxu0 0.0
      %685 = vmatpush.msra.mxu0 0.0
      %686 = vmatpush.msra.mxu0 0.0
      %687 = vmatpush.msra.mxu0 0.0
      %688 = vmatpush.msra.mxu0 0.0
      %689 = vmatpush.msra.mxu0 0.0
      %690 = vmatpush.msra.mxu0 0.0
      %691 = vmatpush.msra.mxu0 0.0
      %692 = vmatpush.msra.mxu0 0.0
      %693 = vmatpush.msra.mxu0 0.0
      %694 = vmatpush.msra.mxu0 0.0
      %695 = vmatpush.msra.mxu0 0.0
      %696 = vmatpush.msra.mxu0 0.0
      %697 = vmatpush.msra.mxu0 0.0
      %698 = vmatpush.msra.mxu0 %v342
      %699 = vmatmul.f32.gmra.mxu0 %v361
      %v700 = vpop.f32.mrf.mxu0
      %v701 = vadd.f32 0.0, %v700
      %702 = vdwg.mxu0
      %703 = vmatpush.msra.mxu0 0.0
      %704 = vmatpush.msra.mxu0 0.0
      %705 = vmatpush.msra.mxu0 0.0
      %706 = vmatpush.msra.mxu0 0.0
      %707 = vmatpush.msra.mxu0 0.0
      %708 = vmatpush.msra.mxu0 0.0
      %709 = vmatpush.msra.mxu0 0.0
      %710 = vmatpush.msra.mxu0 0.0
      %711 = vmatpush.msra.mxu0 0.0
      %712 = vmatpush.msra.mxu0 0.0
      %713 = vmatpush.msra.mxu0 0.0
      %714 = vmatpush.msra.mxu0 0.0
      %715 = vmatpush.msra.mxu0 0.0
      %716 = vmatpush.msra.mxu0 0.0
      %717 = vmatpush.msra.mxu0 0.0
      %718 = vmatpush.msra.mxu0 %v343
      %719 = vmatmul.f32.gmra.mxu0 %v361
      %v720 = vpop.f32.mrf.mxu0
      %v721 = vadd.f32 0.0, %v720
      %722 = vdwg.mxu0
      %723 = vmatpush.msra.mxu0 0.0
      %724 = vmatpush.msra.mxu0 0.0
      %725 = vmatpush.msra.mxu0 0.0
      %726 = vmatpush.msra.mxu0 0.0
      %727 = vmatpush.msra.mxu0 0.0
      %728 = vmatpush.msra.mxu0 0.0
      %729 = vmatpush.msra.mxu0 0.0
      %730 = vmatpush.msra.mxu0 0.0
      %731 = vmatpush.msra.mxu0 0.0
      %732 = vmatpush.msra.mxu0 0.0
      %733 = vmatpush.msra.mxu0 0.0
      %734 = vmatpush.msra.mxu0 0.0
      %735 = vmatpush.msra.mxu0 0.0
      %736 = vmatpush.msra.mxu0 0.0
      %737 = vmatpush.msra.mxu0 0.0
      %738 = vmatpush.msra.mxu0 %v344
      %739 = vmatmul.f32.gmra.mxu0 %v361
      %v740 = vpop.f32.mrf.mxu0
      %v741 = vadd.f32 0.0, %v740
      %742 = vdwg.mxu0
      %743 = vmatpush.msra.mxu0 0.0
      %744 = vmatpush.msra.mxu0 0.0
      %745 = vmatpush.msra.mxu0 0.0
      %746 = vmatpush.msra.mxu0 0.0
      %747 = vmatpush.msra.mxu0 0.0
      %748 = vmatpush.msra.mxu0 0.0
      %749 = vmatpush.msra.mxu0 0.0
      %750 = vmatpush.msra.mxu0 0.0
      %751 = vmatpush.msra.mxu0 0.0
      %752 = vmatpush.msra.mxu0 0.0
      %753 = vmatpush.msra.mxu0 0.0
      %754 = vmatpush.msra.mxu0 0.0
      %755 = vmatpush.msra.mxu0 0.0
      %756 = vmatpush.msra.mxu0 0.0
      %757 = vmatpush.msra.mxu0 0.0
      %758 = vmatpush.msra.mxu0 %v345
      %759 = vmatmul.f32.gmra.mxu0 %v361
      %v760 = vpop.f32.mrf.mxu0
      %v761 = vadd.f32 0.0, %v760
      %762 = vdwg.mxu0
      %763 = vmatpush.msra.mxu0 0.0
      %764 = vmatpush.msra.mxu0 0.0
      %765 = vmatpush.msra.mxu0 0.0
      %766 = vmatpush.msra.mxu0 0.0
      %767 = vmatpush.msra.mxu0 0.0
      %768 = vmatpush.msra.mxu0 0.0
      %769 = vmatpush.msra.mxu0 0.0
      %770 = vmatpush.msra.mxu0 0.0
      %771 = vmatpush.msra.mxu0 0.0
      %772 = vmatpush.msra.mxu0 0.0
      %773 = vmatpush.msra.mxu0 0.0
      %774 = vmatpush.msra.mxu0 0.0
      %775 = vmatpush.msra.mxu0 0.0
      %776 = vmatpush.msra.mxu0 0.0
      %777 = vmatpush.msra.mxu0 0.0
      %778 = vmatpush.msra.mxu0 %v346
      %779 = vmatmul.f32.gmra.mxu0 %v361
      %v780 = vpop.f32.mrf.mxu0
      %v781 = vadd.f32 0.0, %v780
      %782 = vdwg.mxu0
      %783 = vmatpush.msra.mxu0 0.0
      %784 = vmatpush.msra.mxu0 0.0
      %785 = vmatpush.msra.mxu0 0.0
      %786 = vmatpush.msra.mxu0 0.0
      %787 = vmatpush.msra.mxu0 0.0
      %788 = vmatpush.msra.mxu0 0.0
      %789 = vmatpush.msra.mxu0 0.0
      %790 = vmatpush.msra.mxu0 0.0
      %791 = vmatpush.msra.mxu0 0.0
      %792 = vmatpush.msra.mxu0 0.0
      %793 = vmatpush.msra.mxu0 0.0
      %794 = vmatpush.msra.mxu0 0.0
      %795 = vmatpush.msra.mxu0 0.0
      %796 = vmatpush.msra.mxu0 0.0
      %797 = vmatpush.msra.mxu0 0.0
      %798 = vmatpush.msra.mxu0 %v347
      %799 = vmatmul.f32.gmra.mxu0 %v361
      %v800 = vpop.f32.mrf.mxu0
      %v801 = vadd.f32 0.0, %v800
      %802 = vdwg.mxu0
      %803 = vmatpush.msra.mxu0 0.0
      %804 = vmatpush.msra.mxu0 0.0
      %805 = vmatpush.msra.mxu0 0.0
      %806 = vmatpush.msra.mxu0 0.0
      %807 = vmatpush.msra.mxu0 0.0
      %808 = vmatpush.msra.mxu0 0.0
      %809 = vmatpush.msra.mxu0 0.0
      %810 = vmatpush.msra.mxu0 0.0
      %811 = vmatpush.msra.mxu0 0.0
      %812 = vmatpush.msra.mxu0 0.0
      %813 = vmatpush.msra.mxu0 0.0
      %814 = vmatpush.msra.mxu0 0.0
      %815 = vmatpush.msra.mxu0 0.0
      %816 = vmatpush.msra.mxu0 0.0
      %817 = vmatpush.msra.mxu0 0.0
      %818 = vmatpush.msra.mxu0 %v348
      %819 = vmatmul.f32.gmra.mxu0 %v361
      %v820 = vpop.f32.mrf.mxu0
      %v821 = vadd.f32 0.0, %v820
      %822 = vdwg.mxu0
      %823 = vmatpush.msra.mxu0 0.0
      %824 = vmatpush.msra.mxu0 0.0
      %825 = vmatpush.msra.mxu0 0.0
      %826 = vmatpush.msra.mxu0 0.0
      %827 = vmatpush.msra.mxu0 0.0
      %828 = vmatpush.msra.mxu0 0.0
      %829 = vmatpush.msra.mxu0 0.0
      %830 = vmatpush.msra.mxu0 0.0
      %831 = vmatpush.msra.mxu0 0.0
      %832 = vmatpush.msra.mxu0 0.0
      %833 = vmatpush.msra.mxu0 0.0
      %834 = vmatpush.msra.mxu0 0.0
      %835 = vmatpush.msra.mxu0 0.0
      %836 = vmatpush.msra.mxu0 0.0
      %837 = vmatpush.msra.mxu0 0.0
      %838 = vmatpush.msra.mxu0 %v349
      %839 = vmatmul.f32.gmra.mxu0 %v361
      %v840 = vpop.f32.mrf.mxu0
      %v841 = vadd.f32 0.0, %v840
      %842 = vdwg.mxu0
      %843 = vmatpush.msra.mxu0 0.0
      %844 = vmatpush.msra.mxu0 0.0
      %845 = vmatpush.msra.mxu0 0.0
      %846 = vmatpush.msra.mxu0 0.0
      %847 = vmatpush.msra.mxu0 0.0
      %848 = vmatpush.msra.mxu0 0.0
      %849 = vmatpush.msra.mxu0 0.0
      %850 = vmatpush.msra.mxu0 0.0
      %851 = vmatpush.msra.mxu0 0.0
      %852 = vmatpush.msra.mxu0 0.0
      %853 = vmatpush.msra.mxu0 0.0
      %854 = vmatpush.msra.mxu0 0.0
      %855 = vmatpush.msra.mxu0 0.0
      %856 = vmatpush.msra.mxu0 0.0
      %857 = vmatpush.msra.mxu0 0.0
      %858 = vmatpush.msra.mxu0 %v350
      %859 = vmatmul.f32.gmra.mxu0 %v361
      %v860 = vpop.f32.mrf.mxu0
      %v861 = vadd.f32 0.0, %v860
      %862 = vdwg.mxu0
      %863 = vmatpush.msra.mxu0 0.0
      %864 = vmatpush.msra.mxu0 0.0
      %865 = vmatpush.msra.mxu0 0.0
      %866 = vmatpush.msra.mxu0 0.0
      %867 = vmatpush.msra.mxu0 0.0
      %868 = vmatpush.msra.mxu0 0.0
      %869 = vmatpush.msra.mxu0 0.0
      %870 = vmatpush.msra.mxu0 0.0
      %871 = vmatpush.msra.mxu0 0.0
      %872 = vmatpush.msra.mxu0 0.0
      %873 = vmatpush.msra.mxu0 0.0
      %874 = vmatpush.msra.mxu0 0.0
      %875 = vmatpush.msra.mxu0 0.0
      %876 = vmatpush.msra.mxu0 0.0
      %877 = vmatpush.msra.mxu0 0.0
      %878 = vmatpush.msra.mxu0 %v351
      %879 = vmatmul.f32.gmra.mxu0 %v361
      %v880 = vpop.f32.mrf.mxu0
      %v881 = vadd.f32 0.0, %v880
      %882 = vdwg.mxu0
      %883 = vmatpush.msra.mxu0 0.0
      %884 = vmatpush.msra.mxu0 0.0
      %885 = vmatpush.msra.mxu0 0.0
      %886 = vmatpush.msra.mxu0 0.0
      %887 = vmatpush.msra.mxu0 0.0
      %888 = vmatpush.msra.mxu0 0.0
      %889 = vmatpush.msra.mxu0 0.0
      %890 = vmatpush.msra.mxu0 0.0
      %891 = vmatpush.msra.mxu0 0.0
      %892 = vmatpush.msra.mxu0 0.0
      %893 = vmatpush.msra.mxu0 0.0
      %894 = vmatpush.msra.mxu0 0.0
      %895 = vmatpush.msra.mxu0 0.0
      %896 = vmatpush.msra.mxu0 0.0
      %897 = vmatpush.msra.mxu0 0.0
      %898 = vmatpush.msra.mxu0 %v352
      %899 = vmatmul.f32.gmra.mxu0 %v361
      %v900 = vpop.f32.mrf.mxu0
      %v901 = vadd.f32 0.0, %v900
      %902 = vdwg.mxu0
      %903 = vmatpush.msra.mxu0 0.0
      %904 = vmatpush.msra.mxu0 0.0
      %905 = vmatpush.msra.mxu0 0.0
      %906 = vmatpush.msra.mxu0 0.0
      %907 = vmatpush.msra.mxu0 0.0
      %908 = vmatpush.msra.mxu0 0.0
      %909 = vmatpush.msra.mxu0 0.0
      %910 = vmatpush.msra.mxu0 0.0
      %911 = vmatpush.msra.mxu0 0.0
      %912 = vmatpush.msra.mxu0 0.0
      %913 = vmatpush.msra.mxu0 0.0
      %914 = vmatpush.msra.mxu0 0.0
      %915 = vmatpush.msra.mxu0 0.0
      %916 = vmatpush.msra.mxu0 0.0
      %917 = vmatpush.msra.mxu0 0.0
      %918 = vmatpush.msra.mxu0 %v353
      %919 = vmatmul.f32.gmra.mxu0 %v361
      %v920 = vpop.f32.mrf.mxu0
      %v921 = vadd.f32 0.0, %v920
      %922 = vdwg.mxu0
      %923 = vmatpush.msra.mxu0 0.0
      %924 = vmatpush.msra.mxu0 0.0
      %925 = vmatpush.msra.mxu0 0.0
      %926 = vmatpush.msra.mxu0 0.0
      %927 = vmatpush.msra.mxu0 0.0
      %928 = vmatpush.msra.mxu0 0.0
      %929 = vmatpush.msra.mxu0 0.0
      %930 = vmatpush.msra.mxu0 0.0
      %931 = vmatpush.msra.mxu0 0.0
      %932 = vmatpush.msra.mxu0 0.0
      %933 = vmatpush.msra.mxu0 0.0
      %934 = vmatpush.msra.mxu0 0.0
      %935 = vmatpush.msra.mxu0 0.0
      %936 = vmatpush.msra.mxu0 0.0
      %937 = vmatpush.msra.mxu0 0.0
      %938 = vmatpush.msra.mxu0 %v354
      %939 = vmatmul.f32.gmra.mxu0 %v361
      %v940 = vpop.f32.mrf.mxu0
      %v941 = vadd.f32 0.0, %v940
      %942 = vdwg.mxu0
      %943 = vmatpush.msra.mxu0 0.0
      %944 = vmatpush.msra.mxu0 0.0
      %945 = vmatpush.msra.mxu0 0.0
      %946 = vmatpush.msra.mxu0 0.0
      %947 = vmatpush.msra.mxu0 0.0
      %948 = vmatpush.msra.mxu0 0.0
      %949 = vmatpush.msra.mxu0 0.0
      %950 = vmatpush.msra.mxu0 0.0
      %951 = vmatpush.msra.mxu0 0.0
      %952 = vmatpush.msra.mxu0 0.0
      %953 = vmatpush.msra.mxu0 0.0
      %954 = vmatpush.msra.mxu0 0.0
      %955 = vmatpush.msra.mxu0 0.0
      %956 = vmatpush.msra.mxu0 0.0
      %957 = vmatpush.msra.mxu0 0.0
      %958 = vmatpush.msra.mxu0 %v355
      %959 = vmatmul.f32.gmra.mxu0 %v361
      %v960 = vpop.f32.mrf.mxu0
      %v961 = vadd.f32 0.0, %v960
      %962 = vdwg.mxu0
      %963 = vmatpush.msra.mxu0 0.0
      %964 = vmatpush.msra.mxu0 0.0
      %965 = vmatpush.msra.mxu0 0.0
      %966 = vmatpush.msra.mxu0 0.0
      %967 = vmatpush.msra.mxu0 0.0
      %968 = vmatpush.msra.mxu0 0.0
      %969 = vmatpush.msra.mxu0 0.0
      %970 = vmatpush.msra.mxu0 0.0
      %971 = vmatpush.msra.mxu0 0.0
      %972 = vmatpush.msra.mxu0 0.0
      %973 = vmatpush.msra.mxu0 0.0
      %974 = vmatpush.msra.mxu0 0.0
      %975 = vmatpush.msra.mxu0 0.0
      %976 = vmatpush.msra.mxu0 0.0
      %977 = vmatpush.msra.mxu0 0.0
      %978 = vmatpush.msra.mxu0 %v356
      %979 = vmatmul.f32.gmra.mxu0 %v361
      %v980 = vpop.f32.mrf.mxu0
      %v981 = vadd.f32 0.0, %v980
      %982 = vdwg.mxu0
      %983 = vmatpush.msra.mxu0 0.0
      %984 = vmatpush.msra.mxu0 0.0
      %985 = vmatpush.msra.mxu0 0.0
      %986 = vmatpush.msra.mxu0 0.0
      %987 = vmatpush.msra.mxu0 0.0
      %988 = vmatpush.msra.mxu0 0.0
      %989 = vmatpush.msra.mxu0 0.0
      %990 = vmatpush.msra.mxu0 0.0
      %991 = vmatpush.msra.mxu0 0.0
      %992 = vmatpush.msra.mxu0 0.0
      %993 = vmatpush.msra.mxu0 0.0
      %994 = vmatpush.msra.mxu0 0.0
      %995 = vmatpush.msra.mxu0 0.0
      %996 = vmatpush.msra.mxu0 0.0
      %997 = vmatpush.msra.mxu0 0.0
      %998 = vmatpush.msra.mxu0 %v357
      %999 = vmatmul.f32.gmra.mxu0 %v361
      %v1000 = vpop.f32.mrf.mxu0
      %v1001 = vadd.f32 0.0, %v1000
      %1002 = vdwg.mxu0
      %1003 = vst [vmem:[%s248] sm:$0xff] %v381
      %1004 = vst [vmem:[%s248 + $0x8] sm:$0xff] %v401
      %1005 = vst [vmem:[%s248 + $0x10] sm:$0xff] %v421
      %1006 = vst [vmem:[%s248 + $0x18] sm:$0xff] %v441
      %1007 = vst [vmem:[%s248 + $0x20] sm:$0xff] %v461
      %1008 = vst [vmem:[%s248 + $0x28] sm:$0xff] %v481
      %1009 = vst [vmem:[%s248 + $0x30] sm:$0xff] %v501
      %1010 = vst [vmem:[%s248 + $0x38] sm:$0xff] %v521
      %1011 = vst [vmem:[%s248 + $0x40] sm:$0xff] %v541
      %1012 = vst [vmem:[%s248 + $0x48] sm:$0xff] %v561
      %1013 = vst [vmem:[%s248 + $0x50] sm:$0xff] %v581
      %1014 = vst [vmem:[%s248 + $0x58] sm:$0xff] %v601
      %1015 = vst [vmem:[%s248 + $0x60] sm:$0xff] %v621
      %1016 = vst [vmem:[%s248 + $0x68] sm:$0xff] %v641
      %1017 = vst [vmem:[%s248 + $0x70] sm:$0xff] %v661
      %1018 = vst [vmem:[%s248 + $0x78] sm:$0xff] %v681
      %1019 = vst [vmem:[%s248 + $0x80] sm:$0xff] %v701
      %1020 = vst [vmem:[%s248 + $0x88] sm:$0xff] %v721
      %1021 = vst [vmem:[%s248 + $0x90] sm:$0xff] %v741
      %1022 = vst [vmem:[%s248 + $0x98] sm:$0xff] %v761
      %1023 = vst [vmem:[%s248 + $0xa0] sm:$0xff] %v781
      %1024 = vst [vmem:[%s248 + $0xa8] sm:$0xff] %v801
      %1025 = vst [vmem:[%s248 + $0xb0] sm:$0xff] %v821
      %1026 = vst [vmem:[%s248 + $0xb8] sm:$0xff] %v841
      %1027 = vst [vmem:[%s248 + $0xc0] sm:$0xff] %v861
      %1028 = vst [vmem:[%s248 + $0xc8] sm:$0xff] %v881
      %1029 = vst [vmem:[%s248 + $0xd0] sm:$0xff] %v901
      %1030 = vst [vmem:[%s248 + $0xd8] sm:$0xff] %v921
      %1031 = vst [vmem:[%s248 + $0xe0] sm:$0xff] %v941
      %1032 = vst [vmem:[%s248 + $0xe8] sm:$0xff] %v961
      %1033 = vst [vmem:[%s248 + $0xf0] sm:$0xff] %v981
      %1034 = vst [vmem:[%s248 + $0xf8] sm:$0xff] %v1001
      %p1035 = scmp.eq.s32.totalorder %s18, 0
      // Predicated region
      $region37: #{sepconv4d_forward.6} parent=35 // pred_check
        %p1036 = pneg %p1035
      $region38: #{sepconv4d_forward.6} parent=35 // pred_check_branch
        %1038 = sbr.rel (%p1036) target = $region40
      $region39: #{sepconv4d_forward.6} parent=35 // pred_region
        %vm1039 = vcmask 7168
        %1040 = vst.msk [vmem:[#allocation2] sm:$0xff] %vm1039, 0.0
        %1041 = vst.msk [vmem:[#allocation3] sm:$0xff] %vm1039, 0.0
      $region40: #{sepconv4d_forward.6} parent=35 // pred_fallthru
        _
      %v1042 = vld [vmem:[#allocation2] sm:$0xff]
      %v1043 = vadd.f32 %v381, %v401
      %v1044 = vadd.f32 %v1043, %v421
      %v1045 = vadd.f32 %v1044, %v441
      %v1046 = vadd.f32 %v1045, %v461
      %v1047 = vadd.f32 %v1046, %v481
      %v1048 = vadd.f32 %v1047, %v501
      %v1049 = vadd.f32 %v1048, %v521
      %v1050 = vadd.f32 %v1049, %v541
      %v1051 = vadd.f32 %v1050, %v561
      %v1052 = vadd.f32 %v1051, %v581
      %v1053 = vadd.f32 %v1052, %v601
      %v1054 = vadd.f32 %v1053, %v621
      %v1055 = vadd.f32 %v1054, %v641
      %v1056 = vadd.f32 %v1055, %v661
      %v1057 = vadd.f32 %v1056, %v681
      %v1058 = vadd.f32 %v1057, %v701
      %v1059 = vadd.f32 %v1058, %v721
      %v1060 = vadd.f32 %v1059, %v741
      %v1061 = vadd.f32 %v1060, %v761
      %v1062 = vadd.f32 %v1061, %v781
      %v1063 = vadd.f32 %v1062, %v801
      %v1064 = vadd.f32 %v1063, %v821
      %v1065 = vadd.f32 %v1064, %v841
      %v1066 = vadd.f32 %v1065, %v861
      %v1067 = vadd.f32 %v1066, %v881
      %v1068 = vadd.f32 %v1067, %v901
      %v1069 = vadd.f32 %v1068, %v921
      %v1070 = vadd.f32 %v1069, %v941
      %v1071 = vadd.f32 %v1070, %v961
      %v1072 = vadd.f32 %v1071, %v981
      %v1073 = vadd.f32 %v1072, %v1001
      %1074 = vadd.xlane.f32.xlu0 %v1073
      %v1075 = vpop.xlane.xlu0 %1074
      %v1076 = vadd.f32 %v1042, %v1075
      %vm1077 = vcmask 7168
      %1078 = vst.msk [vmem:[#allocation2] sm:$0xff] %vm1077, %v1076
      %v1079 = vld [vmem:[#allocation3] sm:$0xff]
      %v1080 = vmul.f32 %v381, %v381
      %v1081 = vmul.f32 %v401, %v401
      %v1082 = vmul.f32 %v421, %v421
      %v1083 = vmul.f32 %v441, %v441
      %v1084 = vmul.f32 %v461, %v461
      %v1085 = vmul.f32 %v481, %v481
      %v1086 = vmul.f32 %v501, %v501
      %v1087 = vmul.f32 %v521, %v521
      %v1088 = vmul.f32 %v541, %v541
      %v1089 = vmul.f32 %v561, %v561
      %v1090 = vmul.f32 %v581, %v581
      %v1091 = vmul.f32 %v601, %v601
      %v1092 = vmul.f32 %v621, %v621
      %v1093 = vmul.f32 %v641, %v641
      %v1094 = vmul.f32 %v661, %v661
      %v1095 = vmul.f32 %v681, %v681
      %v1096 = vmul.f32 %v701, %v701
      %v1097 = vmul.f32 %v721, %v721
      %v1098 = vmul.f32 %v741, %v741
      %v1099 = vmul.f32 %v761, %v761
      %v1100 = vmul.f32 %v781, %v781
      %v1101 = vmul.f32 %v801, %v801
      %v1102 = vmul.f32 %v821, %v821
      %v1103 = vmul.f32 %v841, %v841
      %v1104 = vmul.f32 %v861, %v861
      %v1105 = vmul.f32 %v881, %v881
      %v1106 = vmul.f32 %v901, %v901
      %v1107 = vmul.f32 %v921, %v921
      %v1108 = vmul.f32 %v941, %v941
      %v1109 = vmul.f32 %v961, %v961
      %v1110 = vmul.f32 %v981, %v981
      %v1111 = vmul.f32 %v1001, %v1001
      %v1112 = vadd.f32 %v1080, %v1081
      %v1113 = vadd.f32 %v1112, %v1082
      %v1114 = vadd.f32 %v1113, %v1083
      %v1115 = vadd.f32 %v1114, %v1084
      %v1116 = vadd.f32 %v1115, %v1085
      %v1117 = vadd.f32 %v1116, %v1086
      %v1118 = vadd.f32 %v1117, %v1087
      %v1119 = vadd.f32 %v1118, %v1088
      %v1120 = vadd.f32 %v1119, %v1089
      %v1121 = vadd.f32 %v1120, %v1090
      %v1122 = vadd.f32 %v1121, %v1091
      %v1123 = vadd.f32 %v1122, %v1092
      %v1124 = vadd.f32 %v1123, %v1093
      %v1125 = vadd.f32 %v1124, %v1094
      %v1126 = vadd.f32 %v1125, %v1095
      %v1127 = vadd.f32 %v1126, %v1096
      %v1128 = vadd.f32 %v1127, %v1097
      %v1129 = vadd.f32 %v1128, %v1098
      %v1130 = vadd.f32 %v1129, %v1099
      %v1131 = vadd.f32 %v1130, %v1100
      %v1132 = vadd.f32 %v1131, %v1101
      %v1133 = vadd.f32 %v1132, %v1102
      %v1134 = vadd.f32 %v1133, %v1103
      %v1135 = vadd.f32 %v1134, %v1104
      %v1136 = vadd.f32 %v1135, %v1105
      %v1137 = vadd.f32 %v1136, %v1106
      %v1138 = vadd.f32 %v1137, %v1107
      %v1139 = vadd.f32 %v1138, %v1108
      %v1140 = vadd.f32 %v1139, %v1109
      %v1141 = vadd.f32 %v1140, %v1110
      %v1142 = vadd.f32 %v1141, %v1111
      %1143 = vadd.xlane.f32.xlu0 %v1142
      %v1144 = vpop.xlane.xlu0 %1143
      %v1145 = vadd.f32 %v1079, %v1144
      %1146 = vst.msk [vmem:[#allocation3] sm:$0xff] %vm1077, %v1145
      %p1147 = scmp.eq.s32.totalorder %s18, 1
      // Predicated region
      $region41: #{sepconv4d_forward.6} parent=35 // pred_check
        %p1148 = pneg %p1147
      $region42: #{sepconv4d_forward.6} parent=35 // pred_check_branch
        %1150 = sbr.rel (%p1148) target = $region44
      $region43: #{sepconv4d_forward.6} parent=35 // pred_region
        %v1151 = vld [vmem:[#allocation2] sm:$0xff]
        %1152 = vst.msk [vmem:[%s5] sm:$0xff] %vm1077, %v1151
        %v1153 = vld [vmem:[#allocation3] sm:$0xff]
        %1154 = vst.msk [vmem:[%s6] sm:$0xff] %vm1077, %v1153
      $region44: #{sepconv4d_forward.6} parent=35 // pred_fallthru
        _
      %s1155 = smul.u32 32, %s18
      %p1156 = scmp.lt.s32.totalorder %s1155, 63
      %s1157 = scalar_select %p1156, %s1155, 63
      %s1158 = smul.addr %s1157, 8
      %s1159 = scalar_lea.vmem %s4, %s1158
      // Predicated region
      $region45: #{sepconv4d_forward.6} parent=35 // pred_check
        %p1160 = pneg %p125
      $region46: #{sepconv4d_forward.6} parent=35 // pred_check_branch
        %1162 = sbr.rel (%p1160) target = $region48
      $region47: #{sepconv4d_forward.6} parent=35 // pred_region
        %s1163 = smul.u32 32, %s18
      $region48: #{sepconv4d_forward.6} parent=35 // pred_fallthru
        _
      // Predicated region
      $region49: #{sepconv4d_forward.6} parent=35 // pred_check
        %p1164 = pneg %p146
      $region50: #{sepconv4d_forward.6} parent=35 // pred_check_branch
        %1166 = sbr.rel (%p1164) target = $region52
      $region51: #{sepconv4d_forward.6} parent=35 // pred_region
        _
      $region52: #{sepconv4d_forward.6} parent=35 // pred_fallthru
        _
      // Predicated region
      $region53: #{sepconv4d_forward.6} parent=35 // pred_check
        %p1167 = pneg %p167
      $region54: #{sepconv4d_forward.6} parent=35 // pred_check_branch
        %1169 = sbr.rel (%p1167) target = $region56
      $region55: #{sepconv4d_forward.6} parent=35 // pred_region
        _
      $region56: #{sepconv4d_forward.6} parent=35 // pred_fallthru
        _
      // Predicated region
      $region57: #{sepconv4d_forward.6} parent=35 // pred_check
        %p1170 = pneg %p146
      $region58: #{sepconv4d_forward.6} parent=35 // pred_check_branch
        %1172 = sbr.rel (%p1170) target = $region60
      $region59: #{sepconv4d_forward.6} parent=35 // pred_region
        _
      $region60: #{sepconv4d_forward.6} parent=35 // pred_fallthru
        _
      // Predicated region
      $region61: #{sepconv4d_forward.6} parent=35 // pred_check
        %p1173 = pneg %p167
      $region62: #{sepconv4d_forward.6} parent=35 // pred_check_branch
        %1175 = sbr.rel (%p1173) target = $region64
      $region63: #{sepconv4d_forward.6} parent=35 // pred_region
        _
      $region64: #{sepconv4d_forward.6} parent=35 // pred_fallthru
        _
    $region36: #{sepconv4d_forward.6} parent=5 // pred_fallthru
      _
    %p1176 = scmp.le.s32.totalorder 2, %s13
    // Predicated region
    $region65: #{sepconv4d_forward.6} parent=5 // pred_check
      %p1177 = pneg %p1176
    $region66: #{sepconv4d_forward.6} parent=5 // pred_check_branch
      %1179 = sbr.rel (%p1177) target = $region68
    $region67: #{sepconv4d_forward.6} parent=5 // pred_region
      %s1180 = ssub.s32 %s13, 2
      // Predicated region
      $region69: #{sepconv4d_forward.6} parent=67 // pred_check
        %p1181 = pneg %p131
      $region70: #{sepconv4d_forward.6} parent=67 // pred_check_branch
        %1183 = sbr.rel (%p1181) target = $region72
      $region71: #{sepconv4d_forward.6} parent=67 // pred_region
        %s1184 = smul.u32 32, %s19
        %p1185 = scmp.lt.s32.totalorder %s1184, 63
        %s1186 = scalar_select %p1185, %s1184, 63
        %s1187 = smul.addr %s1186, 8
        %s1188 = scalar_lea.vmem %s4, %s1187
      $region72: #{sepconv4d_forward.6} parent=67 // pred_fallthru
        _
    $region68: #{sepconv4d_forward.6} parent=5 // pred_fallthru
      _
  $region6: #{sepconv4d_forward.6} parent=0 // loop_footer
    %s17 = sadd.s32 1, %s13
  $region7: #{sepconv4d_forward.6} parent=0 // loop_footer_branch
    %12 = sbr.rel target = $region3
  $region8: #{sepconv4d_forward.6} parent=0 // loop_exit
    _

// kernel: sepconv4d_forward.7
$region0: #{sepconv4d_forward.7}
  #allocation0 [shape = 'u32[]', space=smem, size = 0x4, offset = 0x4, fixed_abs, tag = 'smem constant byte address 0x4 - core index']
  #allocation1 [shape = 'u32[72,128]{1,0:T(1,128)}', space=vmem, size = 0x9000, scoped, tag = 'internal scratch']
  %s0 = inlined_call_operand.vmem [shape: f32[8,8192], index: 0, kind: input, shape index: {}]
  %s1 = inlined_call_operand.vmem [shape: f32[8,1], index: 1, kind: input, shape index: {}]
  %s2 = inlined_call_operand.vmem [shape: f32[8,1], index: 2, kind: input, shape index: {}]
  %s3 = inlined_call_operand.vmem [shape: f32[8,8192], index: 3, kind: output, shape index: {}]
  %s4 = sld [smem:[#allocation0]]
  $region45: #{sepconv4d_forward.7} parent=0
    _
  %s6 = ssub.s32 1, %s4
  %s7 = scalar_select 0, %s6, %s4
  loop: start=0, step=1, limit=4
  $region2: #{sepconv4d_forward.7} parent=0 // loop_pre_header
    _
  $region3: #{sepconv4d_forward.7} parent=0 // loop_header
    %s9 = sphi 0, %s13
    %p10 = scmp.ge.s32.totalorder %s9, 4
    %s19 = sphi 0, %s21
    %s22 = sphi 0, %s19
    %s23 = sphi 0, %s22
    %s39 = sphi 0, %s23
    %s43 = sphi 0, %s43
    %s45 = sphi 0, %s43
    %s46 = sphi 0, %s45
    %s60 = sphi 0, %s46
    %s64 = sphi 0, %s64
    %s66 = sphi 0, %s64
    %s67 = sphi 0, %s66
    %s81 = sphi 0, %s67
    %s87 = sphi 0, %s89
    %s90 = sphi 0, %s87
    %s91 = sphi 0, %s90
    %s107 = sphi 0, %s91
  $region4: #{sepconv4d_forward.7} parent=0 // loop_header_branch
    %12 = sbr.rel (%p10) target = $region8
  $region5: #{sepconv4d_forward.7} parent=0 // loop_body
    %s14 = ssub.s32 %s9, 1
    %s15 = ssub.s32 %s9, 2
    %s16 = sadd.s32 %s9, 1
    %s17 = ssub.s32 %s9, %s16
    %p18 = scmp.eq.s32.totalorder %s17, 0
    %s20 = sadd.s32 %s19, 1
    %s21 = scalar_select %p18, %s19, %s20
    %p24 = pneg %p18
    %p25 = scmp.eq.s32.totalorder %s9, 1
    %p26 = por %p24, %p25
    %p27 = scmp.ne.s32.totalorder %s19, %s22
    %p28 = scmp.eq.s32.totalorder %s9, 0
    %p29 = por %p27, %p28
    %p30 = scmp.ne.s32.totalorder %s19, %s22
    %p31 = scmp.eq.s32.totalorder %s14, 1
    %p32 = por %p30, %p31
    %p33 = scmp.ne.s32.totalorder %s22, %s23
    %p34 = scmp.eq.s32.totalorder %s14, 0
    %p35 = por %p33, %p34
    %p36 = scmp.ne.s32.totalorder %s22, %s23
    %p37 = scmp.eq.s32.totalorder %s15, 1
    %p38 = por %p36, %p37
    %p40 = scmp.ne.s32.totalorder %s23, %s39
    %p41 = scmp.eq.s32.totalorder %s15, 0
    %p42 = por %p40, %p41
    %s44 = sadd.s32 %s43, 1
    %p47 = scmp.eq.s32.totalorder %s9, 1
    %p48 = scmp.ne.s32.totalorder %s43, %s45
    %p49 = scmp.eq.s32.totalorder %s9, 0
    %p50 = por %p48, %p49
    %p51 = scmp.ne.s32.totalorder %s43, %s45
    %p52 = scmp.eq.s32.totalorder %s14, 1
    %p53 = por %p51, %p52
    %p54 = scmp.ne.s32.totalorder %s45, %s46
    %p55 = scmp.eq.s32.totalorder %s14, 0
    %p56 = por %p54, %p55
    %p57 = scmp.ne.s32.totalorder %s45, %s46
    %p58 = scmp.eq.s32.totalorder %s15, 1
    %p59 = por %p57, %p58
    %p61 = scmp.ne.s32.totalorder %s46, %s60
    %p62 = scmp.eq.s32.totalorder %s15, 0
    %p63 = por %p61, %p62
    %s65 = sadd.s32 %s64, 1
    %p68 = scmp.eq.s32.totalorder %s9, 1
    %p69 = scmp.ne.s32.totalorder %s64, %s66
    %p70 = scmp.eq.s32.totalorder %s9, 0
    %p71 = por %p69, %p70
    %p72 = scmp.ne.s32.totalorder %s64, %s66
    %p73 = scmp.eq.s32.totalorder %s14, 1
    %p74 = por %p72, %p73
    %p75 = scmp.ne.s32.totalorder %s66, %s67
    %p76 = scmp.eq.s32.totalorder %s14, 0
    %p77 = por %p75, %p76
    %p78 = scmp.ne.s32.totalorder %s66, %s67
    %p79 = scmp.eq.s32.totalorder %s15, 1
    %p80 = por %p78, %p79
    %p82 = scmp.ne.s32.totalorder %s67, %s81
    %p83 = scmp.eq.s32.totalorder %s15, 0
    %p84 = por %p82, %p83
    %s85 = ssub.s32 %s9, %s16
    %p86 = scmp.eq.s32.totalorder %s85, 0
    %s88 = sadd.s32 %s87, 1
    %s89 = scalar_select %p86, %s87, %s88
    %p92 = pneg %p86
    %p93 = scmp.eq.s32.totalorder %s9, 1
    %p94 = por %p92, %p93
    %p95 = scmp.ne.s32.totalorder %s87, %s90
    %p96 = scmp.eq.s32.totalorder %s9, 0
    %p97 = por %p95, %p96
    %p98 = scmp.ne.s32.totalorder %s87, %s90
    %p99 = scmp.eq.s32.totalorder %s14, 1
    %p100 = por %p98, %p99
    %p101 = scmp.ne.s32.totalorder %s90, %s91
    %p102 = scmp.eq.s32.totalorder %s14, 0
    %p103 = por %p101, %p102
    %p104 = scmp.ne.s32.totalorder %s90, %s91
    %p105 = scmp.eq.s32.totalorder %s15, 1
    %p106 = por %p104, %p105
    %p108 = scmp.ne.s32.totalorder %s91, %s107
    %p109 = scmp.eq.s32.totalorder %s15, 0
    %p110 = por %p108, %p109
    %p111 = scmp.le.s32.totalorder 1, %s9
    %p112 = scmp.lt.s32.totalorder %s9, 3
    %p113 = pnand %p111, %p112
    %p114 = pneg %p113
    // Predicated region
    $region9: #{sepconv4d_forward.7} parent=5 // pred_check
      _
    $region10: #{sepconv4d_forward.7} parent=5 // pred_check_branch
      %116 = sbr.rel (%p113) target = $region12
    $region11: #{sepconv4d_forward.7} parent=5 // pred_region
      %s117 = ssub.s32 %s9, 1
      // Predicated region
      $region13: #{sepconv4d_forward.7} parent=11 // pred_check
        %p118 = pneg %p56
      $region14: #{sepconv4d_forward.7} parent=11 // pred_check_branch
        %120 = sbr.rel (%p118) target = $region16
      $region15: #{sepconv4d_forward.7} parent=11 // pred_region
        _
      $region16: #{sepconv4d_forward.7} parent=11 // pred_fallthru
        _
      // Predicated region
      $region17: #{sepconv4d_forward.7} parent=11 // pred_check
        %p121 = pneg %p77
      $region18: #{sepconv4d_forward.7} parent=11 // pred_check_branch
        %123 = sbr.rel (%p121) target = $region20
      $region19: #{sepconv4d_forward.7} parent=11 // pred_region
        _
      $region20: #{sepconv4d_forward.7} parent=11 // pred_fallthru
        _
    $region12: #{sepconv4d_forward.7} parent=5 // pred_fallthru
      _
    %p124 = scmp.lt.s32.totalorder %s9, 2
    // Predicated region
    $region21: #{sepconv4d_forward.7} parent=5 // pred_check
      %p125 = pneg %p124
    $region22: #{sepconv4d_forward.7} parent=5 // pred_check_branch
      %127 = sbr.rel (%p125) target = $region24
    $region23: #{sepconv4d_forward.7} parent=5 // pred_region
      // Predicated region
      $region25: #{sepconv4d_forward.7} parent=23 // pred_check
        %p128 = pneg %p29
      $region26: #{sepconv4d_forward.7} parent=23 // pred_check_branch
        %130 = sbr.rel (%p128) target = $region28
      $region27: #{sepconv4d_forward.7} parent=23 // pred_region
        %s131 = smul.u32 32, %s9
        %p132 = scmp.lt.s32.totalorder %s131, 63
        %s133 = scalar_select %p132, %s131, 63
        %s134 = smul.addr %s133, 8
        %s135 = scalar_lea.vmem %s0, %s134
        %s136 = smul.u32 32, %s9
      $region28: #{sepconv4d_forward.7} parent=23 // pred_fallthru
        _
    $region24: #{sepconv4d_forward.7} parent=5 // pred_fallthru
      _
    %p137 = scmp.le.s32.totalorder 1, %s9
    %p138 = scmp.lt.s32.totalorder %s9, 3
    %p139 = pnand %p137, %p138
    %p140 = pneg %p139
    // Predicated region
    $region29: #{sepconv4d_forward.7} parent=5 // pred_check
      _
    $region30: #{sepconv4d_forward.7} parent=5 // pred_check_branch
      %142 = sbr.rel (%p139) target = $region32
    $region31: #{sepconv4d_forward.7} parent=5 // pred_region
      %s143 = ssub.s32 %s9, 1
      %s144 = smul.u32 32, %s14
      %p145 = scmp.lt.s32.totalorder %s144, 63
      %s146 = scalar_select %p145, %s144, 63
      %s147 = smul.addr %s146, 8
      %s148 = scalar_lea.vmem %s0, %s147
      %p149 = pneg %p35
      %p150 = pneg %p32
      %p151 = pneg %p56
      %p152 = pneg %p53
      %p153 = pneg %p77
      %p154 = pneg %p74
      %p155 = pneg %p103
      %p156 = pneg %p100
      %s157 = smul.u32 32, %s14
      %p158 = scmp.lt.s32.totalorder %s157, 63
      %s159 = scalar_select %p158, %s157, 63
      %s160 = smul.addr %s159, 8
      %s161 = scalar_lea.vmem %s3, %s160
      %s162 = smul.u32 32, %s14
      %p163 = scmp.lt.s32.totalorder %s162, 63
      %s164 = scalar_select %p163, %s162, 63
      %s165 = smul.addr %s164, 8
      %s166 = scalar_lea.vmem %s0, %s165
      %s167 = smul.u32 32, %s14
      %s168 = smul.u32 32, %s14
      %p169 = scmp.lt.s32.totalorder %s168, 63
      %s170 = scalar_select %p169, %s168, 63
      %s171 = smul.addr %s170, 8
      %s172 = scalar_lea.vmem %s3, %s171
      %s173 = smul.u32 32, %s14
      %v174 = vld [vmem:[%s166] sm:$0xff]
      %v175 = vld [vmem:[%s166 + $0x8] sm:$0xff]
      %v176 = vld [vmem:[%s166 + $0x10] sm:$0xff]
      %v177 = vld [vmem:[%s166 + $0x18] sm:$0xff]
      %v178 = vld [vmem:[%s166 + $0x20] sm:$0xff]
      %v179 = vld [vmem:[%s166 + $0x28] sm:$0xff]
      %v180 = vld [vmem:[%s166 + $0x30] sm:$0xff]
      %v181 = vld [vmem:[%s166 + $0x38] sm:$0xff]
      %v182 = vld [vmem:[%s166 + $0x40] sm:$0xff]
      %v183 = vld [vmem:[%s166 + $0x48] sm:$0xff]
      %v184 = vld [vmem:[%s166 + $0x50] sm:$0xff]
      %v185 = vld [vmem:[%s166 + $0x58] sm:$0xff]
      %v186 = vld [vmem:[%s166 + $0x60] sm:$0xff]
      %v187 = vld [vmem:[%s166 + $0x68] sm:$0xff]
      %v188 = vld [vmem:[%s166 + $0x70] sm:$0xff]
      %v189 = vld [vmem:[%s166 + $0x78] sm:$0xff]
      %v190 = vld [vmem:[%s166 + $0x80] sm:$0xff]
      %v191 = vld [vmem:[%s166 + $0x88] sm:$0xff]
      %v192 = vld [vmem:[%s166 + $0x90] sm:$0xff]
      %v193 = vld [vmem:[%s166 + $0x98] sm:$0xff]
      %v194 = vld [vmem:[%s166 + $0xa0] sm:$0xff]
      %v195 = vld [vmem:[%s166 + $0xa8] sm:$0xff]
      %v196 = vld [vmem:[%s166 + $0xb0] sm:$0xff]
      %v197 = vld [vmem:[%s166 + $0xb8] sm:$0xff]
      %v198 = vld [vmem:[%s166 + $0xc0] sm:$0xff]
      %v199 = vld [vmem:[%s166 + $0xc8] sm:$0xff]
      %v200 = vld [vmem:[%s166 + $0xd0] sm:$0xff]
      %v201 = vld [vmem:[%s166 + $0xd8] sm:$0xff]
      %v202 = vld [vmem:[%s166 + $0xe0] sm:$0xff]
      %v203 = vld [vmem:[%s166 + $0xe8] sm:$0xff]
      %v204 = vld [vmem:[%s166 + $0xf0] sm:$0xff]
      %v205 = vld [vmem:[%s166 + $0xf8] sm:$0xff]
      %v206 = vld [vmem:[%s1] sm:$0xff]
      %208 = vset.pattern.permute.xlu0 0
      %209 = vperm.xlu0 %208, %v206
      %v210 = vpop.permute.xlu0 %209
      %v212 = vmul.f32 %v174, %v210
      %v213 = vmul.f32 %v175, %v210
      %v214 = vmul.f32 %v176, %v210
      %v215 = vmul.f32 %v177, %v210
      %v216 = vmul.f32 %v178, %v210
      %v217 = vmul.f32 %v179, %v210
      %v218 = vmul.f32 %v180, %v210
      %v219 = vmul.f32 %v181, %v210
      %v220 = vmul.f32 %v182, %v210
      %v221 = vmul.f32 %v183, %v210
      %v222 = vmul.f32 %v184, %v210
      %v223 = vmul.f32 %v185, %v210
      %v224 = vmul.f32 %v186, %v210
      %v225 = vmul.f32 %v187, %v210
      %v226 = vmul.f32 %v188, %v210
      %v227 = vmul.f32 %v189, %v210
      %v228 = vmul.f32 %v190, %v210
      %v229 = vmul.f32 %v191, %v210
      %v230 = vmul.f32 %v192, %v210
      %v231 = vmul.f32 %v193, %v210
      %v232 = vmul.f32 %v194, %v210
      %v233 = vmul.f32 %v195, %v210
      %v234 = vmul.f32 %v196, %v210
      %v235 = vmul.f32 %v197, %v210
      %v236 = vmul.f32 %v198, %v210
      %v237 = vmul.f32 %v199, %v210
      %v238 = vmul.f32 %v200, %v210
      %v239 = vmul.f32 %v201, %v210
      %v240 = vmul.f32 %v202, %v210
      %v241 = vmul.f32 %v203, %v210
      %v242 = vmul.f32 %v204, %v210
      %v243 = vmul.f32 %v205, %v210
      %v244 = vld [vmem:[%s2] sm:$0xff]
      %246 = vset.pattern.permute.xlu0 0
      %247 = vperm.xlu0 %246, %v244
      %v248 = vpop.permute.xlu0 %247
      %v250 = vadd.f32 %v212, %v248
      %v251 = vadd.f32 %v213, %v248
      %v252 = vadd.f32 %v214, %v248
      %v253 = vadd.f32 %v215, %v248
      %v254 = vadd.f32 %v216, %v248
      %v255 = vadd.f32 %v217, %v248
      %v256 = vadd.f32 %v218, %v248
      %v257 = vadd.f32 %v219, %v248
      %v258 = vadd.f32 %v220, %v248
      %v259 = vadd.f32 %v221, %v248
      %v260 = vadd.f32 %v222, %v248
      %v261 = vadd.f32 %v223, %v248
      %v262 = vadd.f32 %v224, %v248
      %v263 = vadd.f32 %v225, %v248
      %v264 = vadd.f32 %v226, %v248
      %v265 = vadd.f32 %v227, %v248
      %v266 = vadd.f32 %v228, %v248
      %v267 = vadd.f32 %v229, %v248
      %v268 = vadd.f32 %v230, %v248
      %v269 = vadd.f32 %v231, %v248
      %v270 = vadd.f32 %v232, %v248
      %v271 = vadd.f32 %v233, %v248
      %v272 = vadd.f32 %v234, %v248
      %v273 = vadd.f32 %v235, %v248
      %v274 = vadd.f32 %v236, %v248
      %v275 = vadd.f32 %v237, %v248
      %v276 = vadd.f32 %v238, %v248
      %v277 = vadd.f32 %v239, %v248
      %v278 = vadd.f32 %v240, %v248
      %v279 = vadd.f32 %v241, %v248
      %v280 = vadd.f32 %v242, %v248
      %v281 = vadd.f32 %v243, %v248
      %282 = vst [vmem:[%s172] sm:$0xff] %v250
      %283 = vst [vmem:[%s172 + $0x8] sm:$0xff] %v251
      %284 = vst [vmem:[%s172 + $0x10] sm:$0xff] %v252
      %285 = vst [vmem:[%s172 + $0x18] sm:$0xff] %v253
      %286 = vst [vmem:[%s172 + $0x20] sm:$0xff] %v254
      %287 = vst [vmem:[%s172 + $0x28] sm:$0xff] %v255
      %288 = vst [vmem:[%s172 + $0x30] sm:$0xff] %v256
      %289 = vst [vmem:[%s172 + $0x38] sm:$0xff] %v257
      %290 = vst [vmem:[%s172 + $0x40] sm:$0xff] %v258
      %291 = vst [vmem:[%s172 + $0x48] sm:$0xff] %v259
      %292 = vst [vmem:[%s172 + $0x50] sm:$0xff] %v260
      %293 = vst [vmem:[%s172 + $0x58] sm:$0xff] %v261
      %294 = vst [vmem:[%s172 + $0x60] sm:$0xff] %v262
      %295 = vst [vmem:[%s172 + $0x68] sm:$0xff] %v263
      %296 = vst [vmem:[%s172 + $0x70] sm:$0xff] %v264
      %297 = vst [vmem:[%s172 + $0x78] sm:$0xff] %v265
      %298 = vst [vmem:[%s172 + $0x80] sm:$0xff] %v266
      %299 = vst [vmem:[%s172 + $0x88] sm:$0xff] %v267
      %300 = vst [vmem:[%s172 + $0x90] sm:$0xff] %v268
      %301 = vst [vmem:[%s172 + $0x98] sm:$0xff] %v269
      %302 = vst [vmem:[%s172 + $0xa0] sm:$0xff] %v270
      %303 = vst [vmem:[%s172 + $0xa8] sm:$0xff] %v271
      %304 = vst [vmem:[%s172 + $0xb0] sm:$0xff] %v272
      %305 = vst [vmem:[%s172 + $0xb8] sm:$0xff] %v273
      %306 = vst [vmem:[%s172 + $0xc0] sm:$0xff] %v274
      %307 = vst [vmem:[%s172 + $0xc8] sm:$0xff] %v275
      %308 = vst [vmem:[%s172 + $0xd0] sm:$0xff] %v276
      %309 = vst [vmem:[%s172 + $0xd8] sm:$0xff] %v277
      %310 = vst [vmem:[%s172 + $0xe0] sm:$0xff] %v278
      %311 = vst [vmem:[%s172 + $0xe8] sm:$0xff] %v279
      %312 = vst [vmem:[%s172 + $0xf0] sm:$0xff] %v280
      %313 = vst [vmem:[%s172 + $0xf8] sm:$0xff] %v281
      %s314 = smul.u32 32, %s14
      %p315 = scmp.lt.s32.totalorder %s314, 63
      %s316 = scalar_select %p315, %s314, 63
      %s317 = smul.addr %s316, 8
      %s318 = scalar_lea.vmem %s3, %s317
      // Predicated region
      $region33: #{sepconv4d_forward.7} parent=31 // pred_check
        %p319 = pneg %p100
      $region34: #{sepconv4d_forward.7} parent=31 // pred_check_branch
        %321 = sbr.rel (%p319) target = $region36
      $region35: #{sepconv4d_forward.7} parent=31 // pred_region
        %s322 = smul.u32 32, %s14
      $region36: #{sepconv4d_forward.7} parent=31 // pred_fallthru
        _
    $region32: #{sepconv4d_forward.7} parent=5 // pred_fallthru
      _
    %p323 = scmp.le.s32.totalorder 2, %s9
    // Predicated region
    $region37: #{sepconv4d_forward.7} parent=5 // pred_check
      %p324 = pneg %p323
    $region38: #{sepconv4d_forward.7} parent=5 // pred_check_branch
      %326 = sbr.rel (%p324) target = $region40
    $region39: #{sepconv4d_forward.7} parent=5 // pred_region
      %s327 = ssub.s32 %s9, 2
      // Predicated region
      $region41: #{sepconv4d_forward.7} parent=39 // pred_check
        %p328 = pneg %p106
      $region42: #{sepconv4d_forward.7} parent=39 // pred_check_branch
        %330 = sbr.rel (%p328) target = $region44
      $region43: #{sepconv4d_forward.7} parent=39 // pred_region
        %s331 = smul.u32 32, %s15
        %p332 = scmp.lt.s32.totalorder %s331, 63
        %s333 = scalar_select %p332, %s331, 63
        %s334 = smul.addr %s333, 8
        %s335 = scalar_lea.vmem %s3, %s334
      $region44: #{sepconv4d_forward.7} parent=39 // pred_fallthru
        _
    $region40: #{sepconv4d_forward.7} parent=5 // pred_fallthru
      _
  $region6: #{sepconv4d_forward.7} parent=0 // loop_footer
    %s13 = sadd.s32 1, %s9
  $region7: #{sepconv4d_forward.7} parent=0 // loop_footer_branch
    %8 = sbr.rel target = $region3
  $region8: #{sepconv4d_forward.7} parent=0 // loop_exit
    _

</llo_original>
